<compile_context>
chip_gen: v7x
topology: tpu7x:2x2x1
jax: 0.10.0
libtpu: 0.0.40
codegen_flags: <defaults>
</compile_context>

<pallas_src>
from functools import partial

import jax
import jax.numpy as jnp
from jax import lax
from jax.experimental import pallas as pl
from jax.experimental.pallas import tpu as pltpu


def conv_relu_pool_kernel(x_ref, w_ref, b_ref, o_ref, p_ref, *, H, W, Cin, Cout):
    """Fused 3x3 SAME conv + bias + ReLU + 2x2/2 max-pool for one batch image.

    x_ref : (H+2, W+2, Cin)  bf16 zero-padded NHWC image (batch dim squeezed)
    w_ref : (9*Cin, Cout)    bf16 weights, row = (dy*3 + dx)*Cin + ci (resident)
    b_ref : (1, Cout)        f32 bias row                             (resident)
    o_ref : (Ho, Wo, Cout)   f32 pooled output
    p_ref : (H*W, 9*Cin)     bf16 VMEM scratch holding the im2col patches
    """
    Ho, Wo = H // 2, W // 2

    # --- im2col with K = 9*Cin: W stays in M, so the matmul is the true conv
    # FLOPs and the weight matrix is tiny.  Each tap is a leading/sublane-dim
    # slice of the padded NHWC image; reshapes only collapse leading dims. ---
    for dy in range(3):
        for dx in range(3):
            k = dy * 3 + dx
            slab = x_ref[dy:dy + H, dx:dx + W, :]               # (H, W, Cin) bf16
            p_ref[:, k * Cin:(k + 1) * Cin] = slab.reshape(H * W, Cin)

    # --- ONE MXU matmul: (H*W, 9*Cin) @ (9*Cin, Cout), bf16 in, f32 acc ---
    y = jnp.dot(p_ref[...], w_ref[...], preferred_element_type=jnp.float32)
    y = jnp.maximum(y + b_ref[...], 0.0)                        # bias + ReLU (f32)

    # --- 2x2 stride-2 max-pool.  Rows of y are ordered m = h*W + w; both
    # reshapes keep the minor (Cout) dim untouched. ---
    yh = y.reshape(Ho, 2 * W, Cout)                             # [ho, q*W + w, co]
    zh = jnp.maximum(yh[:, :W, :], yh[:, W:, :])                # h-pairs -> (Ho, W, Cout)
    zq = zh.reshape(Ho, Wo, 2, Cout)                            # [ho, wo, p, co]
    o_ref[...] = jnp.maximum(zq[:, :, 0, :], zq[:, :, 1, :]).astype(o_ref.dtype)


def pack_conv_block_params(weight_oihw, bias):
    """Torch (Cout,Cin,3,3) weights -> (9*Cin, Cout) bf16 im2col matrix + bias.

    Row ordering matches the kernel's patch layout: row = (dy*3 + dx)*Cin + ci.
    Done once at the model boundary (hoisted out of the hot path).
    """
    Cout, Cin, KH, KW = weight_oihw.shape
    assert KH == 3 and KW == 3
    w = jnp.transpose(jnp.asarray(weight_oihw, jnp.float32), (2, 3, 1, 0))  # (3,3,Cin,Cout)
    w_mat = w.reshape(9 * Cin, Cout).astype(jnp.bfloat16)
    b_row = jnp.asarray(bias, jnp.float32).reshape(1, Cout)
    return w_mat, b_row


@jax.jit
def conv_block_pallas(x_nchw, w_mat, b_row):
    """Fused conv3x3(pad=1) + ReLU + maxpool2x2.  NCHW in, NCHW out."""
    N, Cin, H, W = x_nchw.shape
    assert H % 2 == 0 and W % 2 == 0
    Cout = w_mat.shape[-1]
    assert w_mat.shape[0] == 9 * Cin
    Ho, Wo = H // 2, W // 2
    Hp, Wp = H + 2, W + 2

    # Single boundary transform (plain XLA, outside the kernel): NCHW -> NHWC,
    # SAME zero-pad, bf16 for the MXU.  No in-kernel pad scratch needed.
    x = jnp.transpose(x_nchw, (0, 2, 3, 1)).astype(jnp.bfloat16)
    x = jnp.pad(x, ((0, 0), (1, 1), (1, 1), (0, 0)))

    # Cost hint == exactly the emitted matmul FLOPs (= true conv FLOPs).
    flops = 2 * N * H * W * 9 * Cin * Cout
    bytes_accessed = (x.size * 2 + w_mat.size * 2 + b_row.size * 4
                      + N * Ho * Wo * Cout * 4)

    out = pl.pallas_call(
        partial(conv_relu_pool_kernel, H=H, W=W, Cin=Cin, Cout=Cout),
        out_shape=jax.ShapeDtypeStruct((N, Ho, Wo, Cout), jnp.float32),
        # Grid over batch: auto-pipeline double-buffers x/out across steps and
        # the "parallel" axis lets v7x's two TensorCores take one image each.
        grid=(N,),
        in_specs=[
            pl.BlockSpec((None, Hp, Wp, Cin), lambda n: (n, 0, 0, 0)),
            pl.BlockSpec((9 * Cin, Cout), lambda n: (0, 0)),     # resident weights
            pl.BlockSpec((1, Cout), lambda n: (0, 0)),           # resident bias
        ],
        out_specs=pl.BlockSpec((None, Ho, Wo, Cout), lambda n: (n, 0, 0, 0)),
        scratch_shapes=[pltpu.VMEM((H * W, 9 * Cin), jnp.bfloat16)],
        compiler_params=pltpu.CompilerParams(
            dimension_semantics=("parallel",)),
        cost_estimate=pl.CostEstimate(
            flops=flops, transcendentals=0, bytes_accessed=bytes_accessed),
    )(x, w_mat, b_row)

    # TODO(synk): at production shapes (H,W >= 128, Cin/Cout >= 64) add an
    # H-tile grid axis with a 2-row halo (padded HBM buffer + manual
    # pltpu.make_async_copy or pl.Element row offsets), keep M per matmul
    # >= 256 (>= 128 on v5e), and set pltpu.CompilerParams(vmem_limit_bytes=...)
    # so double-buffered tiles + the resident (9*Cin, Cout) weights stay under
    # v7x's 64 MiB (and v5e's 16 MiB scoped) VMEM.
    # TODO(synk): for small-channel configs (Cout < 128) the output store is
    # lane-sparse; fold an h-pair / batch into the lane axis once the required
    # minor-dim reshape is verified to lower (at production Cout it is dense).
    return jnp.transpose(out, (0, 3, 1, 2))   # NHWC -> NCHW


def conv_block_forward(x_nchw, packed_convs):
    # PyTorch ConvBlock.forward applies every conv to the ORIGINAL inputs, so
    # only the LAST conv's activation reaches the pool (n_iteration=1 default).
    w_mat, b_row = packed_convs[-1]
    return conv_block_pallas(x_nchw, w_mat, b_row)


def reference_forward(x_nchw, conv_params):
    w, b = conv_params[-1]
    y = lax.conv_general_dilated(
        x_nchw, w, window_strides=(1, 1), padding="SAME",
        dimension_numbers=("NCHW", "OIHW", "NCHW"))
    y = jnp.maximum(y + b[None, :, None, None], 0.0)
    return lax.reduce_window(y, -jnp.inf, lax.max,
                             (1, 1, 2, 2), (1, 1, 2, 2), "VALID")


if __name__ == "__main__":
    # Small shapes consistent with ConvBlock(in_ch=4, out_ch=8, n_iteration=1).
    N, IN_CH, OUT_CH, H, W = 2, 4, 8, 16, 16

    key = jax.random.PRNGKey(0)
    kx, kw, kb = jax.random.split(key, 3)
    x = jax.random.normal(kx, (N, IN_CH, H, W), dtype=jnp.float32)
    weight = 0.1 * jax.random.normal(kw, (OUT_CH, IN_CH, 3, 3), dtype=jnp.float32)
    bias = 0.1 * jax.random.normal(kb, (OUT_CH,), dtype=jnp.float32)
    params = [(weight, bias)]                                    # n_iteration = 1

    # Weight/bias repacking hoisted out of the hot path (done once).
    packed = [pack_conv_block_params(w, b) for (w, b) in params]

    out = jax.block_until_ready(conv_block_forward(x, packed))
    ref = reference_forward(x, params)

    if out.shape != (N, OUT_CH, H // 2, W // 2):
        raise AssertionError(f"bad output shape {out.shape}")
    # bf16 MXU operands (f32 accumulation) -> relaxed tolerance vs f32 reference.
    if not jnp.allclose(out, ref, atol=3e-2, rtol=3e-2):
        err = float(jnp.max(jnp.abs(out - ref)))
        raise AssertionError(f"Pallas output mismatch vs reference (max err {err})")

    print("KERNEL_OK")
</pallas_src>

<mosaic_0001>
module attributes {stable_mosaic.version = 11 : i64} {
  func.func @conv_relu_pool_kernel(%arg0: i32, %arg1: memref<1x18x18x4xbf16, #tpu.memory_space<vmem>>, %arg2: memref<36x8xbf16, #tpu.memory_space<vmem>>, %arg3: memref<1x8xf32, #tpu.memory_space<vmem>>, %arg4: memref<1x8x8x8xf32, #tpu.memory_space<vmem>>, %arg5: memref<256x36xbf16, #tpu.memory_space<vmem>>) attributes {dimension_semantics = [#tpu.dimension_semantics<parallel>], iteration_bounds = array<i64: 2>, scalar_prefetch = 0 : i64, scratch_operands = 1 : i64, tpu.core_type = #tpu.core_type<tc>, window_params = [{transform_indices = @transform_0, window_bounds = array<i64: 1, 18, 18, 4>}, {pipeline_mode = #tpu.pipeline_mode<synchronous>, transform_indices = @transform_1, window_bounds = array<i64: 36, 8>}, {pipeline_mode = #tpu.pipeline_mode<synchronous>, transform_indices = @transform_2, window_bounds = array<i64: 1, 8>}, {transform_indices = @transform_3, window_bounds = array<i64: 1, 8, 8, 8>}]} {
    %c0 = arith.constant 0 : index
    %c0_0 = arith.constant 0 : index
    %c0_1 = arith.constant 0 : index
    %c0_2 = arith.constant 0 : index
    %0 = vector.load %arg1[%c0, %c0_0, %c0_1, %c0_2] : memref<1x18x18x4xbf16, #tpu.memory_space<vmem>>, vector<1x16x16x4xbf16>
    %1 = vector.shape_cast %0 : vector<1x16x16x4xbf16> to vector<16x16x4xbf16>
    %2 = vector.shape_cast %1 : vector<16x16x4xbf16> to vector<256x4xbf16>
    %c0_3 = arith.constant 0 : index
    %c0_4 = arith.constant 0 : index
    %3 = vector.load %arg5[%c0_3, %c0_4] : memref<256x36xbf16, #tpu.memory_space<vmem>>, vector<256x4xbf16>
    tpu.vector_store %arg5[%c0_3, %c0_4], %2 {strides = array<i32>} : memref<256x36xbf16, #tpu.memory_space<vmem>>, vector<256x4xbf16>,
    %c0_5 = arith.constant 0 : index
    %c0_6 = arith.constant 0 : index
    %c1 = arith.constant 1 : index
    %c0_7 = arith.constant 0 : index
    %4 = vector.load %arg1[%c0_5, %c0_6, %c1, %c0_7] : memref<1x18x18x4xbf16, #tpu.memory_space<vmem>>, vector<1x16x16x4xbf16>
    %5 = vector.shape_cast %4 : vector<1x16x16x4xbf16> to vector<16x16x4xbf16>
    %6 = vector.shape_cast %5 : vector<16x16x4xbf16> to vector<256x4xbf16>
    %c0_8 = arith.constant 0 : index
    %c4 = arith.constant 4 : index
    %7 = vector.load %arg5[%c0_8, %c4] : memref<256x36xbf16, #tpu.memory_space<vmem>>, vector<256x4xbf16>
    tpu.vector_store %arg5[%c0_8, %c4], %6 {strides = array<i32>} : memref<256x36xbf16, #tpu.memory_space<vmem>>, vector<256x4xbf16>,
    %c0_9 = arith.constant 0 : index
    %c0_10 = arith.constant 0 : index
    %c2 = arith.constant 2 : index
    %c0_11 = arith.constant 0 : index
    %8 = vector.load %arg1[%c0_9, %c0_10, %c2, %c0_11] : memref<1x18x18x4xbf16, #tpu.memory_space<vmem>>, vector<1x16x16x4xbf16>
    %9 = vector.shape_cast %8 : vector<1x16x16x4xbf16> to vector<16x16x4xbf16>
    %10 = vector.shape_cast %9 : vector<16x16x4xbf16> to vector<256x4xbf16>
    %c0_12 = arith.constant 0 : index
    %c8 = arith.constant 8 : index
    %11 = vector.load %arg5[%c0_12, %c8] : memref<256x36xbf16, #tpu.memory_space<vmem>>, vector<256x4xbf16>
    tpu.vector_store %arg5[%c0_12, %c8], %10 {strides = array<i32>} : memref<256x36xbf16, #tpu.memory_space<vmem>>, vector<256x4xbf16>,
    %c0_13 = arith.constant 0 : index
    %c1_14 = arith.constant 1 : index
    %c0_15 = arith.constant 0 : index
    %c0_16 = arith.constant 0 : index
    %12 = vector.load %arg1[%c0_13, %c1_14, %c0_15, %c0_16] : memref<1x18x18x4xbf16, #tpu.memory_space<vmem>>, vector<1x16x16x4xbf16>
    %13 = vector.shape_cast %12 : vector<1x16x16x4xbf16> to vector<16x16x4xbf16>
    %14 = vector.shape_cast %13 : vector<16x16x4xbf16> to vector<256x4xbf16>
    %c0_17 = arith.constant 0 : index
    %c12 = arith.constant 12 : index
    %15 = vector.load %arg5[%c0_17, %c12] : memref<256x36xbf16, #tpu.memory_space<vmem>>, vector<256x4xbf16>
    tpu.vector_store %arg5[%c0_17, %c12], %14 {strides = array<i32>} : memref<256x36xbf16, #tpu.memory_space<vmem>>, vector<256x4xbf16>,
    %c0_18 = arith.constant 0 : index
    %c1_19 = arith.constant 1 : index
    %c1_20 = arith.constant 1 : index
    %c0_21 = arith.constant 0 : index
    %16 = vector.load %arg1[%c0_18, %c1_19, %c1_20, %c0_21] : memref<1x18x18x4xbf16, #tpu.memory_space<vmem>>, vector<1x16x16x4xbf16>
    %17 = vector.shape_cast %16 : vector<1x16x16x4xbf16> to vector<16x16x4xbf16>
    %18 = vector.shape_cast %17 : vector<16x16x4xbf16> to vector<256x4xbf16>
    %c0_22 = arith.constant 0 : index
    %c16 = arith.constant 16 : index
    %19 = vector.load %arg5[%c0_22, %c16] : memref<256x36xbf16, #tpu.memory_space<vmem>>, vector<256x4xbf16>
    tpu.vector_store %arg5[%c0_22, %c16], %18 {strides = array<i32>} : memref<256x36xbf16, #tpu.memory_space<vmem>>, vector<256x4xbf16>,
    %c0_23 = arith.constant 0 : index
    %c1_24 = arith.constant 1 : index
    %c2_25 = arith.constant 2 : index
    %c0_26 = arith.constant 0 : index
    %20 = vector.load %arg1[%c0_23, %c1_24, %c2_25, %c0_26] : memref<1x18x18x4xbf16, #tpu.memory_space<vmem>>, vector<1x16x16x4xbf16>
    %21 = vector.shape_cast %20 : vector<1x16x16x4xbf16> to vector<16x16x4xbf16>
    %22 = vector.shape_cast %21 : vector<16x16x4xbf16> to vector<256x4xbf16>
    %c0_27 = arith.constant 0 : index
    %c20 = arith.constant 20 : index
    %23 = vector.load %arg5[%c0_27, %c20] : memref<256x36xbf16, #tpu.memory_space<vmem>>, vector<256x4xbf16>
    tpu.vector_store %arg5[%c0_27, %c20], %22 {strides = array<i32>} : memref<256x36xbf16, #tpu.memory_space<vmem>>, vector<256x4xbf16>,
    %c0_28 = arith.constant 0 : index
    %c2_29 = arith.constant 2 : index
    %c0_30 = arith.constant 0 : index
    %c0_31 = arith.constant 0 : index
    %24 = vector.load %arg1[%c0_28, %c2_29, %c0_30, %c0_31] : memref<1x18x18x4xbf16, #tpu.memory_space<vmem>>, vector<1x16x16x4xbf16>
    %25 = vector.shape_cast %24 : vector<1x16x16x4xbf16> to vector<16x16x4xbf16>
    %26 = vector.shape_cast %25 : vector<16x16x4xbf16> to vector<256x4xbf16>
    %c0_32 = arith.constant 0 : index
    %c24 = arith.constant 24 : index
    %27 = vector.load %arg5[%c0_32, %c24] : memref<256x36xbf16, #tpu.memory_space<vmem>>, vector<256x4xbf16>
    tpu.vector_store %arg5[%c0_32, %c24], %26 {strides = array<i32>} : memref<256x36xbf16, #tpu.memory_space<vmem>>, vector<256x4xbf16>,
    %c0_33 = arith.constant 0 : index
    %c2_34 = arith.constant 2 : index
    %c1_35 = arith.constant 1 : index
    %c0_36 = arith.constant 0 : index
    %28 = vector.load %arg1[%c0_33, %c2_34, %c1_35, %c0_36] : memref<1x18x18x4xbf16, #tpu.memory_space<vmem>>, vector<1x16x16x4xbf16>
    %29 = vector.shape_cast %28 : vector<1x16x16x4xbf16> to vector<16x16x4xbf16>
    %30 = vector.shape_cast %29 : vector<16x16x4xbf16> to vector<256x4xbf16>
    %c0_37 = arith.constant 0 : index
    %c28 = arith.constant 28 : index
    %31 = vector.load %arg5[%c0_37, %c28] : memref<256x36xbf16, #tpu.memory_space<vmem>>, vector<256x4xbf16>
    tpu.vector_store %arg5[%c0_37, %c28], %30 {strides = array<i32>} : memref<256x36xbf16, #tpu.memory_space<vmem>>, vector<256x4xbf16>,
    %c0_38 = arith.constant 0 : index
    %c2_39 = arith.constant 2 : index
    %c2_40 = arith.constant 2 : index
    %c0_41 = arith.constant 0 : index
    %32 = vector.load %arg1[%c0_38, %c2_39, %c2_40, %c0_41] : memref<1x18x18x4xbf16, #tpu.memory_space<vmem>>, vector<1x16x16x4xbf16>
    %33 = vector.shape_cast %32 : vector<1x16x16x4xbf16> to vector<16x16x4xbf16>
    %34 = vector.shape_cast %33 : vector<16x16x4xbf16> to vector<256x4xbf16>
    %c0_42 = arith.constant 0 : index
    %c32 = arith.constant 32 : index
    %35 = vector.load %arg5[%c0_42, %c32] : memref<256x36xbf16, #tpu.memory_space<vmem>>, vector<256x4xbf16>
    tpu.vector_store %arg5[%c0_42, %c32], %34 {strides = array<i32>} : memref<256x36xbf16, #tpu.memory_space<vmem>>, vector<256x4xbf16>,
    %c0_43 = arith.constant 0 : index
    %c0_44 = arith.constant 0 : index
    %36 = vector.load %arg5[%c0_43, %c0_44] : memref<256x36xbf16, #tpu.memory_space<vmem>>, vector<256x36xbf16>
    %c0_45 = arith.constant 0 : index
    %c0_46 = arith.constant 0 : index
    %37 = vector.load %arg2[%c0_45, %c0_46] : memref<36x8xbf16, #tpu.memory_space<vmem>>, vector<36x8xbf16>
    %cst = arith.constant dense<0.000000e+00> : vector<256x8xf32>
    %38 = tpu.matmul %36, %37, %cst {dimension_numbers = #tpu.dot_dimension_numbers<[1], [0], [0], [1], [0, 0, 1, 1], [], []>} : vector<256x36xbf16>, vector<36x8xbf16>, vector<256x8xf32> -> vector<256x8xf32>
    %c0_47 = arith.constant 0 : index
    %c0_48 = arith.constant 0 : index
    %39 = vector.load %arg3[%c0_47, %c0_48] : memref<1x8xf32, #tpu.memory_space<vmem>>, vector<1x8xf32>
    %40 = vector.broadcast %39 : vector<1x8xf32> to vector<256x8xf32>
    %41 = arith.addf %38, %40 : vector<256x8xf32>
    %cst_49 = arith.constant 0.000000e+00 : f32
    %42 = vector.broadcast %cst_49 : f32 to vector<256x8xf32>
    %43 = arith.maximumf %41, %42 : vector<256x8xf32>
    %44 = vector.shape_cast %43 : vector<256x8xf32> to vector<8x32x8xf32>
    %45 = vector.extract_strided_slice %44 {offsets = [0, 0, 0], sizes = [8, 16, 8], strides = [1, 1, 1]} : vector<8x32x8xf32> to vector<8x16x8xf32>
    %46 = vector.extract_strided_slice %44 {offsets = [0, 16, 0], sizes = [8, 16, 8], strides = [1, 1, 1]} : vector<8x32x8xf32> to vector<8x16x8xf32>
    %47 = arith.maximumf %45, %46 : vector<8x16x8xf32>
    %48 = vector.shape_cast %47 : vector<8x16x8xf32> to vector<8x8x2x8xf32>
    %49 = vector.extract_strided_slice %48 {offsets = [0, 0, 0, 0], sizes = [8, 8, 1, 8], strides = [1, 1, 1, 1]} : vector<8x8x2x8xf32> to vector<8x8x1x8xf32>
    %50 = vector.shape_cast %49 : vector<8x8x1x8xf32> to vector<8x8x8xf32>
    %51 = vector.extract_strided_slice %48 {offsets = [0, 0, 1, 0], sizes = [8, 8, 1, 8], strides = [1, 1, 1, 1]} : vector<8x8x2x8xf32> to vector<8x8x1x8xf32>
    %52 = vector.shape_cast %51 : vector<8x8x1x8xf32> to vector<8x8x8xf32>
    %53 = arith.maximumf %50, %52 : vector<8x8x8xf32>
    %c0_50 = arith.constant 0 : index
    %c0_51 = arith.constant 0 : index
    %c0_52 = arith.constant 0 : index
    %c0_53 = arith.constant 0 : index
    %54 = vector.load %arg4[%c0_50, %c0_51, %c0_52, %c0_53] : memref<1x8x8x8xf32, #tpu.memory_space<vmem>>, vector<1x8x8x8xf32>
    %55 = vector.shape_cast %54 : vector<1x8x8x8xf32> to vector<8x8x8xf32>
    %56 = vector.shape_cast %53 : vector<8x8x8xf32> to vector<1x8x8x8xf32>
    tpu.vector_store %arg4[%c0_50, %c0_51, %c0_52, %c0_53], %56 {strides = array<i32>} : memref<1x8x8x8xf32, #tpu.memory_space<vmem>>, vector<1x8x8x8xf32>,
    return
  }
  func.func @transform_0(%arg0: i32) -> (i32, i32, i32, i32) {
    %c0_i32 = arith.constant 0 : i32
    %c0_i32_0 = arith.constant 0 : i32
    %c0_i32_1 = arith.constant 0 : i32
    %c0_i32_2 = arith.constant 0 : i32
    return %arg0, %c0_i32, %c0_i32_0, %c0_i32_1 : i32, i32, i32, i32
  }
  func.func @transform_1(%arg0: i32) -> (i32, i32) {
    %c0_i32 = arith.constant 0 : i32
    %c0_i32_0 = arith.constant 0 : i32
    %c0_i32_1 = arith.constant 0 : i32
    return %c0_i32, %c0_i32_0 : i32, i32
  }
  func.func @transform_2(%arg0: i32) -> (i32, i32) {
    %c0_i32 = arith.constant 0 : i32
    %c0_i32_0 = arith.constant 0 : i32
    %c0_i32_1 = arith.constant 0 : i32
    return %c0_i32, %c0_i32_0 : i32, i32
  }
  func.func @transform_3(%arg0: i32) -> (i32, i32, i32, i32) {
    %c0_i32 = arith.constant 0 : i32
    %c0_i32_0 = arith.constant 0 : i32
    %c0_i32_1 = arith.constant 0 : i32
    %c0_i32_2 = arith.constant 0 : i32
    return %arg0, %c0_i32, %c0_i32_0, %c0_i32_1 : i32, i32, i32, i32
  }
}

</mosaic_0001>

<llo_original>
// kernel: conv_block_pallas.1
$region0: #{conv_block_pallas.1}
  #allocation0 [shape = 'u32[]', space=smem, size = 0x4, offset = 0x4, fixed_abs, tag = 'smem constant byte address 0x4 - core index']
  #allocation1 [shape = 'u32[144,128]{1,0:T(1,128)}', space=vmem, size = 0x12000, scoped, tag = 'internal scratch']
  #allocation2 [shape = 'bf16[256,36]{1,0:T(16,128)(2,1)}', space=vmem, size = 0x10000, scoped, tag = 'scratch operand']
  %s0 = inlined_call_operand.vmem [shape: bf16[2,18,18,4], index: 0, kind: input, shape index: {}]
  %s1 = inlined_call_operand.vmem [shape: bf16[36,8], index: 1, kind: input, shape index: {}]
  %s2 = inlined_call_operand.vmem [shape: f32[1,8], index: 2, kind: input, shape index: {}]
  %s3 = inlined_call_operand.vmem [shape: f32[2,8,8,8], index: 3, kind: output, shape index: {}]
  %s4 = sld [smem:[#allocation0]]
  $region45: #{conv_block_pallas.1} parent=0
    _
  %s6 = ssub.s32 1, %s4
  %s7 = scalar_select 0, %s6, %s4
  loop: start=0, step=1, limit=4
  $region2: #{conv_block_pallas.1} parent=0 // loop_pre_header
    _
  $region3: #{conv_block_pallas.1} parent=0 // loop_header
    %s9 = sphi 0, %s13
    %p10 = scmp.ge.s32.totalorder %s9, 4
    %s19 = sphi 0, %s21
    %s22 = sphi 0, %s19
    %s23 = sphi 0, %s22
    %s39 = sphi 0, %s23
    %s43 = sphi 0, %s43
    %s45 = sphi 0, %s43
    %s46 = sphi 0, %s45
    %s60 = sphi 0, %s46
    %s64 = sphi 0, %s64
    %s66 = sphi 0, %s64
    %s67 = sphi 0, %s66
    %s81 = sphi 0, %s67
    %s87 = sphi 0, %s89
    %s90 = sphi 0, %s87
    %s91 = sphi 0, %s90
    %s107 = sphi 0, %s91
  $region4: #{conv_block_pallas.1} parent=0 // loop_header_branch
    %12 = sbr.rel (%p10) target = $region8
  $region5: #{conv_block_pallas.1} parent=0 // loop_body
    %s14 = ssub.s32 %s9, 1
    %s15 = ssub.s32 %s9, 2
    %s16 = sadd.s32 %s9, 1
    %s17 = ssub.s32 %s9, %s16
    %p18 = scmp.eq.s32.totalorder %s17, 0
    %s20 = sadd.s32 %s19, 1
    %s21 = scalar_select %p18, %s19, %s20
    %p24 = pneg %p18
    %p25 = scmp.eq.s32.totalorder %s9, 1
    %p26 = por %p24, %p25
    %p27 = scmp.ne.s32.totalorder %s19, %s22
    %p28 = scmp.eq.s32.totalorder %s9, 0
    %p29 = por %p27, %p28
    %p30 = scmp.ne.s32.totalorder %s19, %s22
    %p31 = scmp.eq.s32.totalorder %s14, 1
    %p32 = por %p30, %p31
    %p33 = scmp.ne.s32.totalorder %s22, %s23
    %p34 = scmp.eq.s32.totalorder %s14, 0
    %p35 = por %p33, %p34
    %p36 = scmp.ne.s32.totalorder %s22, %s23
    %p37 = scmp.eq.s32.totalorder %s15, 1
    %p38 = por %p36, %p37
    %p40 = scmp.ne.s32.totalorder %s23, %s39
    %p41 = scmp.eq.s32.totalorder %s15, 0
    %p42 = por %p40, %p41
    %s44 = sadd.s32 %s43, 1
    %p47 = scmp.eq.s32.totalorder %s9, 1
    %p48 = scmp.ne.s32.totalorder %s43, %s45
    %p49 = scmp.eq.s32.totalorder %s9, 0
    %p50 = por %p48, %p49
    %p51 = scmp.ne.s32.totalorder %s43, %s45
    %p52 = scmp.eq.s32.totalorder %s14, 1
    %p53 = por %p51, %p52
    %p54 = scmp.ne.s32.totalorder %s45, %s46
    %p55 = scmp.eq.s32.totalorder %s14, 0
    %p56 = por %p54, %p55
    %p57 = scmp.ne.s32.totalorder %s45, %s46
    %p58 = scmp.eq.s32.totalorder %s15, 1
    %p59 = por %p57, %p58
    %p61 = scmp.ne.s32.totalorder %s46, %s60
    %p62 = scmp.eq.s32.totalorder %s15, 0
    %p63 = por %p61, %p62
    %s65 = sadd.s32 %s64, 1
    %p68 = scmp.eq.s32.totalorder %s9, 1
    %p69 = scmp.ne.s32.totalorder %s64, %s66
    %p70 = scmp.eq.s32.totalorder %s9, 0
    %p71 = por %p69, %p70
    %p72 = scmp.ne.s32.totalorder %s64, %s66
    %p73 = scmp.eq.s32.totalorder %s14, 1
    %p74 = por %p72, %p73
    %p75 = scmp.ne.s32.totalorder %s66, %s67
    %p76 = scmp.eq.s32.totalorder %s14, 0
    %p77 = por %p75, %p76
    %p78 = scmp.ne.s32.totalorder %s66, %s67
    %p79 = scmp.eq.s32.totalorder %s15, 1
    %p80 = por %p78, %p79
    %p82 = scmp.ne.s32.totalorder %s67, %s81
    %p83 = scmp.eq.s32.totalorder %s15, 0
    %p84 = por %p82, %p83
    %s85 = ssub.s32 %s9, %s16
    %p86 = scmp.eq.s32.totalorder %s85, 0
    %s88 = sadd.s32 %s87, 1
    %s89 = scalar_select %p86, %s87, %s88
    %p92 = pneg %p86
    %p93 = scmp.eq.s32.totalorder %s9, 1
    %p94 = por %p92, %p93
    %p95 = scmp.ne.s32.totalorder %s87, %s90
    %p96 = scmp.eq.s32.totalorder %s9, 0
    %p97 = por %p95, %p96
    %p98 = scmp.ne.s32.totalorder %s87, %s90
    %p99 = scmp.eq.s32.totalorder %s14, 1
    %p100 = por %p98, %p99
    %p101 = scmp.ne.s32.totalorder %s90, %s91
    %p102 = scmp.eq.s32.totalorder %s14, 0
    %p103 = por %p101, %p102
    %p104 = scmp.ne.s32.totalorder %s90, %s91
    %p105 = scmp.eq.s32.totalorder %s15, 1
    %p106 = por %p104, %p105
    %p108 = scmp.ne.s32.totalorder %s91, %s107
    %p109 = scmp.eq.s32.totalorder %s15, 0
    %p110 = por %p108, %p109
    %p111 = scmp.le.s32.totalorder 1, %s9
    %p112 = scmp.lt.s32.totalorder %s9, 3
    %p113 = pnand %p111, %p112
    %p114 = pneg %p113
    // Predicated region
    $region9: #{conv_block_pallas.1} parent=5 // pred_check
      _
    $region10: #{conv_block_pallas.1} parent=5 // pred_check_branch
      %116 = sbr.rel (%p113) target = $region12
    $region11: #{conv_block_pallas.1} parent=5 // pred_region
      %s117 = ssub.s32 %s9, 1
      // Predicated region
      $region13: #{conv_block_pallas.1} parent=11 // pred_check
        %p118 = pneg %p56
      $region14: #{conv_block_pallas.1} parent=11 // pred_check_branch
        %120 = sbr.rel (%p118) target = $region16
      $region15: #{conv_block_pallas.1} parent=11 // pred_region
        _
      $region16: #{conv_block_pallas.1} parent=11 // pred_fallthru
        _
      // Predicated region
      $region17: #{conv_block_pallas.1} parent=11 // pred_check
        %p121 = pneg %p77
      $region18: #{conv_block_pallas.1} parent=11 // pred_check_branch
        %123 = sbr.rel (%p121) target = $region20
      $region19: #{conv_block_pallas.1} parent=11 // pred_region
        _
      $region20: #{conv_block_pallas.1} parent=11 // pred_fallthru
        _
    $region12: #{conv_block_pallas.1} parent=5 // pred_fallthru
      _
    %p124 = scmp.lt.s32.totalorder %s9, 2
    // Predicated region
    $region21: #{conv_block_pallas.1} parent=5 // pred_check
      %p125 = pneg %p124
    $region22: #{conv_block_pallas.1} parent=5 // pred_check_branch
      %127 = sbr.rel (%p125) target = $region24
    $region23: #{conv_block_pallas.1} parent=5 // pred_region
      // Predicated region
      $region25: #{conv_block_pallas.1} parent=23 // pred_check
        %p128 = pneg %p29
      $region26: #{conv_block_pallas.1} parent=23 // pred_check_branch
        %130 = sbr.rel (%p128) target = $region28
      $region27: #{conv_block_pallas.1} parent=23 // pred_region
        %p131 = scmp.lt.s32.totalorder %s9, 1
        %s132 = scalar_select %p131, %s9, 1
        %s133 = smul.addr %s132, 54
        %s134 = smul.addr %s133, 4
        %s135 = scalar_lea.vmem %s0, %s134
      $region28: #{conv_block_pallas.1} parent=23 // pred_fallthru
        _
    $region24: #{conv_block_pallas.1} parent=5 // pred_fallthru
      _
    %p136 = scmp.le.s32.totalorder 1, %s9
    %p137 = scmp.lt.s32.totalorder %s9, 3
    %p138 = pnand %p136, %p137
    %p139 = pneg %p138
    // Predicated region
    $region29: #{conv_block_pallas.1} parent=5 // pred_check
      _
    $region30: #{conv_block_pallas.1} parent=5 // pred_check_branch
      %141 = sbr.rel (%p138) target = $region32
    $region31: #{conv_block_pallas.1} parent=5 // pred_region
      %s142 = ssub.s32 %s9, 1
      %p143 = scmp.lt.s32.totalorder %s14, 1
      %s144 = scalar_select %p143, %s14, 1
      %s145 = smul.addr %s144, 54
      %s146 = smul.addr %s145, 4
      %s147 = scalar_lea.vmem %s0, %s146
      %p148 = pneg %p35
      %p149 = pneg %p32
      %p150 = pneg %p56
      %p151 = pneg %p53
      %p152 = pneg %p77
      %p153 = pneg %p74
      %p154 = pneg %p103
      %p155 = pneg %p100
      %p156 = scmp.lt.s32.totalorder %s14, 1
      %s157 = scalar_select %p156, %s14, 1
      %s158 = smul.addr %s157, 8
      %s159 = smul.addr %s158, 8
      %s160 = scalar_lea.vmem %s3, %s159
      %p161 = scmp.lt.s32.totalorder %s14, 1
      %s162 = scalar_select %p161, %s14, 1
      %s163 = smul.addr %s162, 54
      %s164 = smul.addr %s163, 4
      %s165 = scalar_lea.vmem %s0, %s164
      %p166 = scmp.lt.s32.totalorder %s14, 1
      %s167 = scalar_select %p166, %s14, 1
      %s168 = smul.addr %s167, 8
      %s169 = smul.addr %s168, 8
      %s170 = scalar_lea.vmem %s3, %s169
      %v172 = vld [vmem:[%s165] sm:$0xf]
      %v173 = vld [vmem:[%s165 + $0x4] sm:$0xf]
      %v174 = vld [vmem:[%s165 + $0xc] sm:$0xf]
      %v175 = vld [vmem:[%s165 + $0x10] sm:$0xf]
      %v176 = vld [vmem:[%s165 + $0x18] sm:$0xf]
      %v177 = vld [vmem:[%s165 + $0x1c] sm:$0xf]
      %v178 = vld [vmem:[%s165 + $0x24] sm:$0xf]
      %v179 = vld [vmem:[%s165 + $0x28] sm:$0xf]
      %v180 = vld [vmem:[%s165 + $0x30] sm:$0xf]
      %v181 = vld [vmem:[%s165 + $0x34] sm:$0xf]
      %v182 = vld [vmem:[%s165 + $0x3c] sm:$0xf]
      %v183 = vld [vmem:[%s165 + $0x40] sm:$0xf]
      %v184 = vld [vmem:[%s165 + $0x48] sm:$0xf]
      %v185 = vld [vmem:[%s165 + $0x4c] sm:$0xf]
      %v186 = vld [vmem:[%s165 + $0x54] sm:$0xf]
      %v187 = vld [vmem:[%s165 + $0x58] sm:$0xf]
      %v188 = vld [vmem:[%s165 + $0x60] sm:$0xf]
      %v189 = vld [vmem:[%s165 + $0x64] sm:$0xf]
      %v190 = vld [vmem:[%s165 + $0x6c] sm:$0xf]
      %v191 = vld [vmem:[%s165 + $0x70] sm:$0xf]
      %v192 = vld [vmem:[%s165 + $0x78] sm:$0xf]
      %v193 = vld [vmem:[%s165 + $0x7c] sm:$0xf]
      %v194 = vld [vmem:[%s165 + $0x84] sm:$0xf]
      %v195 = vld [vmem:[%s165 + $0x88] sm:$0xf]
      %v196 = vld [vmem:[%s165 + $0x90] sm:$0xf]
      %v197 = vld [vmem:[%s165 + $0x94] sm:$0xf]
      %v198 = vld [vmem:[%s165 + $0x9c] sm:$0xf]
      %v199 = vld [vmem:[%s165 + $0xa0] sm:$0xf]
      %v200 = vld [vmem:[%s165 + $0xa8] sm:$0xf]
      %v201 = vld [vmem:[%s165 + $0xac] sm:$0xf]
      %v202 = vld [vmem:[%s165 + $0xb4] sm:$0xf]
      %v203 = vld [vmem:[%s165 + $0xb8] sm:$0xf]
      %v236 = vunpack.c.l.b16 %v172
      %v237 = vunpack.c.l.b16 %v173
      %v238 = vunpack.c.l.b16 %v174
      %v239 = vunpack.c.l.b16 %v175
      %v240 = vunpack.c.l.b16 %v176
      %v241 = vunpack.c.l.b16 %v177
      %v242 = vunpack.c.l.b16 %v178
      %v243 = vunpack.c.l.b16 %v179
      %v244 = vunpack.c.l.b16 %v180
      %v245 = vunpack.c.l.b16 %v181
      %v246 = vunpack.c.l.b16 %v182
      %v247 = vunpack.c.l.b16 %v183
      %v248 = vunpack.c.l.b16 %v184
      %v249 = vunpack.c.l.b16 %v185
      %v250 = vunpack.c.l.b16 %v186
      %v251 = vunpack.c.l.b16 %v187
      %v252 = vunpack.c.l.b16 %v188
      %v253 = vunpack.c.l.b16 %v189
      %v254 = vunpack.c.l.b16 %v190
      %v255 = vunpack.c.l.b16 %v191
      %v256 = vunpack.c.l.b16 %v192
      %v257 = vunpack.c.l.b16 %v193
      %v258 = vunpack.c.l.b16 %v194
      %v259 = vunpack.c.l.b16 %v195
      %v260 = vunpack.c.l.b16 %v196
      %v261 = vunpack.c.l.b16 %v197
      %v262 = vunpack.c.l.b16 %v198
      %v263 = vunpack.c.l.b16 %v199
      %v264 = vunpack.c.l.b16 %v200
      %v265 = vunpack.c.l.b16 %v201
      %v266 = vunpack.c.l.b16 %v202
      %v267 = vunpack.c.l.b16 %v203
      %v268 = vpack.c.b16 %v237, %v236
      %v269 = vpack.c.b16 %v239, %v238
      %v270 = vpack.c.b16 %v241, %v240
      %v271 = vpack.c.b16 %v243, %v242
      %v272 = vpack.c.b16 %v245, %v244
      %v273 = vpack.c.b16 %v247, %v246
      %v274 = vpack.c.b16 %v249, %v248
      %v275 = vpack.c.b16 %v251, %v250
      %v276 = vpack.c.b16 %v253, %v252
      %v277 = vpack.c.b16 %v255, %v254
      %v278 = vpack.c.b16 %v257, %v256
      %v279 = vpack.c.b16 %v259, %v258
      %v280 = vpack.c.b16 %v261, %v260
      %v281 = vpack.c.b16 %v263, %v262
      %v282 = vpack.c.b16 %v265, %v264
      %v283 = vpack.c.b16 %v267, %v266
      %vm300 = vcmask 31744
      %301 = vst.msk [vmem:[#allocation2] sm:$0xff] %vm300, %v268
      %302 = vst.msk [vmem:[#allocation2 + $0x8] sm:$0xff] %vm300, %v269
      %303 = vst.msk [vmem:[#allocation2 + $0x10] sm:$0xff] %vm300, %v270
      %304 = vst.msk [vmem:[#allocation2 + $0x18] sm:$0xff] %vm300, %v271
      %305 = vst.msk [vmem:[#allocation2 + $0x20] sm:$0xff] %vm300, %v272
      %306 = vst.msk [vmem:[#allocation2 + $0x28] sm:$0xff] %vm300, %v273
      %307 = vst.msk [vmem:[#allocation2 + $0x30] sm:$0xff] %vm300, %v274
      %308 = vst.msk [vmem:[#allocation2 + $0x38] sm:$0xff] %vm300, %v275
      %309 = vst.msk [vmem:[#allocation2 + $0x40] sm:$0xff] %vm300, %v276
      %310 = vst.msk [vmem:[#allocation2 + $0x48] sm:$0xff] %vm300, %v277
      %311 = vst.msk [vmem:[#allocation2 + $0x50] sm:$0xff] %vm300, %v278
      %312 = vst.msk [vmem:[#allocation2 + $0x58] sm:$0xff] %vm300, %v279
      %313 = vst.msk [vmem:[#allocation2 + $0x60] sm:$0xff] %vm300, %v280
      %314 = vst.msk [vmem:[#allocation2 + $0x68] sm:$0xff] %vm300, %v281
      %315 = vst.msk [vmem:[#allocation2 + $0x70] sm:$0xff] %vm300, %v282
      %316 = vst.msk [vmem:[#allocation2 + $0x78] sm:$0xff] %vm300, %v283
      %v317 = vld [vmem:[%s165] sm:$0xf]
      %v318 = vld [vmem:[%s165 + $0x4] sm:$0xf]
      %v319 = vld [vmem:[%s165 + $0x8] sm:$0x1]
      %v320 = vld [vmem:[%s165 + $0xc] sm:$0xf]
      %v321 = vld [vmem:[%s165 + $0x10] sm:$0xf]
      %v322 = vld [vmem:[%s165 + $0x14] sm:$0x1]
      %v323 = vld [vmem:[%s165 + $0x18] sm:$0xf]
      %v324 = vld [vmem:[%s165 + $0x1c] sm:$0xf]
      %v325 = vld [vmem:[%s165 + $0x20] sm:$0x1]
      %v326 = vld [vmem:[%s165 + $0x24] sm:$0xf]
      %v327 = vld [vmem:[%s165 + $0x28] sm:$0xf]
      %v328 = vld [vmem:[%s165 + $0x2c] sm:$0x1]
      %v329 = vld [vmem:[%s165 + $0x30] sm:$0xf]
      %v330 = vld [vmem:[%s165 + $0x34] sm:$0xf]
      %v331 = vld [vmem:[%s165 + $0x38] sm:$0x1]
      %v332 = vld [vmem:[%s165 + $0x3c] sm:$0xf]
      %v333 = vld [vmem:[%s165 + $0x40] sm:$0xf]
      %v334 = vld [vmem:[%s165 + $0x44] sm:$0x1]
      %v335 = vld [vmem:[%s165 + $0x48] sm:$0xf]
      %v336 = vld [vmem:[%s165 + $0x4c] sm:$0xf]
      %v337 = vld [vmem:[%s165 + $0x50] sm:$0x1]
      %v338 = vld [vmem:[%s165 + $0x54] sm:$0xf]
      %v339 = vld [vmem:[%s165 + $0x58] sm:$0xf]
      %v340 = vld [vmem:[%s165 + $0x5c] sm:$0x1]
      %v341 = vld [vmem:[%s165 + $0x60] sm:$0xf]
      %v342 = vld [vmem:[%s165 + $0x64] sm:$0xf]
      %v343 = vld [vmem:[%s165 + $0x68] sm:$0x1]
      %v344 = vld [vmem:[%s165 + $0x6c] sm:$0xf]
      %v345 = vld [vmem:[%s165 + $0x70] sm:$0xf]
      %v346 = vld [vmem:[%s165 + $0x74] sm:$0x1]
      %v347 = vld [vmem:[%s165 + $0x78] sm:$0xf]
      %v348 = vld [vmem:[%s165 + $0x7c] sm:$0xf]
      %v349 = vld [vmem:[%s165 + $0x80] sm:$0x1]
      %v350 = vld [vmem:[%s165 + $0x84] sm:$0xf]
      %v351 = vld [vmem:[%s165 + $0x88] sm:$0xf]
      %v352 = vld [vmem:[%s165 + $0x8c] sm:$0x1]
      %v353 = vld [vmem:[%s165 + $0x90] sm:$0xf]
      %v354 = vld [vmem:[%s165 + $0x94] sm:$0xf]
      %v355 = vld [vmem:[%s165 + $0x98] sm:$0x1]
      %v356 = vld [vmem:[%s165 + $0x9c] sm:$0xf]
      %v357 = vld [vmem:[%s165 + $0xa0] sm:$0xf]
      %v358 = vld [vmem:[%s165 + $0xa4] sm:$0x1]
      %v359 = vld [vmem:[%s165 + $0xa8] sm:$0xf]
      %v360 = vld [vmem:[%s165 + $0xac] sm:$0xf]
      %v361 = vld [vmem:[%s165 + $0xb0] sm:$0x1]
      %v362 = vld [vmem:[%s165 + $0xb4] sm:$0xf]
      %v363 = vld [vmem:[%s165 + $0xb8] sm:$0xf]
      %v364 = vld [vmem:[%s165 + $0xbc] sm:$0x1]
      %vm365 = vsmask.f32 3328
      %vm366 = vsmask.f32 7440
      %vm367 = vmor %vm365, %vm366
      %v369 = vshrl.u32 %v317, 16
      %v371 = vrot.slane %v369, 4
      %v372 = vshll.u32 %v317, 16
      %v374 = vrot.slane %v372, 5
      %v375 = vor.u32 %v371, %v374
      %v376 = vrot.slane %v375, 4
      %v378 = vshll.u32 %v318, 16
      %v380 = vrot.slane %v378, 5
      %v381 = vsel %vm367, %v376, %v380
      %v382 = vshrl.u32 %v318, 16
      %v384 = vrot.slane %v382, 4
      %v385 = vor.u32 %v384, %v380
      %v386 = vrot.slane %v385, 4
      %v388 = vshll.u32 %v319, 16
      %v390 = vrot.slane %v388, 5
      %v391 = vsel %vm367, %v386, %v390
      %v393 = vshrl.u32 %v320, 16
      %v395 = vrot.slane %v393, 4
      %v396 = vshll.u32 %v320, 16
      %v398 = vrot.slane %v396, 5
      %v399 = vor.u32 %v395, %v398
      %v400 = vrot.slane %v399, 4
      %v402 = vshll.u32 %v321, 16
      %v404 = vrot.slane %v402, 5
      %v405 = vsel %vm367, %v400, %v404
      %v406 = vshrl.u32 %v321, 16
      %v408 = vrot.slane %v406, 4
      %v409 = vor.u32 %v408, %v404
      %v410 = vrot.slane %v409, 4
      %v412 = vshll.u32 %v322, 16
      %v414 = vrot.slane %v412, 5
      %v415 = vsel %vm367, %v410, %v414
      %v417 = vshrl.u32 %v323, 16
      %v419 = vrot.slane %v417, 4
      %v420 = vshll.u32 %v323, 16
      %v422 = vrot.slane %v420, 5
      %v423 = vor.u32 %v419, %v422
      %v424 = vrot.slane %v423, 4
      %v426 = vshll.u32 %v324, 16
      %v428 = vrot.slane %v426, 5
      %v429 = vsel %vm367, %v424, %v428
      %v430 = vshrl.u32 %v324, 16
      %v432 = vrot.slane %v430, 4
      %v433 = vor.u32 %v432, %v428
      %v434 = vrot.slane %v433, 4
      %v436 = vshll.u32 %v325, 16
      %v438 = vrot.slane %v436, 5
      %v439 = vsel %vm367, %v434, %v438
      %v441 = vshrl.u32 %v326, 16
      %v443 = vrot.slane %v441, 4
      %v444 = vshll.u32 %v326, 16
      %v446 = vrot.slane %v444, 5
      %v447 = vor.u32 %v443, %v446
      %v448 = vrot.slane %v447, 4
      %v450 = vshll.u32 %v327, 16
      %v452 = vrot.slane %v450, 5
      %v453 = vsel %vm367, %v448, %v452
      %v454 = vshrl.u32 %v327, 16
      %v456 = vrot.slane %v454, 4
      %v457 = vor.u32 %v456, %v452
      %v458 = vrot.slane %v457, 4
      %v460 = vshll.u32 %v328, 16
      %v462 = vrot.slane %v460, 5
      %v463 = vsel %vm367, %v458, %v462
      %v465 = vshrl.u32 %v329, 16
      %v467 = vrot.slane %v465, 4
      %v468 = vshll.u32 %v329, 16
      %v470 = vrot.slane %v468, 5
      %v471 = vor.u32 %v467, %v470
      %v472 = vrot.slane %v471, 4
      %v474 = vshll.u32 %v330, 16
      %v476 = vrot.slane %v474, 5
      %v477 = vsel %vm367, %v472, %v476
      %v478 = vshrl.u32 %v330, 16
      %v480 = vrot.slane %v478, 4
      %v481 = vor.u32 %v480, %v476
      %v482 = vrot.slane %v481, 4
      %v484 = vshll.u32 %v331, 16
      %v486 = vrot.slane %v484, 5
      %v487 = vsel %vm367, %v482, %v486
      %v489 = vshrl.u32 %v332, 16
      %v491 = vrot.slane %v489, 4
      %v492 = vshll.u32 %v332, 16
      %v494 = vrot.slane %v492, 5
      %v495 = vor.u32 %v491, %v494
      %v496 = vrot.slane %v495, 4
      %v498 = vshll.u32 %v333, 16
      %v500 = vrot.slane %v498, 5
      %v501 = vsel %vm367, %v496, %v500
      %v502 = vshrl.u32 %v333, 16
      %v504 = vrot.slane %v502, 4
      %v505 = vor.u32 %v504, %v500
      %v506 = vrot.slane %v505, 4
      %v508 = vshll.u32 %v334, 16
      %v510 = vrot.slane %v508, 5
      %v511 = vsel %vm367, %v506, %v510
      %v513 = vshrl.u32 %v335, 16
      %v515 = vrot.slane %v513, 4
      %v516 = vshll.u32 %v335, 16
      %v518 = vrot.slane %v516, 5
      %v519 = vor.u32 %v515, %v518
      %v520 = vrot.slane %v519, 4
      %v522 = vshll.u32 %v336, 16
      %v524 = vrot.slane %v522, 5
      %v525 = vsel %vm367, %v520, %v524
      %v526 = vshrl.u32 %v336, 16
      %v528 = vrot.slane %v526, 4
      %v529 = vor.u32 %v528, %v524
      %v530 = vrot.slane %v529, 4
      %v532 = vshll.u32 %v337, 16
      %v534 = vrot.slane %v532, 5
      %v535 = vsel %vm367, %v530, %v534
      %v537 = vshrl.u32 %v338, 16
      %v539 = vrot.slane %v537, 4
      %v540 = vshll.u32 %v338, 16
      %v542 = vrot.slane %v540, 5
      %v543 = vor.u32 %v539, %v542
      %v544 = vrot.slane %v543, 4
      %v546 = vshll.u32 %v339, 16
      %v548 = vrot.slane %v546, 5
      %v549 = vsel %vm367, %v544, %v548
      %v550 = vshrl.u32 %v339, 16
      %v552 = vrot.slane %v550, 4
      %v553 = vor.u32 %v552, %v548
      %v554 = vrot.slane %v553, 4
      %v556 = vshll.u32 %v340, 16
      %v558 = vrot.slane %v556, 5
      %v559 = vsel %vm367, %v554, %v558
      %v561 = vshrl.u32 %v341, 16
      %v563 = vrot.slane %v561, 4
      %v564 = vshll.u32 %v341, 16
      %v566 = vrot.slane %v564, 5
      %v567 = vor.u32 %v563, %v566
      %v568 = vrot.slane %v567, 4
      %v570 = vshll.u32 %v342, 16
      %v572 = vrot.slane %v570, 5
      %v573 = vsel %vm367, %v568, %v572
      %v574 = vshrl.u32 %v342, 16
      %v576 = vrot.slane %v574, 4
      %v577 = vor.u32 %v576, %v572
      %v578 = vrot.slane %v577, 4
      %v580 = vshll.u32 %v343, 16
      %v582 = vrot.slane %v580, 5
      %v583 = vsel %vm367, %v578, %v582
      %v585 = vshrl.u32 %v344, 16
      %v587 = vrot.slane %v585, 4
      %v588 = vshll.u32 %v344, 16
      %v590 = vrot.slane %v588, 5
      %v591 = vor.u32 %v587, %v590
      %v592 = vrot.slane %v591, 4
      %v594 = vshll.u32 %v345, 16
      %v596 = vrot.slane %v594, 5
      %v597 = vsel %vm367, %v592, %v596
      %v598 = vshrl.u32 %v345, 16
      %v600 = vrot.slane %v598, 4
      %v601 = vor.u32 %v600, %v596
      %v602 = vrot.slane %v601, 4
      %v604 = vshll.u32 %v346, 16
      %v606 = vrot.slane %v604, 5
      %v607 = vsel %vm367, %v602, %v606
      %v609 = vshrl.u32 %v347, 16
      %v611 = vrot.slane %v609, 4
      %v612 = vshll.u32 %v347, 16
      %v614 = vrot.slane %v612, 5
      %v615 = vor.u32 %v611, %v614
      %v616 = vrot.slane %v615, 4
      %v618 = vshll.u32 %v348, 16
      %v620 = vrot.slane %v618, 5
      %v621 = vsel %vm367, %v616, %v620
      %v622 = vshrl.u32 %v348, 16
      %v624 = vrot.slane %v622, 4
      %v625 = vor.u32 %v624, %v620
      %v626 = vrot.slane %v625, 4
      %v628 = vshll.u32 %v349, 16
      %v630 = vrot.slane %v628, 5
      %v631 = vsel %vm367, %v626, %v630
      %v633 = vshrl.u32 %v350, 16
      %v635 = vrot.slane %v633, 4
      %v636 = vshll.u32 %v350, 16
      %v638 = vrot.slane %v636, 5
      %v639 = vor.u32 %v635, %v638
      %v640 = vrot.slane %v639, 4
      %v642 = vshll.u32 %v351, 16
      %v644 = vrot.slane %v642, 5
      %v645 = vsel %vm367, %v640, %v644
      %v646 = vshrl.u32 %v351, 16
      %v648 = vrot.slane %v646, 4
      %v649 = vor.u32 %v648, %v644
      %v650 = vrot.slane %v649, 4
      %v652 = vshll.u32 %v352, 16
      %v654 = vrot.slane %v652, 5
      %v655 = vsel %vm367, %v650, %v654
      %v657 = vshrl.u32 %v353, 16
      %v659 = vrot.slane %v657, 4
      %v660 = vshll.u32 %v353, 16
      %v662 = vrot.slane %v660, 5
      %v663 = vor.u32 %v659, %v662
      %v664 = vrot.slane %v663, 4
      %v666 = vshll.u32 %v354, 16
      %v668 = vrot.slane %v666, 5
      %v669 = vsel %vm367, %v664, %v668
      %v670 = vshrl.u32 %v354, 16
      %v672 = vrot.slane %v670, 4
      %v673 = vor.u32 %v672, %v668
      %v674 = vrot.slane %v673, 4
      %v676 = vshll.u32 %v355, 16
      %v678 = vrot.slane %v676, 5
      %v679 = vsel %vm367, %v674, %v678
      %v681 = vshrl.u32 %v356, 16
      %v683 = vrot.slane %v681, 4
      %v684 = vshll.u32 %v356, 16
      %v686 = vrot.slane %v684, 5
      %v687 = vor.u32 %v683, %v686
      %v688 = vrot.slane %v687, 4
      %v690 = vshll.u32 %v357, 16
      %v692 = vrot.slane %v690, 5
      %v693 = vsel %vm367, %v688, %v692
      %v694 = vshrl.u32 %v357, 16
      %v696 = vrot.slane %v694, 4
      %v697 = vor.u32 %v696, %v692
      %v698 = vrot.slane %v697, 4
      %v700 = vshll.u32 %v358, 16
      %v702 = vrot.slane %v700, 5
      %v703 = vsel %vm367, %v698, %v702
      %v705 = vshrl.u32 %v359, 16
      %v707 = vrot.slane %v705, 4
      %v708 = vshll.u32 %v359, 16
      %v710 = vrot.slane %v708, 5
      %v711 = vor.u32 %v707, %v710
      %v712 = vrot.slane %v711, 4
      %v714 = vshll.u32 %v360, 16
      %v716 = vrot.slane %v714, 5
      %v717 = vsel %vm367, %v712, %v716
      %v718 = vshrl.u32 %v360, 16
      %v720 = vrot.slane %v718, 4
      %v721 = vor.u32 %v720, %v716
      %v722 = vrot.slane %v721, 4
      %v724 = vshll.u32 %v361, 16
      %v726 = vrot.slane %v724, 5
      %v727 = vsel %vm367, %v722, %v726
      %v729 = vshrl.u32 %v362, 16
      %v731 = vrot.slane %v729, 4
      %v732 = vshll.u32 %v362, 16
      %v734 = vrot.slane %v732, 5
      %v735 = vor.u32 %v731, %v734
      %v736 = vrot.slane %v735, 4
      %v738 = vshll.u32 %v363, 16
      %v740 = vrot.slane %v738, 5
      %v741 = vsel %vm367, %v736, %v740
      %v742 = vshrl.u32 %v363, 16
      %v744 = vrot.slane %v742, 4
      %v745 = vor.u32 %v744, %v740
      %v746 = vrot.slane %v745, 4
      %v748 = vshll.u32 %v364, 16
      %v750 = vrot.slane %v748, 5
      %v751 = vsel %vm367, %v746, %v750
      %v752 = vunpack.c.l.b16 %v381
      %v753 = vunpack.c.l.b16 %v391
      %v754 = vunpack.c.l.b16 %v405
      %v755 = vunpack.c.l.b16 %v415
      %v756 = vunpack.c.l.b16 %v429
      %v757 = vunpack.c.l.b16 %v439
      %v758 = vunpack.c.l.b16 %v453
      %v759 = vunpack.c.l.b16 %v463
      %v760 = vunpack.c.l.b16 %v477
      %v761 = vunpack.c.l.b16 %v487
      %v762 = vunpack.c.l.b16 %v501
      %v763 = vunpack.c.l.b16 %v511
      %v764 = vunpack.c.l.b16 %v525
      %v765 = vunpack.c.l.b16 %v535
      %v766 = vunpack.c.l.b16 %v549
      %v767 = vunpack.c.l.b16 %v559
      %v768 = vunpack.c.l.b16 %v573
      %v769 = vunpack.c.l.b16 %v583
      %v770 = vunpack.c.l.b16 %v597
      %v771 = vunpack.c.l.b16 %v607
      %v772 = vunpack.c.l.b16 %v621
      %v773 = vunpack.c.l.b16 %v631
      %v774 = vunpack.c.l.b16 %v645
      %v775 = vunpack.c.l.b16 %v655
      %v776 = vunpack.c.l.b16 %v669
      %v777 = vunpack.c.l.b16 %v679
      %v778 = vunpack.c.l.b16 %v693
      %v779 = vunpack.c.l.b16 %v703
      %v780 = vunpack.c.l.b16 %v717
      %v781 = vunpack.c.l.b16 %v727
      %v782 = vunpack.c.l.b16 %v741
      %v783 = vunpack.c.l.b16 %v751
      %v784 = vpack.c.b16 %v753, %v752
      %v785 = vpack.c.b16 %v755, %v754
      %v786 = vpack.c.b16 %v757, %v756
      %v787 = vpack.c.b16 %v759, %v758
      %v788 = vpack.c.b16 %v761, %v760
      %v789 = vpack.c.b16 %v763, %v762
      %v790 = vpack.c.b16 %v765, %v764
      %v791 = vpack.c.b16 %v767, %v766
      %v792 = vpack.c.b16 %v769, %v768
      %v793 = vpack.c.b16 %v771, %v770
      %v794 = vpack.c.b16 %v773, %v772
      %v795 = vpack.c.b16 %v775, %v774
      %v796 = vpack.c.b16 %v777, %v776
      %v797 = vpack.c.b16 %v779, %v778
      %v798 = vpack.c.b16 %v781, %v780
      %v799 = vpack.c.b16 %v783, %v782
      %800 = vrot.lane.b32.xlu0 %v784, 4
      %v801 = vpop.permute.xlu0 %800
      %802 = vrot.lane.b32.xlu0 %v785, 4
      %v803 = vpop.permute.xlu0 %802
      %804 = vrot.lane.b32.xlu0 %v786, 4
      %v805 = vpop.permute.xlu0 %804
      %806 = vrot.lane.b32.xlu0 %v787, 4
      %v807 = vpop.permute.xlu0 %806
      %808 = vrot.lane.b32.xlu0 %v788, 4
      %v809 = vpop.permute.xlu0 %808
      %810 = vrot.lane.b32.xlu0 %v789, 4
      %v811 = vpop.permute.xlu0 %810
      %812 = vrot.lane.b32.xlu0 %v790, 4
      %v813 = vpop.permute.xlu0 %812
      %814 = vrot.lane.b32.xlu0 %v791, 4
      %v815 = vpop.permute.xlu0 %814
      %816 = vrot.lane.b32.xlu0 %v792, 4
      %v817 = vpop.permute.xlu0 %816
      %818 = vrot.lane.b32.xlu0 %v793, 4
      %v819 = vpop.permute.xlu0 %818
      %820 = vrot.lane.b32.xlu0 %v794, 4
      %v821 = vpop.permute.xlu0 %820
      %822 = vrot.lane.b32.xlu0 %v795, 4
      %v823 = vpop.permute.xlu0 %822
      %824 = vrot.lane.b32.xlu0 %v796, 4
      %v825 = vpop.permute.xlu0 %824
      %826 = vrot.lane.b32.xlu0 %v797, 4
      %v827 = vpop.permute.xlu0 %826
      %828 = vrot.lane.b32.xlu0 %v798, 4
      %v829 = vpop.permute.xlu0 %828
      %830 = vrot.lane.b32.xlu0 %v799, 4
      %v831 = vpop.permute.xlu0 %830
      %vm848 = vcmask 64544
      %849 = vst.msk [vmem:[#allocation2] sm:$0xff] %vm848, %v801
      %850 = vst.msk [vmem:[#allocation2 + $0x8] sm:$0xff] %vm848, %v803
      %851 = vst.msk [vmem:[#allocation2 + $0x10] sm:$0xff] %vm848, %v805
      %852 = vst.msk [vmem:[#allocation2 + $0x18] sm:$0xff] %vm848, %v807
      %853 = vst.msk [vmem:[#allocation2 + $0x20] sm:$0xff] %vm848, %v809
      %854 = vst.msk [vmem:[#allocation2 + $0x28] sm:$0xff] %vm848, %v811
      %855 = vst.msk [vmem:[#allocation2 + $0x30] sm:$0xff] %vm848, %v813
      %856 = vst.msk [vmem:[#allocation2 + $0x38] sm:$0xff] %vm848, %v815
      %857 = vst.msk [vmem:[#allocation2 + $0x40] sm:$0xff] %vm848, %v817
      %858 = vst.msk [vmem:[#allocation2 + $0x48] sm:$0xff] %vm848, %v819
      %859 = vst.msk [vmem:[#allocation2 + $0x50] sm:$0xff] %vm848, %v821
      %860 = vst.msk [vmem:[#allocation2 + $0x58] sm:$0xff] %vm848, %v823
      %861 = vst.msk [vmem:[#allocation2 + $0x60] sm:$0xff] %vm848, %v825
      %862 = vst.msk [vmem:[#allocation2 + $0x68] sm:$0xff] %vm848, %v827
      %863 = vst.msk [vmem:[#allocation2 + $0x70] sm:$0xff] %vm848, %v829
      %864 = vst.msk [vmem:[#allocation2 + $0x78] sm:$0xff] %vm848, %v831
      %v865 = vld [vmem:[%s165] sm:$0xe]
      %v866 = vld [vmem:[%s165 + $0x4] sm:$0xf]
      %v867 = vld [vmem:[%s165 + $0x8] sm:$0x1]
      %v868 = vld [vmem:[%s165 + $0xc] sm:$0xe]
      %v869 = vld [vmem:[%s165 + $0x10] sm:$0xf]
      %v870 = vld [vmem:[%s165 + $0x14] sm:$0x1]
      %v871 = vld [vmem:[%s165 + $0x18] sm:$0xe]
      %v872 = vld [vmem:[%s165 + $0x1c] sm:$0xf]
      %v873 = vld [vmem:[%s165 + $0x20] sm:$0x1]
      %v874 = vld [vmem:[%s165 + $0x24] sm:$0xe]
      %v875 = vld [vmem:[%s165 + $0x28] sm:$0xf]
      %v876 = vld [vmem:[%s165 + $0x2c] sm:$0x1]
      %v877 = vld [vmem:[%s165 + $0x30] sm:$0xe]
      %v878 = vld [vmem:[%s165 + $0x34] sm:$0xf]
      %v879 = vld [vmem:[%s165 + $0x38] sm:$0x1]
      %v880 = vld [vmem:[%s165 + $0x3c] sm:$0xe]
      %v881 = vld [vmem:[%s165 + $0x40] sm:$0xf]
      %v882 = vld [vmem:[%s165 + $0x44] sm:$0x1]
      %v883 = vld [vmem:[%s165 + $0x48] sm:$0xe]
      %v884 = vld [vmem:[%s165 + $0x4c] sm:$0xf]
      %v885 = vld [vmem:[%s165 + $0x50] sm:$0x1]
      %v886 = vld [vmem:[%s165 + $0x54] sm:$0xe]
      %v887 = vld [vmem:[%s165 + $0x58] sm:$0xf]
      %v888 = vld [vmem:[%s165 + $0x5c] sm:$0x1]
      %v889 = vld [vmem:[%s165 + $0x60] sm:$0xe]
      %v890 = vld [vmem:[%s165 + $0x64] sm:$0xf]
      %v891 = vld [vmem:[%s165 + $0x68] sm:$0x1]
      %v892 = vld [vmem:[%s165 + $0x6c] sm:$0xe]
      %v893 = vld [vmem:[%s165 + $0x70] sm:$0xf]
      %v894 = vld [vmem:[%s165 + $0x74] sm:$0x1]
      %v895 = vld [vmem:[%s165 + $0x78] sm:$0xe]
      %v896 = vld [vmem:[%s165 + $0x7c] sm:$0xf]
      %v897 = vld [vmem:[%s165 + $0x80] sm:$0x1]
      %v898 = vld [vmem:[%s165 + $0x84] sm:$0xe]
      %v899 = vld [vmem:[%s165 + $0x88] sm:$0xf]
      %v900 = vld [vmem:[%s165 + $0x8c] sm:$0x1]
      %v901 = vld [vmem:[%s165 + $0x90] sm:$0xe]
      %v902 = vld [vmem:[%s165 + $0x94] sm:$0xf]
      %v903 = vld [vmem:[%s165 + $0x98] sm:$0x1]
      %v904 = vld [vmem:[%s165 + $0x9c] sm:$0xe]
      %v905 = vld [vmem:[%s165 + $0xa0] sm:$0xf]
      %v906 = vld [vmem:[%s165 + $0xa4] sm:$0x1]
      %v907 = vld [vmem:[%s165 + $0xa8] sm:$0xe]
      %v908 = vld [vmem:[%s165 + $0xac] sm:$0xf]
      %v909 = vld [vmem:[%s165 + $0xb0] sm:$0x1]
      %v910 = vld [vmem:[%s165 + $0xb4] sm:$0xe]
      %v911 = vld [vmem:[%s165 + $0xb8] sm:$0xf]
      %v912 = vld [vmem:[%s165 + $0xbc] sm:$0x1]
      %vm961 = vcmask 1042432
      %vm962 = vcmask 1046532
      %vm963 = vmor %vm961, %vm962
      %v964 = vrot.slane %v865, 5
      %v965 = vrot.slane %v964, 4
      %v966 = vrot.slane %v866, 5
      %v967 = vsel %vm963, %v965, %v966
      %v968 = vrot.slane %v966, 4
      %v969 = vrot.slane %v867, 5
      %v970 = vsel %vm963, %v968, %v969
      %v971 = vrot.slane %v868, 5
      %v972 = vrot.slane %v971, 4
      %v973 = vrot.slane %v869, 5
      %v974 = vsel %vm963, %v972, %v973
      %v975 = vrot.slane %v973, 4
      %v976 = vrot.slane %v870, 5
      %v977 = vsel %vm963, %v975, %v976
      %v978 = vrot.slane %v871, 5
      %v979 = vrot.slane %v978, 4
      %v980 = vrot.slane %v872, 5
      %v981 = vsel %vm963, %v979, %v980
      %v982 = vrot.slane %v980, 4
      %v983 = vrot.slane %v873, 5
      %v984 = vsel %vm963, %v982, %v983
      %v985 = vrot.slane %v874, 5
      %v986 = vrot.slane %v985, 4
      %v987 = vrot.slane %v875, 5
      %v988 = vsel %vm963, %v986, %v987
      %v989 = vrot.slane %v987, 4
      %v990 = vrot.slane %v876, 5
      %v991 = vsel %vm963, %v989, %v990
      %v992 = vrot.slane %v877, 5
      %v993 = vrot.slane %v992, 4
      %v994 = vrot.slane %v878, 5
      %v995 = vsel %vm963, %v993, %v994
      %v996 = vrot.slane %v994, 4
      %v997 = vrot.slane %v879, 5
      %v998 = vsel %vm963, %v996, %v997
      %v999 = vrot.slane %v880, 5
      %v1000 = vrot.slane %v999, 4
      %v1001 = vrot.slane %v881, 5
      %v1002 = vsel %vm963, %v1000, %v1001
      %v1003 = vrot.slane %v1001, 4
      %v1004 = vrot.slane %v882, 5
      %v1005 = vsel %vm963, %v1003, %v1004
      %v1006 = vrot.slane %v883, 5
      %v1007 = vrot.slane %v1006, 4
      %v1008 = vrot.slane %v884, 5
      %v1009 = vsel %vm963, %v1007, %v1008
      %v1010 = vrot.slane %v1008, 4
      %v1011 = vrot.slane %v885, 5
      %v1012 = vsel %vm963, %v1010, %v1011
      %v1013 = vrot.slane %v886, 5
      %v1014 = vrot.slane %v1013, 4
      %v1015 = vrot.slane %v887, 5
      %v1016 = vsel %vm963, %v1014, %v1015
      %v1017 = vrot.slane %v1015, 4
      %v1018 = vrot.slane %v888, 5
      %v1019 = vsel %vm963, %v1017, %v1018
      %v1020 = vrot.slane %v889, 5
      %v1021 = vrot.slane %v1020, 4
      %v1022 = vrot.slane %v890, 5
      %v1023 = vsel %vm963, %v1021, %v1022
      %v1024 = vrot.slane %v1022, 4
      %v1025 = vrot.slane %v891, 5
      %v1026 = vsel %vm963, %v1024, %v1025
      %v1027 = vrot.slane %v892, 5
      %v1028 = vrot.slane %v1027, 4
      %v1029 = vrot.slane %v893, 5
      %v1030 = vsel %vm963, %v1028, %v1029
      %v1031 = vrot.slane %v1029, 4
      %v1032 = vrot.slane %v894, 5
      %v1033 = vsel %vm963, %v1031, %v1032
      %v1034 = vrot.slane %v895, 5
      %v1035 = vrot.slane %v1034, 4
      %v1036 = vrot.slane %v896, 5
      %v1037 = vsel %vm963, %v1035, %v1036
      %v1038 = vrot.slane %v1036, 4
      %v1039 = vrot.slane %v897, 5
      %v1040 = vsel %vm963, %v1038, %v1039
      %v1041 = vrot.slane %v898, 5
      %v1042 = vrot.slane %v1041, 4
      %v1043 = vrot.slane %v899, 5
      %v1044 = vsel %vm963, %v1042, %v1043
      %v1045 = vrot.slane %v1043, 4
      %v1046 = vrot.slane %v900, 5
      %v1047 = vsel %vm963, %v1045, %v1046
      %v1048 = vrot.slane %v901, 5
      %v1049 = vrot.slane %v1048, 4
      %v1050 = vrot.slane %v902, 5
      %v1051 = vsel %vm963, %v1049, %v1050
      %v1052 = vrot.slane %v1050, 4
      %v1053 = vrot.slane %v903, 5
      %v1054 = vsel %vm963, %v1052, %v1053
      %v1055 = vrot.slane %v904, 5
      %v1056 = vrot.slane %v1055, 4
      %v1057 = vrot.slane %v905, 5
      %v1058 = vsel %vm963, %v1056, %v1057
      %v1059 = vrot.slane %v1057, 4
      %v1060 = vrot.slane %v906, 5
      %v1061 = vsel %vm963, %v1059, %v1060
      %v1062 = vrot.slane %v907, 5
      %v1063 = vrot.slane %v1062, 4
      %v1064 = vrot.slane %v908, 5
      %v1065 = vsel %vm963, %v1063, %v1064
      %v1066 = vrot.slane %v1064, 4
      %v1067 = vrot.slane %v909, 5
      %v1068 = vsel %vm963, %v1066, %v1067
      %v1069 = vrot.slane %v910, 5
      %v1070 = vrot.slane %v1069, 4
      %v1071 = vrot.slane %v911, 5
      %v1072 = vsel %vm963, %v1070, %v1071
      %v1073 = vrot.slane %v1071, 4
      %v1074 = vrot.slane %v912, 5
      %v1075 = vsel %vm963, %v1073, %v1074
      %v1076 = vunpack.c.l.b16 %v967
      %v1077 = vunpack.c.l.b16 %v970
      %v1078 = vunpack.c.l.b16 %v974
      %v1079 = vunpack.c.l.b16 %v977
      %v1080 = vunpack.c.l.b16 %v981
      %v1081 = vunpack.c.l.b16 %v984
      %v1082 = vunpack.c.l.b16 %v988
      %v1083 = vunpack.c.l.b16 %v991
      %v1084 = vunpack.c.l.b16 %v995
      %v1085 = vunpack.c.l.b16 %v998
      %v1086 = vunpack.c.l.b16 %v1002
      %v1087 = vunpack.c.l.b16 %v1005
      %v1088 = vunpack.c.l.b16 %v1009
      %v1089 = vunpack.c.l.b16 %v1012
      %v1090 = vunpack.c.l.b16 %v1016
      %v1091 = vunpack.c.l.b16 %v1019
      %v1092 = vunpack.c.l.b16 %v1023
      %v1093 = vunpack.c.l.b16 %v1026
      %v1094 = vunpack.c.l.b16 %v1030
      %v1095 = vunpack.c.l.b16 %v1033
      %v1096 = vunpack.c.l.b16 %v1037
      %v1097 = vunpack.c.l.b16 %v1040
      %v1098 = vunpack.c.l.b16 %v1044
      %v1099 = vunpack.c.l.b16 %v1047
      %v1100 = vunpack.c.l.b16 %v1051
      %v1101 = vunpack.c.l.b16 %v1054
      %v1102 = vunpack.c.l.b16 %v1058
      %v1103 = vunpack.c.l.b16 %v1061
      %v1104 = vunpack.c.l.b16 %v1065
      %v1105 = vunpack.c.l.b16 %v1068
      %v1106 = vunpack.c.l.b16 %v1072
      %v1107 = vunpack.c.l.b16 %v1075
      %v1108 = vpack.c.b16 %v1077, %v1076
      %v1109 = vpack.c.b16 %v1079, %v1078
      %v1110 = vpack.c.b16 %v1081, %v1080
      %v1111 = vpack.c.b16 %v1083, %v1082
      %v1112 = vpack.c.b16 %v1085, %v1084
      %v1113 = vpack.c.b16 %v1087, %v1086
      %v1114 = vpack.c.b16 %v1089, %v1088
      %v1115 = vpack.c.b16 %v1091, %v1090
      %v1116 = vpack.c.b16 %v1093, %v1092
      %v1117 = vpack.c.b16 %v1095, %v1094
      %v1118 = vpack.c.b16 %v1097, %v1096
      %v1119 = vpack.c.b16 %v1099, %v1098
      %v1120 = vpack.c.b16 %v1101, %v1100
      %v1121 = vpack.c.b16 %v1103, %v1102
      %v1122 = vpack.c.b16 %v1105, %v1104
      %v1123 = vpack.c.b16 %v1107, %v1106
      %1124 = vrot.lane.b32.xlu0 %v1108, 8
      %v1125 = vpop.permute.xlu0 %1124
      %1126 = vrot.lane.b32.xlu0 %v1109, 8
      %v1127 = vpop.permute.xlu0 %1126
      %1128 = vrot.lane.b32.xlu0 %v1110, 8
      %v1129 = vpop.permute.xlu0 %1128
      %1130 = vrot.lane.b32.xlu0 %v1111, 8
      %v1131 = vpop.permute.xlu0 %1130
      %1132 = vrot.lane.b32.xlu0 %v1112, 8
      %v1133 = vpop.permute.xlu0 %1132
      %1134 = vrot.lane.b32.xlu0 %v1113, 8
      %v1135 = vpop.permute.xlu0 %1134
      %1136 = vrot.lane.b32.xlu0 %v1114, 8
      %v1137 = vpop.permute.xlu0 %1136
      %1138 = vrot.lane.b32.xlu0 %v1115, 8
      %v1139 = vpop.permute.xlu0 %1138
      %1140 = vrot.lane.b32.xlu0 %v1116, 8
      %v1141 = vpop.permute.xlu0 %1140
      %1142 = vrot.lane.b32.xlu0 %v1117, 8
      %v1143 = vpop.permute.xlu0 %1142
      %1144 = vrot.lane.b32.xlu0 %v1118, 8
      %v1145 = vpop.permute.xlu0 %1144
      %1146 = vrot.lane.b32.xlu0 %v1119, 8
      %v1147 = vpop.permute.xlu0 %1146
      %1148 = vrot.lane.b32.xlu0 %v1120, 8
      %v1149 = vpop.permute.xlu0 %1148
      %1150 = vrot.lane.b32.xlu0 %v1121, 8
      %v1151 = vpop.permute.xlu0 %1150
      %1152 = vrot.lane.b32.xlu0 %v1122, 8
      %v1153 = vpop.permute.xlu0 %1152
      %1154 = vrot.lane.b32.xlu0 %v1123, 8
      %v1155 = vpop.permute.xlu0 %1154
      %vm1172 = vcmask 97344
      %1173 = vst.msk [vmem:[#allocation2] sm:$0xff] %vm1172, %v1125
      %1174 = vst.msk [vmem:[#allocation2 + $0x8] sm:$0xff] %vm1172, %v1127
      %1175 = vst.msk [vmem:[#allocation2 + $0x10] sm:$0xff] %vm1172, %v1129
      %1176 = vst.msk [vmem:[#allocation2 + $0x18] sm:$0xff] %vm1172, %v1131
      %1177 = vst.msk [vmem:[#allocation2 + $0x20] sm:$0xff] %vm1172, %v1133
      %1178 = vst.msk [vmem:[#allocation2 + $0x28] sm:$0xff] %vm1172, %v1135
      %1179 = vst.msk [vmem:[#allocation2 + $0x30] sm:$0xff] %vm1172, %v1137
      %1180 = vst.msk [vmem:[#allocation2 + $0x38] sm:$0xff] %vm1172, %v1139
      %1181 = vst.msk [vmem:[#allocation2 + $0x40] sm:$0xff] %vm1172, %v1141
      %1182 = vst.msk [vmem:[#allocation2 + $0x48] sm:$0xff] %vm1172, %v1143
      %1183 = vst.msk [vmem:[#allocation2 + $0x50] sm:$0xff] %vm1172, %v1145
      %1184 = vst.msk [vmem:[#allocation2 + $0x58] sm:$0xff] %vm1172, %v1147
      %1185 = vst.msk [vmem:[#allocation2 + $0x60] sm:$0xff] %vm1172, %v1149
      %1186 = vst.msk [vmem:[#allocation2 + $0x68] sm:$0xff] %vm1172, %v1151
      %1187 = vst.msk [vmem:[#allocation2 + $0x70] sm:$0xff] %vm1172, %v1153
      %1188 = vst.msk [vmem:[#allocation2 + $0x78] sm:$0xff] %vm1172, %v1155
      %s1189 = scalar_lea.vmem %s165, 12
      %v1190 = vld [vmem:[%s1189] sm:$0xf]
      %v1191 = vld [vmem:[%s1189 + $0x4] sm:$0xf]
      %v1192 = vld [vmem:[%s1189 + $0xc] sm:$0xf]
      %v1193 = vld [vmem:[%s1189 + $0x10] sm:$0xf]
      %v1194 = vld [vmem:[%s1189 + $0x18] sm:$0xf]
      %v1195 = vld [vmem:[%s1189 + $0x1c] sm:$0xf]
      %v1196 = vld [vmem:[%s1189 + $0x24] sm:$0xf]
      %v1197 = vld [vmem:[%s1189 + $0x28] sm:$0xf]
      %v1198 = vld [vmem:[%s1189 + $0x30] sm:$0xf]
      %v1199 = vld [vmem:[%s1189 + $0x34] sm:$0xf]
      %v1200 = vld [vmem:[%s1189 + $0x3c] sm:$0xf]
      %v1201 = vld [vmem:[%s1189 + $0x40] sm:$0xf]
      %v1202 = vld [vmem:[%s1189 + $0x48] sm:$0xf]
      %v1203 = vld [vmem:[%s1189 + $0x4c] sm:$0xf]
      %v1204 = vld [vmem:[%s1189 + $0x54] sm:$0xf]
      %v1205 = vld [vmem:[%s1189 + $0x58] sm:$0xf]
      %v1206 = vld [vmem:[%s1189 + $0x60] sm:$0xf]
      %v1207 = vld [vmem:[%s1189 + $0x64] sm:$0xf]
      %v1208 = vld [vmem:[%s1189 + $0x6c] sm:$0xf]
      %v1209 = vld [vmem:[%s1189 + $0x70] sm:$0xf]
      %v1210 = vld [vmem:[%s1189 + $0x78] sm:$0xf]
      %v1211 = vld [vmem:[%s1189 + $0x7c] sm:$0xf]
      %v1212 = vld [vmem:[%s1189 + $0x84] sm:$0xf]
      %v1213 = vld [vmem:[%s1189 + $0x88] sm:$0xf]
      %v1214 = vld [vmem:[%s1189 + $0x90] sm:$0xf]
      %v1215 = vld [vmem:[%s1189 + $0x94] sm:$0xf]
      %v1216 = vld [vmem:[%s1189 + $0x9c] sm:$0xf]
      %v1217 = vld [vmem:[%s1189 + $0xa0] sm:$0xf]
      %v1218 = vld [vmem:[%s1189 + $0xa8] sm:$0xf]
      %v1219 = vld [vmem:[%s1189 + $0xac] sm:$0xf]
      %v1220 = vld [vmem:[%s1189 + $0xb4] sm:$0xf]
      %v1221 = vld [vmem:[%s1189 + $0xb8] sm:$0xf]
      %v1254 = vunpack.c.l.b16 %v1190
      %v1255 = vunpack.c.l.b16 %v1191
      %v1256 = vunpack.c.l.b16 %v1192
      %v1257 = vunpack.c.l.b16 %v1193
      %v1258 = vunpack.c.l.b16 %v1194
      %v1259 = vunpack.c.l.b16 %v1195
      %v1260 = vunpack.c.l.b16 %v1196
      %v1261 = vunpack.c.l.b16 %v1197
      %v1262 = vunpack.c.l.b16 %v1198
      %v1263 = vunpack.c.l.b16 %v1199
      %v1264 = vunpack.c.l.b16 %v1200
      %v1265 = vunpack.c.l.b16 %v1201
      %v1266 = vunpack.c.l.b16 %v1202
      %v1267 = vunpack.c.l.b16 %v1203
      %v1268 = vunpack.c.l.b16 %v1204
      %v1269 = vunpack.c.l.b16 %v1205
      %v1270 = vunpack.c.l.b16 %v1206
      %v1271 = vunpack.c.l.b16 %v1207
      %v1272 = vunpack.c.l.b16 %v1208
      %v1273 = vunpack.c.l.b16 %v1209
      %v1274 = vunpack.c.l.b16 %v1210
      %v1275 = vunpack.c.l.b16 %v1211
      %v1276 = vunpack.c.l.b16 %v1212
      %v1277 = vunpack.c.l.b16 %v1213
      %v1278 = vunpack.c.l.b16 %v1214
      %v1279 = vunpack.c.l.b16 %v1215
      %v1280 = vunpack.c.l.b16 %v1216
      %v1281 = vunpack.c.l.b16 %v1217
      %v1282 = vunpack.c.l.b16 %v1218
      %v1283 = vunpack.c.l.b16 %v1219
      %v1284 = vunpack.c.l.b16 %v1220
      %v1285 = vunpack.c.l.b16 %v1221
      %v1286 = vpack.c.b16 %v1255, %v1254
      %v1287 = vpack.c.b16 %v1257, %v1256
      %v1288 = vpack.c.b16 %v1259, %v1258
      %v1289 = vpack.c.b16 %v1261, %v1260
      %v1290 = vpack.c.b16 %v1263, %v1262
      %v1291 = vpack.c.b16 %v1265, %v1264
      %v1292 = vpack.c.b16 %v1267, %v1266
      %v1293 = vpack.c.b16 %v1269, %v1268
      %v1294 = vpack.c.b16 %v1271, %v1270
      %v1295 = vpack.c.b16 %v1273, %v1272
      %v1296 = vpack.c.b16 %v1275, %v1274
      %v1297 = vpack.c.b16 %v1277, %v1276
      %v1298 = vpack.c.b16 %v1279, %v1278
      %v1299 = vpack.c.b16 %v1281, %v1280
      %v1300 = vpack.c.b16 %v1283, %v1282
      %v1301 = vpack.c.b16 %v1285, %v1284
      %1302 = vrot.lane.b32.xlu0 %v1286, 12
      %v1303 = vpop.permute.xlu0 %1302
      %1304 = vrot.lane.b32.xlu0 %v1287, 12
      %v1305 = vpop.permute.xlu0 %1304
      %1306 = vrot.lane.b32.xlu0 %v1288, 12
      %v1307 = vpop.permute.xlu0 %1306
      %1308 = vrot.lane.b32.xlu0 %v1289, 12
      %v1309 = vpop.permute.xlu0 %1308
      %1310 = vrot.lane.b32.xlu0 %v1290, 12
      %v1311 = vpop.permute.xlu0 %1310
      %1312 = vrot.lane.b32.xlu0 %v1291, 12
      %v1313 = vpop.permute.xlu0 %1312
      %1314 = vrot.lane.b32.xlu0 %v1292, 12
      %v1315 = vpop.permute.xlu0 %1314
      %1316 = vrot.lane.b32.xlu0 %v1293, 12
      %v1317 = vpop.permute.xlu0 %1316
      %1318 = vrot.lane.b32.xlu0 %v1294, 12
      %v1319 = vpop.permute.xlu0 %1318
      %1320 = vrot.lane.b32.xlu0 %v1295, 12
      %v1321 = vpop.permute.xlu0 %1320
      %1322 = vrot.lane.b32.xlu0 %v1296, 12
      %v1323 = vpop.permute.xlu0 %1322
      %1324 = vrot.lane.b32.xlu0 %v1297, 12
      %v1325 = vpop.permute.xlu0 %1324
      %1326 = vrot.lane.b32.xlu0 %v1298, 12
      %v1327 = vpop.permute.xlu0 %1326
      %1328 = vrot.lane.b32.xlu0 %v1299, 12
      %v1329 = vpop.permute.xlu0 %1328
      %1330 = vrot.lane.b32.xlu0 %v1300, 12
      %v1331 = vpop.permute.xlu0 %1330
      %1332 = vrot.lane.b32.xlu0 %v1301, 12
      %v1333 = vpop.permute.xlu0 %1332
      %vm1350 = vcmask 130144
      %1351 = vst.msk [vmem:[#allocation2] sm:$0xff] %vm1350, %v1303
      %1352 = vst.msk [vmem:[#allocation2 + $0x8] sm:$0xff] %vm1350, %v1305
      %1353 = vst.msk [vmem:[#allocation2 + $0x10] sm:$0xff] %vm1350, %v1307
      %1354 = vst.msk [vmem:[#allocation2 + $0x18] sm:$0xff] %vm1350, %v1309
      %1355 = vst.msk [vmem:[#allocation2 + $0x20] sm:$0xff] %vm1350, %v1311
      %1356 = vst.msk [vmem:[#allocation2 + $0x28] sm:$0xff] %vm1350, %v1313
      %1357 = vst.msk [vmem:[#allocation2 + $0x30] sm:$0xff] %vm1350, %v1315
      %1358 = vst.msk [vmem:[#allocation2 + $0x38] sm:$0xff] %vm1350, %v1317
      %1359 = vst.msk [vmem:[#allocation2 + $0x40] sm:$0xff] %vm1350, %v1319
      %1360 = vst.msk [vmem:[#allocation2 + $0x48] sm:$0xff] %vm1350, %v1321
      %1361 = vst.msk [vmem:[#allocation2 + $0x50] sm:$0xff] %vm1350, %v1323
      %1362 = vst.msk [vmem:[#allocation2 + $0x58] sm:$0xff] %vm1350, %v1325
      %1363 = vst.msk [vmem:[#allocation2 + $0x60] sm:$0xff] %vm1350, %v1327
      %1364 = vst.msk [vmem:[#allocation2 + $0x68] sm:$0xff] %vm1350, %v1329
      %1365 = vst.msk [vmem:[#allocation2 + $0x70] sm:$0xff] %vm1350, %v1331
      %1366 = vst.msk [vmem:[#allocation2 + $0x78] sm:$0xff] %vm1350, %v1333
      %v1367 = vld [vmem:[%s1189] sm:$0xf]
      %v1368 = vld [vmem:[%s1189 + $0x4] sm:$0xf]
      %v1369 = vld [vmem:[%s1189 + $0x8] sm:$0x1]
      %v1370 = vld [vmem:[%s1189 + $0xc] sm:$0xf]
      %v1371 = vld [vmem:[%s1189 + $0x10] sm:$0xf]
      %v1372 = vld [vmem:[%s1189 + $0x14] sm:$0x1]
      %v1373 = vld [vmem:[%s1189 + $0x18] sm:$0xf]
      %v1374 = vld [vmem:[%s1189 + $0x1c] sm:$0xf]
      %v1375 = vld [vmem:[%s1189 + $0x20] sm:$0x1]
      %v1376 = vld [vmem:[%s1189 + $0x24] sm:$0xf]
      %v1377 = vld [vmem:[%s1189 + $0x28] sm:$0xf]
      %v1378 = vld [vmem:[%s1189 + $0x2c] sm:$0x1]
      %v1379 = vld [vmem:[%s1189 + $0x30] sm:$0xf]
      %v1380 = vld [vmem:[%s1189 + $0x34] sm:$0xf]
      %v1381 = vld [vmem:[%s1189 + $0x38] sm:$0x1]
      %v1382 = vld [vmem:[%s1189 + $0x3c] sm:$0xf]
      %v1383 = vld [vmem:[%s1189 + $0x40] sm:$0xf]
      %v1384 = vld [vmem:[%s1189 + $0x44] sm:$0x1]
      %v1385 = vld [vmem:[%s1189 + $0x48] sm:$0xf]
      %v1386 = vld [vmem:[%s1189 + $0x4c] sm:$0xf]
      %v1387 = vld [vmem:[%s1189 + $0x50] sm:$0x1]
      %v1388 = vld [vmem:[%s1189 + $0x54] sm:$0xf]
      %v1389 = vld [vmem:[%s1189 + $0x58] sm:$0xf]
      %v1390 = vld [vmem:[%s1189 + $0x5c] sm:$0x1]
      %v1391 = vld [vmem:[%s1189 + $0x60] sm:$0xf]
      %v1392 = vld [vmem:[%s1189 + $0x64] sm:$0xf]
      %v1393 = vld [vmem:[%s1189 + $0x68] sm:$0x1]
      %v1394 = vld [vmem:[%s1189 + $0x6c] sm:$0xf]
      %v1395 = vld [vmem:[%s1189 + $0x70] sm:$0xf]
      %v1396 = vld [vmem:[%s1189 + $0x74] sm:$0x1]
      %v1397 = vld [vmem:[%s1189 + $0x78] sm:$0xf]
      %v1398 = vld [vmem:[%s1189 + $0x7c] sm:$0xf]
      %v1399 = vld [vmem:[%s1189 + $0x80] sm:$0x1]
      %v1400 = vld [vmem:[%s1189 + $0x84] sm:$0xf]
      %v1401 = vld [vmem:[%s1189 + $0x88] sm:$0xf]
      %v1402 = vld [vmem:[%s1189 + $0x8c] sm:$0x1]
      %v1403 = vld [vmem:[%s1189 + $0x90] sm:$0xf]
      %v1404 = vld [vmem:[%s1189 + $0x94] sm:$0xf]
      %v1405 = vld [vmem:[%s1189 + $0x98] sm:$0x1]
      %v1406 = vld [vmem:[%s1189 + $0x9c] sm:$0xf]
      %v1407 = vld [vmem:[%s1189 + $0xa0] sm:$0xf]
      %v1408 = vld [vmem:[%s1189 + $0xa4] sm:$0x1]
      %v1409 = vld [vmem:[%s1189 + $0xa8] sm:$0xf]
      %v1410 = vld [vmem:[%s1189 + $0xac] sm:$0xf]
      %v1411 = vld [vmem:[%s1189 + $0xb0] sm:$0x1]
      %v1412 = vld [vmem:[%s1189 + $0xb4] sm:$0xf]
      %v1413 = vld [vmem:[%s1189 + $0xb8] sm:$0xf]
      %v1414 = vld [vmem:[%s1189 + $0xbc] sm:$0x1]
      %v1416 = vshrl.u32 %v1367, 16
      %v1418 = vrot.slane %v1416, 4
      %v1419 = vshll.u32 %v1367, 16
      %v1421 = vrot.slane %v1419, 5
      %v1422 = vor.u32 %v1418, %v1421
      %v1423 = vrot.slane %v1422, 4
      %v1425 = vshll.u32 %v1368, 16
      %v1427 = vrot.slane %v1425, 5
      %v1428 = vsel %vm367, %v1423, %v1427
      %v1429 = vshrl.u32 %v1368, 16
      %v1431 = vrot.slane %v1429, 4
      %v1432 = vor.u32 %v1431, %v1427
      %v1433 = vrot.slane %v1432, 4
      %v1435 = vshll.u32 %v1369, 16
      %v1437 = vrot.slane %v1435, 5
      %v1438 = vsel %vm367, %v1433, %v1437
      %v1440 = vshrl.u32 %v1370, 16
      %v1442 = vrot.slane %v1440, 4
      %v1443 = vshll.u32 %v1370, 16
      %v1445 = vrot.slane %v1443, 5
      %v1446 = vor.u32 %v1442, %v1445
      %v1447 = vrot.slane %v1446, 4
      %v1449 = vshll.u32 %v1371, 16
      %v1451 = vrot.slane %v1449, 5
      %v1452 = vsel %vm367, %v1447, %v1451
      %v1453 = vshrl.u32 %v1371, 16
      %v1455 = vrot.slane %v1453, 4
      %v1456 = vor.u32 %v1455, %v1451
      %v1457 = vrot.slane %v1456, 4
      %v1459 = vshll.u32 %v1372, 16
      %v1461 = vrot.slane %v1459, 5
      %v1462 = vsel %vm367, %v1457, %v1461
      %v1464 = vshrl.u32 %v1373, 16
      %v1466 = vrot.slane %v1464, 4
      %v1467 = vshll.u32 %v1373, 16
      %v1469 = vrot.slane %v1467, 5
      %v1470 = vor.u32 %v1466, %v1469
      %v1471 = vrot.slane %v1470, 4
      %v1473 = vshll.u32 %v1374, 16
      %v1475 = vrot.slane %v1473, 5
      %v1476 = vsel %vm367, %v1471, %v1475
      %v1477 = vshrl.u32 %v1374, 16
      %v1479 = vrot.slane %v1477, 4
      %v1480 = vor.u32 %v1479, %v1475
      %v1481 = vrot.slane %v1480, 4
      %v1483 = vshll.u32 %v1375, 16
      %v1485 = vrot.slane %v1483, 5
      %v1486 = vsel %vm367, %v1481, %v1485
      %v1488 = vshrl.u32 %v1376, 16
      %v1490 = vrot.slane %v1488, 4
      %v1491 = vshll.u32 %v1376, 16
      %v1493 = vrot.slane %v1491, 5
      %v1494 = vor.u32 %v1490, %v1493
      %v1495 = vrot.slane %v1494, 4
      %v1497 = vshll.u32 %v1377, 16
      %v1499 = vrot.slane %v1497, 5
      %v1500 = vsel %vm367, %v1495, %v1499
      %v1501 = vshrl.u32 %v1377, 16
      %v1503 = vrot.slane %v1501, 4
      %v1504 = vor.u32 %v1503, %v1499
      %v1505 = vrot.slane %v1504, 4
      %v1507 = vshll.u32 %v1378, 16
      %v1509 = vrot.slane %v1507, 5
      %v1510 = vsel %vm367, %v1505, %v1509
      %v1512 = vshrl.u32 %v1379, 16
      %v1514 = vrot.slane %v1512, 4
      %v1515 = vshll.u32 %v1379, 16
      %v1517 = vrot.slane %v1515, 5
      %v1518 = vor.u32 %v1514, %v1517
      %v1519 = vrot.slane %v1518, 4
      %v1521 = vshll.u32 %v1380, 16
      %v1523 = vrot.slane %v1521, 5
      %v1524 = vsel %vm367, %v1519, %v1523
      %v1525 = vshrl.u32 %v1380, 16
      %v1527 = vrot.slane %v1525, 4
      %v1528 = vor.u32 %v1527, %v1523
      %v1529 = vrot.slane %v1528, 4
      %v1531 = vshll.u32 %v1381, 16
      %v1533 = vrot.slane %v1531, 5
      %v1534 = vsel %vm367, %v1529, %v1533
      %v1536 = vshrl.u32 %v1382, 16
      %v1538 = vrot.slane %v1536, 4
      %v1539 = vshll.u32 %v1382, 16
      %v1541 = vrot.slane %v1539, 5
      %v1542 = vor.u32 %v1538, %v1541
      %v1543 = vrot.slane %v1542, 4
      %v1545 = vshll.u32 %v1383, 16
      %v1547 = vrot.slane %v1545, 5
      %v1548 = vsel %vm367, %v1543, %v1547
      %v1549 = vshrl.u32 %v1383, 16
      %v1551 = vrot.slane %v1549, 4
      %v1552 = vor.u32 %v1551, %v1547
      %v1553 = vrot.slane %v1552, 4
      %v1555 = vshll.u32 %v1384, 16
      %v1557 = vrot.slane %v1555, 5
      %v1558 = vsel %vm367, %v1553, %v1557
      %v1560 = vshrl.u32 %v1385, 16
      %v1562 = vrot.slane %v1560, 4
      %v1563 = vshll.u32 %v1385, 16
      %v1565 = vrot.slane %v1563, 5
      %v1566 = vor.u32 %v1562, %v1565
      %v1567 = vrot.slane %v1566, 4
      %v1569 = vshll.u32 %v1386, 16
      %v1571 = vrot.slane %v1569, 5
      %v1572 = vsel %vm367, %v1567, %v1571
      %v1573 = vshrl.u32 %v1386, 16
      %v1575 = vrot.slane %v1573, 4
      %v1576 = vor.u32 %v1575, %v1571
      %v1577 = vrot.slane %v1576, 4
      %v1579 = vshll.u32 %v1387, 16
      %v1581 = vrot.slane %v1579, 5
      %v1582 = vsel %vm367, %v1577, %v1581
      %v1584 = vshrl.u32 %v1388, 16
      %v1586 = vrot.slane %v1584, 4
      %v1587 = vshll.u32 %v1388, 16
      %v1589 = vrot.slane %v1587, 5
      %v1590 = vor.u32 %v1586, %v1589
      %v1591 = vrot.slane %v1590, 4
      %v1593 = vshll.u32 %v1389, 16
      %v1595 = vrot.slane %v1593, 5
      %v1596 = vsel %vm367, %v1591, %v1595
      %v1597 = vshrl.u32 %v1389, 16
      %v1599 = vrot.slane %v1597, 4
      %v1600 = vor.u32 %v1599, %v1595
      %v1601 = vrot.slane %v1600, 4
      %v1603 = vshll.u32 %v1390, 16
      %v1605 = vrot.slane %v1603, 5
      %v1606 = vsel %vm367, %v1601, %v1605
      %v1608 = vshrl.u32 %v1391, 16
      %v1610 = vrot.slane %v1608, 4
      %v1611 = vshll.u32 %v1391, 16
      %v1613 = vrot.slane %v1611, 5
      %v1614 = vor.u32 %v1610, %v1613
      %v1615 = vrot.slane %v1614, 4
      %v1617 = vshll.u32 %v1392, 16
      %v1619 = vrot.slane %v1617, 5
      %v1620 = vsel %vm367, %v1615, %v1619
      %v1621 = vshrl.u32 %v1392, 16
      %v1623 = vrot.slane %v1621, 4
      %v1624 = vor.u32 %v1623, %v1619
      %v1625 = vrot.slane %v1624, 4
      %v1627 = vshll.u32 %v1393, 16
      %v1629 = vrot.slane %v1627, 5
      %v1630 = vsel %vm367, %v1625, %v1629
      %v1632 = vshrl.u32 %v1394, 16
      %v1634 = vrot.slane %v1632, 4
      %v1635 = vshll.u32 %v1394, 16
      %v1637 = vrot.slane %v1635, 5
      %v1638 = vor.u32 %v1634, %v1637
      %v1639 = vrot.slane %v1638, 4
      %v1641 = vshll.u32 %v1395, 16
      %v1643 = vrot.slane %v1641, 5
      %v1644 = vsel %vm367, %v1639, %v1643
      %v1645 = vshrl.u32 %v1395, 16
      %v1647 = vrot.slane %v1645, 4
      %v1648 = vor.u32 %v1647, %v1643
      %v1649 = vrot.slane %v1648, 4
      %v1651 = vshll.u32 %v1396, 16
      %v1653 = vrot.slane %v1651, 5
      %v1654 = vsel %vm367, %v1649, %v1653
      %v1656 = vshrl.u32 %v1397, 16
      %v1658 = vrot.slane %v1656, 4
      %v1659 = vshll.u32 %v1397, 16
      %v1661 = vrot.slane %v1659, 5
      %v1662 = vor.u32 %v1658, %v1661
      %v1663 = vrot.slane %v1662, 4
      %v1665 = vshll.u32 %v1398, 16
      %v1667 = vrot.slane %v1665, 5
      %v1668 = vsel %vm367, %v1663, %v1667
      %v1669 = vshrl.u32 %v1398, 16
      %v1671 = vrot.slane %v1669, 4
      %v1672 = vor.u32 %v1671, %v1667
      %v1673 = vrot.slane %v1672, 4
      %v1675 = vshll.u32 %v1399, 16
      %v1677 = vrot.slane %v1675, 5
      %v1678 = vsel %vm367, %v1673, %v1677
      %v1680 = vshrl.u32 %v1400, 16
      %v1682 = vrot.slane %v1680, 4
      %v1683 = vshll.u32 %v1400, 16
      %v1685 = vrot.slane %v1683, 5
      %v1686 = vor.u32 %v1682, %v1685
      %v1687 = vrot.slane %v1686, 4
      %v1689 = vshll.u32 %v1401, 16
      %v1691 = vrot.slane %v1689, 5
      %v1692 = vsel %vm367, %v1687, %v1691
      %v1693 = vshrl.u32 %v1401, 16
      %v1695 = vrot.slane %v1693, 4
      %v1696 = vor.u32 %v1695, %v1691
      %v1697 = vrot.slane %v1696, 4
      %v1699 = vshll.u32 %v1402, 16
      %v1701 = vrot.slane %v1699, 5
      %v1702 = vsel %vm367, %v1697, %v1701
      %v1704 = vshrl.u32 %v1403, 16
      %v1706 = vrot.slane %v1704, 4
      %v1707 = vshll.u32 %v1403, 16
      %v1709 = vrot.slane %v1707, 5
      %v1710 = vor.u32 %v1706, %v1709
      %v1711 = vrot.slane %v1710, 4
      %v1713 = vshll.u32 %v1404, 16
      %v1715 = vrot.slane %v1713, 5
      %v1716 = vsel %vm367, %v1711, %v1715
      %v1717 = vshrl.u32 %v1404, 16
      %v1719 = vrot.slane %v1717, 4
      %v1720 = vor.u32 %v1719, %v1715
      %v1721 = vrot.slane %v1720, 4
      %v1723 = vshll.u32 %v1405, 16
      %v1725 = vrot.slane %v1723, 5
      %v1726 = vsel %vm367, %v1721, %v1725
      %v1728 = vshrl.u32 %v1406, 16
      %v1730 = vrot.slane %v1728, 4
      %v1731 = vshll.u32 %v1406, 16
      %v1733 = vrot.slane %v1731, 5
      %v1734 = vor.u32 %v1730, %v1733
      %v1735 = vrot.slane %v1734, 4
      %v1737 = vshll.u32 %v1407, 16
      %v1739 = vrot.slane %v1737, 5
      %v1740 = vsel %vm367, %v1735, %v1739
      %v1741 = vshrl.u32 %v1407, 16
      %v1743 = vrot.slane %v1741, 4
      %v1744 = vor.u32 %v1743, %v1739
      %v1745 = vrot.slane %v1744, 4
      %v1747 = vshll.u32 %v1408, 16
      %v1749 = vrot.slane %v1747, 5
      %v1750 = vsel %vm367, %v1745, %v1749
      %v1752 = vshrl.u32 %v1409, 16
      %v1754 = vrot.slane %v1752, 4
      %v1755 = vshll.u32 %v1409, 16
      %v1757 = vrot.slane %v1755, 5
      %v1758 = vor.u32 %v1754, %v1757
      %v1759 = vrot.slane %v1758, 4
      %v1761 = vshll.u32 %v1410, 16
      %v1763 = vrot.slane %v1761, 5
      %v1764 = vsel %vm367, %v1759, %v1763
      %v1765 = vshrl.u32 %v1410, 16
      %v1767 = vrot.slane %v1765, 4
      %v1768 = vor.u32 %v1767, %v1763
      %v1769 = vrot.slane %v1768, 4
      %v1771 = vshll.u32 %v1411, 16
      %v1773 = vrot.slane %v1771, 5
      %v1774 = vsel %vm367, %v1769, %v1773
      %v1776 = vshrl.u32 %v1412, 16
      %v1778 = vrot.slane %v1776, 4
      %v1779 = vshll.u32 %v1412, 16
      %v1781 = vrot.slane %v1779, 5
      %v1782 = vor.u32 %v1778, %v1781
      %v1783 = vrot.slane %v1782, 4
      %v1785 = vshll.u32 %v1413, 16
      %v1787 = vrot.slane %v1785, 5
      %v1788 = vsel %vm367, %v1783, %v1787
      %v1789 = vshrl.u32 %v1413, 16
      %v1791 = vrot.slane %v1789, 4
      %v1792 = vor.u32 %v1791, %v1787
      %v1793 = vrot.slane %v1792, 4
      %v1795 = vshll.u32 %v1414, 16
      %v1797 = vrot.slane %v1795, 5
      %v1798 = vsel %vm367, %v1793, %v1797
      %v1799 = vunpack.c.l.b16 %v1428
      %v1800 = vunpack.c.l.b16 %v1438
      %v1801 = vunpack.c.l.b16 %v1452
      %v1802 = vunpack.c.l.b16 %v1462
      %v1803 = vunpack.c.l.b16 %v1476
      %v1804 = vunpack.c.l.b16 %v1486
      %v1805 = vunpack.c.l.b16 %v1500
      %v1806 = vunpack.c.l.b16 %v1510
      %v1807 = vunpack.c.l.b16 %v1524
      %v1808 = vunpack.c.l.b16 %v1534
      %v1809 = vunpack.c.l.b16 %v1548
      %v1810 = vunpack.c.l.b16 %v1558
      %v1811 = vunpack.c.l.b16 %v1572
      %v1812 = vunpack.c.l.b16 %v1582
      %v1813 = vunpack.c.l.b16 %v1596
      %v1814 = vunpack.c.l.b16 %v1606
      %v1815 = vunpack.c.l.b16 %v1620
      %v1816 = vunpack.c.l.b16 %v1630
      %v1817 = vunpack.c.l.b16 %v1644
      %v1818 = vunpack.c.l.b16 %v1654
      %v1819 = vunpack.c.l.b16 %v1668
      %v1820 = vunpack.c.l.b16 %v1678
      %v1821 = vunpack.c.l.b16 %v1692
      %v1822 = vunpack.c.l.b16 %v1702
      %v1823 = vunpack.c.l.b16 %v1716
      %v1824 = vunpack.c.l.b16 %v1726
      %v1825 = vunpack.c.l.b16 %v1740
      %v1826 = vunpack.c.l.b16 %v1750
      %v1827 = vunpack.c.l.b16 %v1764
      %v1828 = vunpack.c.l.b16 %v1774
      %v1829 = vunpack.c.l.b16 %v1788
      %v1830 = vunpack.c.l.b16 %v1798
      %v1831 = vpack.c.b16 %v1800, %v1799
      %v1832 = vpack.c.b16 %v1802, %v1801
      %v1833 = vpack.c.b16 %v1804, %v1803
      %v1834 = vpack.c.b16 %v1806, %v1805
      %v1835 = vpack.c.b16 %v1808, %v1807
      %v1836 = vpack.c.b16 %v1810, %v1809
      %v1837 = vpack.c.b16 %v1812, %v1811
      %v1838 = vpack.c.b16 %v1814, %v1813
      %v1839 = vpack.c.b16 %v1816, %v1815
      %v1840 = vpack.c.b16 %v1818, %v1817
      %v1841 = vpack.c.b16 %v1820, %v1819
      %v1842 = vpack.c.b16 %v1822, %v1821
      %v1843 = vpack.c.b16 %v1824, %v1823
      %v1844 = vpack.c.b16 %v1826, %v1825
      %v1845 = vpack.c.b16 %v1828, %v1827
      %v1846 = vpack.c.b16 %v1830, %v1829
      %1847 = vrot.lane.b32.xlu0 %v1831, 16
      %v1848 = vpop.permute.xlu0 %1847
      %1849 = vrot.lane.b32.xlu0 %v1832, 16
      %v1850 = vpop.permute.xlu0 %1849
      %1851 = vrot.lane.b32.xlu0 %v1833, 16
      %v1852 = vpop.permute.xlu0 %1851
      %1853 = vrot.lane.b32.xlu0 %v1834, 16
      %v1854 = vpop.permute.xlu0 %1853
      %1855 = vrot.lane.b32.xlu0 %v1835, 16
      %v1856 = vpop.permute.xlu0 %1855
      %1857 = vrot.lane.b32.xlu0 %v1836, 16
      %v1858 = vpop.permute.xlu0 %1857
      %1859 = vrot.lane.b32.xlu0 %v1837, 16
      %v1860 = vpop.permute.xlu0 %1859
      %1861 = vrot.lane.b32.xlu0 %v1838, 16
      %v1862 = vpop.permute.xlu0 %1861
      %1863 = vrot.lane.b32.xlu0 %v1839, 16
      %v1864 = vpop.permute.xlu0 %1863
      %1865 = vrot.lane.b32.xlu0 %v1840, 16
      %v1866 = vpop.permute.xlu0 %1865
      %1867 = vrot.lane.b32.xlu0 %v1841, 16
      %v1868 = vpop.permute.xlu0 %1867
      %1869 = vrot.lane.b32.xlu0 %v1842, 16
      %v1870 = vpop.permute.xlu0 %1869
      %1871 = vrot.lane.b32.xlu0 %v1843, 16
      %v1872 = vpop.permute.xlu0 %1871
      %1873 = vrot.lane.b32.xlu0 %v1844, 16
      %v1874 = vpop.permute.xlu0 %1873
      %1875 = vrot.lane.b32.xlu0 %v1845, 16
      %v1876 = vpop.permute.xlu0 %1875
      %1877 = vrot.lane.b32.xlu0 %v1846, 16
      %v1878 = vpop.permute.xlu0 %1877
      %vm1895 = vcmask 162944
      %1896 = vst.msk [vmem:[#allocation2] sm:$0xff] %vm1895, %v1848
      %1897 = vst.msk [vmem:[#allocation2 + $0x8] sm:$0xff] %vm1895, %v1850
      %1898 = vst.msk [vmem:[#allocation2 + $0x10] sm:$0xff] %vm1895, %v1852
      %1899 = vst.msk [vmem:[#allocation2 + $0x18] sm:$0xff] %vm1895, %v1854
      %1900 = vst.msk [vmem:[#allocation2 + $0x20] sm:$0xff] %vm1895, %v1856
      %1901 = vst.msk [vmem:[#allocation2 + $0x28] sm:$0xff] %vm1895, %v1858
      %1902 = vst.msk [vmem:[#allocation2 + $0x30] sm:$0xff] %vm1895, %v1860
      %1903 = vst.msk [vmem:[#allocation2 + $0x38] sm:$0xff] %vm1895, %v1862
      %1904 = vst.msk [vmem:[#allocation2 + $0x40] sm:$0xff] %vm1895, %v1864
      %1905 = vst.msk [vmem:[#allocation2 + $0x48] sm:$0xff] %vm1895, %v1866
      %1906 = vst.msk [vmem:[#allocation2 + $0x50] sm:$0xff] %vm1895, %v1868
      %1907 = vst.msk [vmem:[#allocation2 + $0x58] sm:$0xff] %vm1895, %v1870
      %1908 = vst.msk [vmem:[#allocation2 + $0x60] sm:$0xff] %vm1895, %v1872
      %1909 = vst.msk [vmem:[#allocation2 + $0x68] sm:$0xff] %vm1895, %v1874
      %1910 = vst.msk [vmem:[#allocation2 + $0x70] sm:$0xff] %vm1895, %v1876
      %1911 = vst.msk [vmem:[#allocation2 + $0x78] sm:$0xff] %vm1895, %v1878
      %v1912 = vld [vmem:[%s1189] sm:$0xe]
      %v1913 = vld [vmem:[%s1189 + $0x4] sm:$0xf]
      %v1914 = vld [vmem:[%s1189 + $0x8] sm:$0x1]
      %v1915 = vld [vmem:[%s1189 + $0xc] sm:$0xe]
      %v1916 = vld [vmem:[%s1189 + $0x10] sm:$0xf]
      %v1917 = vld [vmem:[%s1189 + $0x14] sm:$0x1]
      %v1918 = vld [vmem:[%s1189 + $0x18] sm:$0xe]
      %v1919 = vld [vmem:[%s1189 + $0x1c] sm:$0xf]
      %v1920 = vld [vmem:[%s1189 + $0x20] sm:$0x1]
      %v1921 = vld [vmem:[%s1189 + $0x24] sm:$0xe]
      %v1922 = vld [vmem:[%s1189 + $0x28] sm:$0xf]
      %v1923 = vld [vmem:[%s1189 + $0x2c] sm:$0x1]
      %v1924 = vld [vmem:[%s1189 + $0x30] sm:$0xe]
      %v1925 = vld [vmem:[%s1189 + $0x34] sm:$0xf]
      %v1926 = vld [vmem:[%s1189 + $0x38] sm:$0x1]
      %v1927 = vld [vmem:[%s1189 + $0x3c] sm:$0xe]
      %v1928 = vld [vmem:[%s1189 + $0x40] sm:$0xf]
      %v1929 = vld [vmem:[%s1189 + $0x44] sm:$0x1]
      %v1930 = vld [vmem:[%s1189 + $0x48] sm:$0xe]
      %v1931 = vld [vmem:[%s1189 + $0x4c] sm:$0xf]
      %v1932 = vld [vmem:[%s1189 + $0x50] sm:$0x1]
      %v1933 = vld [vmem:[%s1189 + $0x54] sm:$0xe]
      %v1934 = vld [vmem:[%s1189 + $0x58] sm:$0xf]
      %v1935 = vld [vmem:[%s1189 + $0x5c] sm:$0x1]
      %v1936 = vld [vmem:[%s1189 + $0x60] sm:$0xe]
      %v1937 = vld [vmem:[%s1189 + $0x64] sm:$0xf]
      %v1938 = vld [vmem:[%s1189 + $0x68] sm:$0x1]
      %v1939 = vld [vmem:[%s1189 + $0x6c] sm:$0xe]
      %v1940 = vld [vmem:[%s1189 + $0x70] sm:$0xf]
      %v1941 = vld [vmem:[%s1189 + $0x74] sm:$0x1]
      %v1942 = vld [vmem:[%s1189 + $0x78] sm:$0xe]
      %v1943 = vld [vmem:[%s1189 + $0x7c] sm:$0xf]
      %v1944 = vld [vmem:[%s1189 + $0x80] sm:$0x1]
      %v1945 = vld [vmem:[%s1189 + $0x84] sm:$0xe]
      %v1946 = vld [vmem:[%s1189 + $0x88] sm:$0xf]
      %v1947 = vld [vmem:[%s1189 + $0x8c] sm:$0x1]
      %v1948 = vld [vmem:[%s1189 + $0x90] sm:$0xe]
      %v1949 = vld [vmem:[%s1189 + $0x94] sm:$0xf]
      %v1950 = vld [vmem:[%s1189 + $0x98] sm:$0x1]
      %v1951 = vld [vmem:[%s1189 + $0x9c] sm:$0xe]
      %v1952 = vld [vmem:[%s1189 + $0xa0] sm:$0xf]
      %v1953 = vld [vmem:[%s1189 + $0xa4] sm:$0x1]
      %v1954 = vld [vmem:[%s1189 + $0xa8] sm:$0xe]
      %v1955 = vld [vmem:[%s1189 + $0xac] sm:$0xf]
      %v1956 = vld [vmem:[%s1189 + $0xb0] sm:$0x1]
      %v1957 = vld [vmem:[%s1189 + $0xb4] sm:$0xe]
      %v1958 = vld [vmem:[%s1189 + $0xb8] sm:$0xf]
      %v1959 = vld [vmem:[%s1189 + $0xbc] sm:$0x1]
      %v2008 = vrot.slane %v1912, 5
      %v2009 = vrot.slane %v2008, 4
      %v2010 = vrot.slane %v1913, 5
      %v2011 = vsel %vm963, %v2009, %v2010
      %v2012 = vrot.slane %v2010, 4
      %v2013 = vrot.slane %v1914, 5
      %v2014 = vsel %vm963, %v2012, %v2013
      %v2015 = vrot.slane %v1915, 5
      %v2016 = vrot.slane %v2015, 4
      %v2017 = vrot.slane %v1916, 5
      %v2018 = vsel %vm963, %v2016, %v2017
      %v2019 = vrot.slane %v2017, 4
      %v2020 = vrot.slane %v1917, 5
      %v2021 = vsel %vm963, %v2019, %v2020
      %v2022 = vrot.slane %v1918, 5
      %v2023 = vrot.slane %v2022, 4
      %v2024 = vrot.slane %v1919, 5
      %v2025 = vsel %vm963, %v2023, %v2024
      %v2026 = vrot.slane %v2024, 4
      %v2027 = vrot.slane %v1920, 5
      %v2028 = vsel %vm963, %v2026, %v2027
      %v2029 = vrot.slane %v1921, 5
      %v2030 = vrot.slane %v2029, 4
      %v2031 = vrot.slane %v1922, 5
      %v2032 = vsel %vm963, %v2030, %v2031
      %v2033 = vrot.slane %v2031, 4
      %v2034 = vrot.slane %v1923, 5
      %v2035 = vsel %vm963, %v2033, %v2034
      %v2036 = vrot.slane %v1924, 5
      %v2037 = vrot.slane %v2036, 4
      %v2038 = vrot.slane %v1925, 5
      %v2039 = vsel %vm963, %v2037, %v2038
      %v2040 = vrot.slane %v2038, 4
      %v2041 = vrot.slane %v1926, 5
      %v2042 = vsel %vm963, %v2040, %v2041
      %v2043 = vrot.slane %v1927, 5
      %v2044 = vrot.slane %v2043, 4
      %v2045 = vrot.slane %v1928, 5
      %v2046 = vsel %vm963, %v2044, %v2045
      %v2047 = vrot.slane %v2045, 4
      %v2048 = vrot.slane %v1929, 5
      %v2049 = vsel %vm963, %v2047, %v2048
      %v2050 = vrot.slane %v1930, 5
      %v2051 = vrot.slane %v2050, 4
      %v2052 = vrot.slane %v1931, 5
      %v2053 = vsel %vm963, %v2051, %v2052
      %v2054 = vrot.slane %v2052, 4
      %v2055 = vrot.slane %v1932, 5
      %v2056 = vsel %vm963, %v2054, %v2055
      %v2057 = vrot.slane %v1933, 5
      %v2058 = vrot.slane %v2057, 4
      %v2059 = vrot.slane %v1934, 5
      %v2060 = vsel %vm963, %v2058, %v2059
      %v2061 = vrot.slane %v2059, 4
      %v2062 = vrot.slane %v1935, 5
      %v2063 = vsel %vm963, %v2061, %v2062
      %v2064 = vrot.slane %v1936, 5
      %v2065 = vrot.slane %v2064, 4
      %v2066 = vrot.slane %v1937, 5
      %v2067 = vsel %vm963, %v2065, %v2066
      %v2068 = vrot.slane %v2066, 4
      %v2069 = vrot.slane %v1938, 5
      %v2070 = vsel %vm963, %v2068, %v2069
      %v2071 = vrot.slane %v1939, 5
      %v2072 = vrot.slane %v2071, 4
      %v2073 = vrot.slane %v1940, 5
      %v2074 = vsel %vm963, %v2072, %v2073
      %v2075 = vrot.slane %v2073, 4
      %v2076 = vrot.slane %v1941, 5
      %v2077 = vsel %vm963, %v2075, %v2076
      %v2078 = vrot.slane %v1942, 5
      %v2079 = vrot.slane %v2078, 4
      %v2080 = vrot.slane %v1943, 5
      %v2081 = vsel %vm963, %v2079, %v2080
      %v2082 = vrot.slane %v2080, 4
      %v2083 = vrot.slane %v1944, 5
      %v2084 = vsel %vm963, %v2082, %v2083
      %v2085 = vrot.slane %v1945, 5
      %v2086 = vrot.slane %v2085, 4
      %v2087 = vrot.slane %v1946, 5
      %v2088 = vsel %vm963, %v2086, %v2087
      %v2089 = vrot.slane %v2087, 4
      %v2090 = vrot.slane %v1947, 5
      %v2091 = vsel %vm963, %v2089, %v2090
      %v2092 = vrot.slane %v1948, 5
      %v2093 = vrot.slane %v2092, 4
      %v2094 = vrot.slane %v1949, 5
      %v2095 = vsel %vm963, %v2093, %v2094
      %v2096 = vrot.slane %v2094, 4
      %v2097 = vrot.slane %v1950, 5
      %v2098 = vsel %vm963, %v2096, %v2097
      %v2099 = vrot.slane %v1951, 5
      %v2100 = vrot.slane %v2099, 4
      %v2101 = vrot.slane %v1952, 5
      %v2102 = vsel %vm963, %v2100, %v2101
      %v2103 = vrot.slane %v2101, 4
      %v2104 = vrot.slane %v1953, 5
      %v2105 = vsel %vm963, %v2103, %v2104
      %v2106 = vrot.slane %v1954, 5
      %v2107 = vrot.slane %v2106, 4
      %v2108 = vrot.slane %v1955, 5
      %v2109 = vsel %vm963, %v2107, %v2108
      %v2110 = vrot.slane %v2108, 4
      %v2111 = vrot.slane %v1956, 5
      %v2112 = vsel %vm963, %v2110, %v2111
      %v2113 = vrot.slane %v1957, 5
      %v2114 = vrot.slane %v2113, 4
      %v2115 = vrot.slane %v1958, 5
      %v2116 = vsel %vm963, %v2114, %v2115
      %v2117 = vrot.slane %v2115, 4
      %v2118 = vrot.slane %v1959, 5
      %v2119 = vsel %vm963, %v2117, %v2118
      %v2120 = vunpack.c.l.b16 %v2011
      %v2121 = vunpack.c.l.b16 %v2014
      %v2122 = vunpack.c.l.b16 %v2018
      %v2123 = vunpack.c.l.b16 %v2021
      %v2124 = vunpack.c.l.b16 %v2025
      %v2125 = vunpack.c.l.b16 %v2028
      %v2126 = vunpack.c.l.b16 %v2032
      %v2127 = vunpack.c.l.b16 %v2035
      %v2128 = vunpack.c.l.b16 %v2039
      %v2129 = vunpack.c.l.b16 %v2042
      %v2130 = vunpack.c.l.b16 %v2046
      %v2131 = vunpack.c.l.b16 %v2049
      %v2132 = vunpack.c.l.b16 %v2053
      %v2133 = vunpack.c.l.b16 %v2056
      %v2134 = vunpack.c.l.b16 %v2060
      %v2135 = vunpack.c.l.b16 %v2063
      %v2136 = vunpack.c.l.b16 %v2067
      %v2137 = vunpack.c.l.b16 %v2070
      %v2138 = vunpack.c.l.b16 %v2074
      %v2139 = vunpack.c.l.b16 %v2077
      %v2140 = vunpack.c.l.b16 %v2081
      %v2141 = vunpack.c.l.b16 %v2084
      %v2142 = vunpack.c.l.b16 %v2088
      %v2143 = vunpack.c.l.b16 %v2091
      %v2144 = vunpack.c.l.b16 %v2095
      %v2145 = vunpack.c.l.b16 %v2098
      %v2146 = vunpack.c.l.b16 %v2102
      %v2147 = vunpack.c.l.b16 %v2105
      %v2148 = vunpack.c.l.b16 %v2109
      %v2149 = vunpack.c.l.b16 %v2112
      %v2150 = vunpack.c.l.b16 %v2116
      %v2151 = vunpack.c.l.b16 %v2119
      %v2152 = vpack.c.b16 %v2121, %v2120
      %v2153 = vpack.c.b16 %v2123, %v2122
      %v2154 = vpack.c.b16 %v2125, %v2124
      %v2155 = vpack.c.b16 %v2127, %v2126
      %v2156 = vpack.c.b16 %v2129, %v2128
      %v2157 = vpack.c.b16 %v2131, %v2130
      %v2158 = vpack.c.b16 %v2133, %v2132
      %v2159 = vpack.c.b16 %v2135, %v2134
      %v2160 = vpack.c.b16 %v2137, %v2136
      %v2161 = vpack.c.b16 %v2139, %v2138
      %v2162 = vpack.c.b16 %v2141, %v2140
      %v2163 = vpack.c.b16 %v2143, %v2142
      %v2164 = vpack.c.b16 %v2145, %v2144
      %v2165 = vpack.c.b16 %v2147, %v2146
      %v2166 = vpack.c.b16 %v2149, %v2148
      %v2167 = vpack.c.b16 %v2151, %v2150
      %2168 = vrot.lane.b32.xlu0 %v2152, 20
      %v2169 = vpop.permute.xlu0 %2168
      %2170 = vrot.lane.b32.xlu0 %v2153, 20
      %v2171 = vpop.permute.xlu0 %2170
      %2172 = vrot.lane.b32.xlu0 %v2154, 20
      %v2173 = vpop.permute.xlu0 %2172
      %2174 = vrot.lane.b32.xlu0 %v2155, 20
      %v2175 = vpop.permute.xlu0 %2174
      %2176 = vrot.lane.b32.xlu0 %v2156, 20
      %v2177 = vpop.permute.xlu0 %2176
      %2178 = vrot.lane.b32.xlu0 %v2157, 20
      %v2179 = vpop.permute.xlu0 %2178
      %2180 = vrot.lane.b32.xlu0 %v2158, 20
      %v2181 = vpop.permute.xlu0 %2180
      %2182 = vrot.lane.b32.xlu0 %v2159, 20
      %v2183 = vpop.permute.xlu0 %2182
      %2184 = vrot.lane.b32.xlu0 %v2160, 20
      %v2185 = vpop.permute.xlu0 %2184
      %2186 = vrot.lane.b32.xlu0 %v2161, 20
      %v2187 = vpop.permute.xlu0 %2186
      %2188 = vrot.lane.b32.xlu0 %v2162, 20
      %v2189 = vpop.permute.xlu0 %2188
      %2190 = vrot.lane.b32.xlu0 %v2163, 20
      %v2191 = vpop.permute.xlu0 %2190
      %2192 = vrot.lane.b32.xlu0 %v2164, 20
      %v2193 = vpop.permute.xlu0 %2192
      %2194 = vrot.lane.b32.xlu0 %v2165, 20
      %v2195 = vpop.permute.xlu0 %2194
      %2196 = vrot.lane.b32.xlu0 %v2166, 20
      %v2197 = vpop.permute.xlu0 %2196
      %2198 = vrot.lane.b32.xlu0 %v2167, 20
      %v2199 = vpop.permute.xlu0 %2198
      %vm2216 = vcmask 195744
      %2217 = vst.msk [vmem:[#allocation2] sm:$0xff] %vm2216, %v2169
      %2218 = vst.msk [vmem:[#allocation2 + $0x8] sm:$0xff] %vm2216, %v2171
      %2219 = vst.msk [vmem:[#allocation2 + $0x10] sm:$0xff] %vm2216, %v2173
      %2220 = vst.msk [vmem:[#allocation2 + $0x18] sm:$0xff] %vm2216, %v2175
      %2221 = vst.msk [vmem:[#allocation2 + $0x20] sm:$0xff] %vm2216, %v2177
      %2222 = vst.msk [vmem:[#allocation2 + $0x28] sm:$0xff] %vm2216, %v2179
      %2223 = vst.msk [vmem:[#allocation2 + $0x30] sm:$0xff] %vm2216, %v2181
      %2224 = vst.msk [vmem:[#allocation2 + $0x38] sm:$0xff] %vm2216, %v2183
      %2225 = vst.msk [vmem:[#allocation2 + $0x40] sm:$0xff] %vm2216, %v2185
      %2226 = vst.msk [vmem:[#allocation2 + $0x48] sm:$0xff] %vm2216, %v2187
      %2227 = vst.msk [vmem:[#allocation2 + $0x50] sm:$0xff] %vm2216, %v2189
      %2228 = vst.msk [vmem:[#allocation2 + $0x58] sm:$0xff] %vm2216, %v2191
      %2229 = vst.msk [vmem:[#allocation2 + $0x60] sm:$0xff] %vm2216, %v2193
      %2230 = vst.msk [vmem:[#allocation2 + $0x68] sm:$0xff] %vm2216, %v2195
      %2231 = vst.msk [vmem:[#allocation2 + $0x70] sm:$0xff] %vm2216, %v2197
      %2232 = vst.msk [vmem:[#allocation2 + $0x78] sm:$0xff] %vm2216, %v2199
      %s2233 = scalar_lea.vmem %s165, 24
      %v2234 = vld [vmem:[%s2233] sm:$0xf]
      %v2235 = vld [vmem:[%s2233 + $0x4] sm:$0xf]
      %v2236 = vld [vmem:[%s2233 + $0xc] sm:$0xf]
      %v2237 = vld [vmem:[%s2233 + $0x10] sm:$0xf]
      %v2238 = vld [vmem:[%s2233 + $0x18] sm:$0xf]
      %v2239 = vld [vmem:[%s2233 + $0x1c] sm:$0xf]
      %v2240 = vld [vmem:[%s2233 + $0x24] sm:$0xf]
      %v2241 = vld [vmem:[%s2233 + $0x28] sm:$0xf]
      %v2242 = vld [vmem:[%s2233 + $0x30] sm:$0xf]
      %v2243 = vld [vmem:[%s2233 + $0x34] sm:$0xf]
      %v2244 = vld [vmem:[%s2233 + $0x3c] sm:$0xf]
      %v2245 = vld [vmem:[%s2233 + $0x40] sm:$0xf]
      %v2246 = vld [vmem:[%s2233 + $0x48] sm:$0xf]
      %v2247 = vld [vmem:[%s2233 + $0x4c] sm:$0xf]
      %v2248 = vld [vmem:[%s2233 + $0x54] sm:$0xf]
      %v2249 = vld [vmem:[%s2233 + $0x58] sm:$0xf]
      %v2250 = vld [vmem:[%s2233 + $0x60] sm:$0xf]
      %v2251 = vld [vmem:[%s2233 + $0x64] sm:$0xf]
      %v2252 = vld [vmem:[%s2233 + $0x6c] sm:$0xf]
      %v2253 = vld [vmem:[%s2233 + $0x70] sm:$0xf]
      %v2254 = vld [vmem:[%s2233 + $0x78] sm:$0xf]
      %v2255 = vld [vmem:[%s2233 + $0x7c] sm:$0xf]
      %v2256 = vld [vmem:[%s2233 + $0x84] sm:$0xf]
      %v2257 = vld [vmem:[%s2233 + $0x88] sm:$0xf]
      %v2258 = vld [vmem:[%s2233 + $0x90] sm:$0xf]
      %v2259 = vld [vmem:[%s2233 + $0x94] sm:$0xf]
      %v2260 = vld [vmem:[%s2233 + $0x9c] sm:$0xf]
      %v2261 = vld [vmem:[%s2233 + $0xa0] sm:$0xf]
      %v2262 = vld [vmem:[%s2233 + $0xa8] sm:$0xf]
      %v2263 = vld [vmem:[%s2233 + $0xac] sm:$0xf]
      %v2264 = vld [vmem:[%s2233 + $0xb4] sm:$0xf]
      %v2265 = vld [vmem:[%s2233 + $0xb8] sm:$0xf]
      %v2298 = vunpack.c.l.b16 %v2234
      %v2299 = vunpack.c.l.b16 %v2235
      %v2300 = vunpack.c.l.b16 %v2236
      %v2301 = vunpack.c.l.b16 %v2237
      %v2302 = vunpack.c.l.b16 %v2238
      %v2303 = vunpack.c.l.b16 %v2239
      %v2304 = vunpack.c.l.b16 %v2240
      %v2305 = vunpack.c.l.b16 %v2241
      %v2306 = vunpack.c.l.b16 %v2242
      %v2307 = vunpack.c.l.b16 %v2243
      %v2308 = vunpack.c.l.b16 %v2244
      %v2309 = vunpack.c.l.b16 %v2245
      %v2310 = vunpack.c.l.b16 %v2246
      %v2311 = vunpack.c.l.b16 %v2247
      %v2312 = vunpack.c.l.b16 %v2248
      %v2313 = vunpack.c.l.b16 %v2249
      %v2314 = vunpack.c.l.b16 %v2250
      %v2315 = vunpack.c.l.b16 %v2251
      %v2316 = vunpack.c.l.b16 %v2252
      %v2317 = vunpack.c.l.b16 %v2253
      %v2318 = vunpack.c.l.b16 %v2254
      %v2319 = vunpack.c.l.b16 %v2255
      %v2320 = vunpack.c.l.b16 %v2256
      %v2321 = vunpack.c.l.b16 %v2257
      %v2322 = vunpack.c.l.b16 %v2258
      %v2323 = vunpack.c.l.b16 %v2259
      %v2324 = vunpack.c.l.b16 %v2260
      %v2325 = vunpack.c.l.b16 %v2261
      %v2326 = vunpack.c.l.b16 %v2262
      %v2327 = vunpack.c.l.b16 %v2263
      %v2328 = vunpack.c.l.b16 %v2264
      %v2329 = vunpack.c.l.b16 %v2265
      %v2330 = vpack.c.b16 %v2299, %v2298
      %v2331 = vpack.c.b16 %v2301, %v2300
      %v2332 = vpack.c.b16 %v2303, %v2302
      %v2333 = vpack.c.b16 %v2305, %v2304
      %v2334 = vpack.c.b16 %v2307, %v2306
      %v2335 = vpack.c.b16 %v2309, %v2308
      %v2336 = vpack.c.b16 %v2311, %v2310
      %v2337 = vpack.c.b16 %v2313, %v2312
      %v2338 = vpack.c.b16 %v2315, %v2314
      %v2339 = vpack.c.b16 %v2317, %v2316
      %v2340 = vpack.c.b16 %v2319, %v2318
      %v2341 = vpack.c.b16 %v2321, %v2320
      %v2342 = vpack.c.b16 %v2323, %v2322
      %v2343 = vpack.c.b16 %v2325, %v2324
      %v2344 = vpack.c.b16 %v2327, %v2326
      %v2345 = vpack.c.b16 %v2329, %v2328
      %2346 = vrot.lane.b32.xlu0 %v2330, 24
      %v2347 = vpop.permute.xlu0 %2346
      %2348 = vrot.lane.b32.xlu0 %v2331, 24
      %v2349 = vpop.permute.xlu0 %2348
      %2350 = vrot.lane.b32.xlu0 %v2332, 24
      %v2351 = vpop.permute.xlu0 %2350
      %2352 = vrot.lane.b32.xlu0 %v2333, 24
      %v2353 = vpop.permute.xlu0 %2352
      %2354 = vrot.lane.b32.xlu0 %v2334, 24
      %v2355 = vpop.permute.xlu0 %2354
      %2356 = vrot.lane.b32.xlu0 %v2335, 24
      %v2357 = vpop.permute.xlu0 %2356
      %2358 = vrot.lane.b32.xlu0 %v2336, 24
      %v2359 = vpop.permute.xlu0 %2358
      %2360 = vrot.lane.b32.xlu0 %v2337, 24
      %v2361 = vpop.permute.xlu0 %2360
      %2362 = vrot.lane.b32.xlu0 %v2338, 24
      %v2363 = vpop.permute.xlu0 %2362
      %2364 = vrot.lane.b32.xlu0 %v2339, 24
      %v2365 = vpop.permute.xlu0 %2364
      %2366 = vrot.lane.b32.xlu0 %v2340, 24
      %v2367 = vpop.permute.xlu0 %2366
      %2368 = vrot.lane.b32.xlu0 %v2341, 24
      %v2369 = vpop.permute.xlu0 %2368
      %2370 = vrot.lane.b32.xlu0 %v2342, 24
      %v2371 = vpop.permute.xlu0 %2370
      %2372 = vrot.lane.b32.xlu0 %v2343, 24
      %v2373 = vpop.permute.xlu0 %2372
      %2374 = vrot.lane.b32.xlu0 %v2344, 24
      %v2375 = vpop.permute.xlu0 %2374
      %2376 = vrot.lane.b32.xlu0 %v2345, 24
      %v2377 = vpop.permute.xlu0 %2376
      %vm2394 = vcmask 228544
      %2395 = vst.msk [vmem:[#allocation2] sm:$0xff] %vm2394, %v2347
      %2396 = vst.msk [vmem:[#allocation2 + $0x8] sm:$0xff] %vm2394, %v2349
      %2397 = vst.msk [vmem:[#allocation2 + $0x10] sm:$0xff] %vm2394, %v2351
      %2398 = vst.msk [vmem:[#allocation2 + $0x18] sm:$0xff] %vm2394, %v2353
      %2399 = vst.msk [vmem:[#allocation2 + $0x20] sm:$0xff] %vm2394, %v2355
      %2400 = vst.msk [vmem:[#allocation2 + $0x28] sm:$0xff] %vm2394, %v2357
      %2401 = vst.msk [vmem:[#allocation2 + $0x30] sm:$0xff] %vm2394, %v2359
      %2402 = vst.msk [vmem:[#allocation2 + $0x38] sm:$0xff] %vm2394, %v2361
      %2403 = vst.msk [vmem:[#allocation2 + $0x40] sm:$0xff] %vm2394, %v2363
      %2404 = vst.msk [vmem:[#allocation2 + $0x48] sm:$0xff] %vm2394, %v2365
      %2405 = vst.msk [vmem:[#allocation2 + $0x50] sm:$0xff] %vm2394, %v2367
      %2406 = vst.msk [vmem:[#allocation2 + $0x58] sm:$0xff] %vm2394, %v2369
      %2407 = vst.msk [vmem:[#allocation2 + $0x60] sm:$0xff] %vm2394, %v2371
      %2408 = vst.msk [vmem:[#allocation2 + $0x68] sm:$0xff] %vm2394, %v2373
      %2409 = vst.msk [vmem:[#allocation2 + $0x70] sm:$0xff] %vm2394, %v2375
      %2410 = vst.msk [vmem:[#allocation2 + $0x78] sm:$0xff] %vm2394, %v2377
      %v2411 = vld [vmem:[%s2233] sm:$0xf]
      %v2412 = vld [vmem:[%s2233 + $0x4] sm:$0xf]
      %v2413 = vld [vmem:[%s2233 + $0x8] sm:$0x1]
      %v2414 = vld [vmem:[%s2233 + $0xc] sm:$0xf]
      %v2415 = vld [vmem:[%s2233 + $0x10] sm:$0xf]
      %v2416 = vld [vmem:[%s2233 + $0x14] sm:$0x1]
      %v2417 = vld [vmem:[%s2233 + $0x18] sm:$0xf]
      %v2418 = vld [vmem:[%s2233 + $0x1c] sm:$0xf]
      %v2419 = vld [vmem:[%s2233 + $0x20] sm:$0x1]
      %v2420 = vld [vmem:[%s2233 + $0x24] sm:$0xf]
      %v2421 = vld [vmem:[%s2233 + $0x28] sm:$0xf]
      %v2422 = vld [vmem:[%s2233 + $0x2c] sm:$0x1]
      %v2423 = vld [vmem:[%s2233 + $0x30] sm:$0xf]
      %v2424 = vld [vmem:[%s2233 + $0x34] sm:$0xf]
      %v2425 = vld [vmem:[%s2233 + $0x38] sm:$0x1]
      %v2426 = vld [vmem:[%s2233 + $0x3c] sm:$0xf]
      %v2427 = vld [vmem:[%s2233 + $0x40] sm:$0xf]
      %v2428 = vld [vmem:[%s2233 + $0x44] sm:$0x1]
      %v2429 = vld [vmem:[%s2233 + $0x48] sm:$0xf]
      %v2430 = vld [vmem:[%s2233 + $0x4c] sm:$0xf]
      %v2431 = vld [vmem:[%s2233 + $0x50] sm:$0x1]
      %v2432 = vld [vmem:[%s2233 + $0x54] sm:$0xf]
      %v2433 = vld [vmem:[%s2233 + $0x58] sm:$0xf]
      %v2434 = vld [vmem:[%s2233 + $0x5c] sm:$0x1]
      %v2435 = vld [vmem:[%s2233 + $0x60] sm:$0xf]
      %v2436 = vld [vmem:[%s2233 + $0x64] sm:$0xf]
      %v2437 = vld [vmem:[%s2233 + $0x68] sm:$0x1]
      %v2438 = vld [vmem:[%s2233 + $0x6c] sm:$0xf]
      %v2439 = vld [vmem:[%s2233 + $0x70] sm:$0xf]
      %v2440 = vld [vmem:[%s2233 + $0x74] sm:$0x1]
      %v2441 = vld [vmem:[%s2233 + $0x78] sm:$0xf]
      %v2442 = vld [vmem:[%s2233 + $0x7c] sm:$0xf]
      %v2443 = vld [vmem:[%s2233 + $0x80] sm:$0x1]
      %v2444 = vld [vmem:[%s2233 + $0x84] sm:$0xf]
      %v2445 = vld [vmem:[%s2233 + $0x88] sm:$0xf]
      %v2446 = vld [vmem:[%s2233 + $0x8c] sm:$0x1]
      %v2447 = vld [vmem:[%s2233 + $0x90] sm:$0xf]
      %v2448 = vld [vmem:[%s2233 + $0x94] sm:$0xf]
      %v2449 = vld [vmem:[%s2233 + $0x98] sm:$0x1]
      %v2450 = vld [vmem:[%s2233 + $0x9c] sm:$0xf]
      %v2451 = vld [vmem:[%s2233 + $0xa0] sm:$0xf]
      %v2452 = vld [vmem:[%s2233 + $0xa4] sm:$0x1]
      %v2453 = vld [vmem:[%s2233 + $0xa8] sm:$0xf]
      %v2454 = vld [vmem:[%s2233 + $0xac] sm:$0xf]
      %v2455 = vld [vmem:[%s2233 + $0xb0] sm:$0x1]
      %v2456 = vld [vmem:[%s2233 + $0xb4] sm:$0xf]
      %v2457 = vld [vmem:[%s2233 + $0xb8] sm:$0xf]
      %v2458 = vld [vmem:[%s2233 + $0xbc] sm:$0x1]
      %v2460 = vshrl.u32 %v2411, 16
      %v2462 = vrot.slane %v2460, 4
      %v2463 = vshll.u32 %v2411, 16
      %v2465 = vrot.slane %v2463, 5
      %v2466 = vor.u32 %v2462, %v2465
      %v2467 = vrot.slane %v2466, 4
      %v2469 = vshll.u32 %v2412, 16
      %v2471 = vrot.slane %v2469, 5
      %v2472 = vsel %vm367, %v2467, %v2471
      %v2473 = vshrl.u32 %v2412, 16
      %v2475 = vrot.slane %v2473, 4
      %v2476 = vor.u32 %v2475, %v2471
      %v2477 = vrot.slane %v2476, 4
      %v2479 = vshll.u32 %v2413, 16
      %v2481 = vrot.slane %v2479, 5
      %v2482 = vsel %vm367, %v2477, %v2481
      %v2484 = vshrl.u32 %v2414, 16
      %v2486 = vrot.slane %v2484, 4
      %v2487 = vshll.u32 %v2414, 16
      %v2489 = vrot.slane %v2487, 5
      %v2490 = vor.u32 %v2486, %v2489
      %v2491 = vrot.slane %v2490, 4
      %v2493 = vshll.u32 %v2415, 16
      %v2495 = vrot.slane %v2493, 5
      %v2496 = vsel %vm367, %v2491, %v2495
      %v2497 = vshrl.u32 %v2415, 16
      %v2499 = vrot.slane %v2497, 4
      %v2500 = vor.u32 %v2499, %v2495
      %v2501 = vrot.slane %v2500, 4
      %v2503 = vshll.u32 %v2416, 16
      %v2505 = vrot.slane %v2503, 5
      %v2506 = vsel %vm367, %v2501, %v2505
      %v2508 = vshrl.u32 %v2417, 16
      %v2510 = vrot.slane %v2508, 4
      %v2511 = vshll.u32 %v2417, 16
      %v2513 = vrot.slane %v2511, 5
      %v2514 = vor.u32 %v2510, %v2513
      %v2515 = vrot.slane %v2514, 4
      %v2517 = vshll.u32 %v2418, 16
      %v2519 = vrot.slane %v2517, 5
      %v2520 = vsel %vm367, %v2515, %v2519
      %v2521 = vshrl.u32 %v2418, 16
      %v2523 = vrot.slane %v2521, 4
      %v2524 = vor.u32 %v2523, %v2519
      %v2525 = vrot.slane %v2524, 4
      %v2527 = vshll.u32 %v2419, 16
      %v2529 = vrot.slane %v2527, 5
      %v2530 = vsel %vm367, %v2525, %v2529
      %v2532 = vshrl.u32 %v2420, 16
      %v2534 = vrot.slane %v2532, 4
      %v2535 = vshll.u32 %v2420, 16
      %v2537 = vrot.slane %v2535, 5
      %v2538 = vor.u32 %v2534, %v2537
      %v2539 = vrot.slane %v2538, 4
      %v2541 = vshll.u32 %v2421, 16
      %v2543 = vrot.slane %v2541, 5
      %v2544 = vsel %vm367, %v2539, %v2543
      %v2545 = vshrl.u32 %v2421, 16
      %v2547 = vrot.slane %v2545, 4
      %v2548 = vor.u32 %v2547, %v2543
      %v2549 = vrot.slane %v2548, 4
      %v2551 = vshll.u32 %v2422, 16
      %v2553 = vrot.slane %v2551, 5
      %v2554 = vsel %vm367, %v2549, %v2553
      %v2556 = vshrl.u32 %v2423, 16
      %v2558 = vrot.slane %v2556, 4
      %v2559 = vshll.u32 %v2423, 16
      %v2561 = vrot.slane %v2559, 5
      %v2562 = vor.u32 %v2558, %v2561
      %v2563 = vrot.slane %v2562, 4
      %v2565 = vshll.u32 %v2424, 16
      %v2567 = vrot.slane %v2565, 5
      %v2568 = vsel %vm367, %v2563, %v2567
      %v2569 = vshrl.u32 %v2424, 16
      %v2571 = vrot.slane %v2569, 4
      %v2572 = vor.u32 %v2571, %v2567
      %v2573 = vrot.slane %v2572, 4
      %v2575 = vshll.u32 %v2425, 16
      %v2577 = vrot.slane %v2575, 5
      %v2578 = vsel %vm367, %v2573, %v2577
      %v2580 = vshrl.u32 %v2426, 16
      %v2582 = vrot.slane %v2580, 4
      %v2583 = vshll.u32 %v2426, 16
      %v2585 = vrot.slane %v2583, 5
      %v2586 = vor.u32 %v2582, %v2585
      %v2587 = vrot.slane %v2586, 4
      %v2589 = vshll.u32 %v2427, 16
      %v2591 = vrot.slane %v2589, 5
      %v2592 = vsel %vm367, %v2587, %v2591
      %v2593 = vshrl.u32 %v2427, 16
      %v2595 = vrot.slane %v2593, 4
      %v2596 = vor.u32 %v2595, %v2591
      %v2597 = vrot.slane %v2596, 4
      %v2599 = vshll.u32 %v2428, 16
      %v2601 = vrot.slane %v2599, 5
      %v2602 = vsel %vm367, %v2597, %v2601
      %v2604 = vshrl.u32 %v2429, 16
      %v2606 = vrot.slane %v2604, 4
      %v2607 = vshll.u32 %v2429, 16
      %v2609 = vrot.slane %v2607, 5
      %v2610 = vor.u32 %v2606, %v2609
      %v2611 = vrot.slane %v2610, 4
      %v2613 = vshll.u32 %v2430, 16
      %v2615 = vrot.slane %v2613, 5
      %v2616 = vsel %vm367, %v2611, %v2615
      %v2617 = vshrl.u32 %v2430, 16
      %v2619 = vrot.slane %v2617, 4
      %v2620 = vor.u32 %v2619, %v2615
      %v2621 = vrot.slane %v2620, 4
      %v2623 = vshll.u32 %v2431, 16
      %v2625 = vrot.slane %v2623, 5
      %v2626 = vsel %vm367, %v2621, %v2625
      %v2628 = vshrl.u32 %v2432, 16
      %v2630 = vrot.slane %v2628, 4
      %v2631 = vshll.u32 %v2432, 16
      %v2633 = vrot.slane %v2631, 5
      %v2634 = vor.u32 %v2630, %v2633
      %v2635 = vrot.slane %v2634, 4
      %v2637 = vshll.u32 %v2433, 16
      %v2639 = vrot.slane %v2637, 5
      %v2640 = vsel %vm367, %v2635, %v2639
      %v2641 = vshrl.u32 %v2433, 16
      %v2643 = vrot.slane %v2641, 4
      %v2644 = vor.u32 %v2643, %v2639
      %v2645 = vrot.slane %v2644, 4
      %v2647 = vshll.u32 %v2434, 16
      %v2649 = vrot.slane %v2647, 5
      %v2650 = vsel %vm367, %v2645, %v2649
      %v2652 = vshrl.u32 %v2435, 16
      %v2654 = vrot.slane %v2652, 4
      %v2655 = vshll.u32 %v2435, 16
      %v2657 = vrot.slane %v2655, 5
      %v2658 = vor.u32 %v2654, %v2657
      %v2659 = vrot.slane %v2658, 4
      %v2661 = vshll.u32 %v2436, 16
      %v2663 = vrot.slane %v2661, 5
      %v2664 = vsel %vm367, %v2659, %v2663
      %v2665 = vshrl.u32 %v2436, 16
      %v2667 = vrot.slane %v2665, 4
      %v2668 = vor.u32 %v2667, %v2663
      %v2669 = vrot.slane %v2668, 4
      %v2671 = vshll.u32 %v2437, 16
      %v2673 = vrot.slane %v2671, 5
      %v2674 = vsel %vm367, %v2669, %v2673
      %v2676 = vshrl.u32 %v2438, 16
      %v2678 = vrot.slane %v2676, 4
      %v2679 = vshll.u32 %v2438, 16
      %v2681 = vrot.slane %v2679, 5
      %v2682 = vor.u32 %v2678, %v2681
      %v2683 = vrot.slane %v2682, 4
      %v2685 = vshll.u32 %v2439, 16
      %v2687 = vrot.slane %v2685, 5
      %v2688 = vsel %vm367, %v2683, %v2687
      %v2689 = vshrl.u32 %v2439, 16
      %v2691 = vrot.slane %v2689, 4
      %v2692 = vor.u32 %v2691, %v2687
      %v2693 = vrot.slane %v2692, 4
      %v2695 = vshll.u32 %v2440, 16
      %v2697 = vrot.slane %v2695, 5
      %v2698 = vsel %vm367, %v2693, %v2697
      %v2700 = vshrl.u32 %v2441, 16
      %v2702 = vrot.slane %v2700, 4
      %v2703 = vshll.u32 %v2441, 16
      %v2705 = vrot.slane %v2703, 5
      %v2706 = vor.u32 %v2702, %v2705
      %v2707 = vrot.slane %v2706, 4
      %v2709 = vshll.u32 %v2442, 16
      %v2711 = vrot.slane %v2709, 5
      %v2712 = vsel %vm367, %v2707, %v2711
      %v2713 = vshrl.u32 %v2442, 16
      %v2715 = vrot.slane %v2713, 4
      %v2716 = vor.u32 %v2715, %v2711
      %v2717 = vrot.slane %v2716, 4
      %v2719 = vshll.u32 %v2443, 16
      %v2721 = vrot.slane %v2719, 5
      %v2722 = vsel %vm367, %v2717, %v2721
      %v2724 = vshrl.u32 %v2444, 16
      %v2726 = vrot.slane %v2724, 4
      %v2727 = vshll.u32 %v2444, 16
      %v2729 = vrot.slane %v2727, 5
      %v2730 = vor.u32 %v2726, %v2729
      %v2731 = vrot.slane %v2730, 4
      %v2733 = vshll.u32 %v2445, 16
      %v2735 = vrot.slane %v2733, 5
      %v2736 = vsel %vm367, %v2731, %v2735
      %v2737 = vshrl.u32 %v2445, 16
      %v2739 = vrot.slane %v2737, 4
      %v2740 = vor.u32 %v2739, %v2735
      %v2741 = vrot.slane %v2740, 4
      %v2743 = vshll.u32 %v2446, 16
      %v2745 = vrot.slane %v2743, 5
      %v2746 = vsel %vm367, %v2741, %v2745
      %v2748 = vshrl.u32 %v2447, 16
      %v2750 = vrot.slane %v2748, 4
      %v2751 = vshll.u32 %v2447, 16
      %v2753 = vrot.slane %v2751, 5
      %v2754 = vor.u32 %v2750, %v2753
      %v2755 = vrot.slane %v2754, 4
      %v2757 = vshll.u32 %v2448, 16
      %v2759 = vrot.slane %v2757, 5
      %v2760 = vsel %vm367, %v2755, %v2759
      %v2761 = vshrl.u32 %v2448, 16
      %v2763 = vrot.slane %v2761, 4
      %v2764 = vor.u32 %v2763, %v2759
      %v2765 = vrot.slane %v2764, 4
      %v2767 = vshll.u32 %v2449, 16
      %v2769 = vrot.slane %v2767, 5
      %v2770 = vsel %vm367, %v2765, %v2769
      %v2772 = vshrl.u32 %v2450, 16
      %v2774 = vrot.slane %v2772, 4
      %v2775 = vshll.u32 %v2450, 16
      %v2777 = vrot.slane %v2775, 5
      %v2778 = vor.u32 %v2774, %v2777
      %v2779 = vrot.slane %v2778, 4
      %v2781 = vshll.u32 %v2451, 16
      %v2783 = vrot.slane %v2781, 5
      %v2784 = vsel %vm367, %v2779, %v2783
      %v2785 = vshrl.u32 %v2451, 16
      %v2787 = vrot.slane %v2785, 4
      %v2788 = vor.u32 %v2787, %v2783
      %v2789 = vrot.slane %v2788, 4
      %v2791 = vshll.u32 %v2452, 16
      %v2793 = vrot.slane %v2791, 5
      %v2794 = vsel %vm367, %v2789, %v2793
      %v2796 = vshrl.u32 %v2453, 16
      %v2798 = vrot.slane %v2796, 4
      %v2799 = vshll.u32 %v2453, 16
      %v2801 = vrot.slane %v2799, 5
      %v2802 = vor.u32 %v2798, %v2801
      %v2803 = vrot.slane %v2802, 4
      %v2805 = vshll.u32 %v2454, 16
      %v2807 = vrot.slane %v2805, 5
      %v2808 = vsel %vm367, %v2803, %v2807
      %v2809 = vshrl.u32 %v2454, 16
      %v2811 = vrot.slane %v2809, 4
      %v2812 = vor.u32 %v2811, %v2807
      %v2813 = vrot.slane %v2812, 4
      %v2815 = vshll.u32 %v2455, 16
      %v2817 = vrot.slane %v2815, 5
      %v2818 = vsel %vm367, %v2813, %v2817
      %v2820 = vshrl.u32 %v2456, 16
      %v2822 = vrot.slane %v2820, 4
      %v2823 = vshll.u32 %v2456, 16
      %v2825 = vrot.slane %v2823, 5
      %v2826 = vor.u32 %v2822, %v2825
      %v2827 = vrot.slane %v2826, 4
      %v2829 = vshll.u32 %v2457, 16
      %v2831 = vrot.slane %v2829, 5
      %v2832 = vsel %vm367, %v2827, %v2831
      %v2833 = vshrl.u32 %v2457, 16
      %v2835 = vrot.slane %v2833, 4
      %v2836 = vor.u32 %v2835, %v2831
      %v2837 = vrot.slane %v2836, 4
      %v2839 = vshll.u32 %v2458, 16
      %v2841 = vrot.slane %v2839, 5
      %v2842 = vsel %vm367, %v2837, %v2841
      %v2843 = vunpack.c.l.b16 %v2472
      %v2844 = vunpack.c.l.b16 %v2482
      %v2845 = vunpack.c.l.b16 %v2496
      %v2846 = vunpack.c.l.b16 %v2506
      %v2847 = vunpack.c.l.b16 %v2520
      %v2848 = vunpack.c.l.b16 %v2530
      %v2849 = vunpack.c.l.b16 %v2544
      %v2850 = vunpack.c.l.b16 %v2554
      %v2851 = vunpack.c.l.b16 %v2568
      %v2852 = vunpack.c.l.b16 %v2578
      %v2853 = vunpack.c.l.b16 %v2592
      %v2854 = vunpack.c.l.b16 %v2602
      %v2855 = vunpack.c.l.b16 %v2616
      %v2856 = vunpack.c.l.b16 %v2626
      %v2857 = vunpack.c.l.b16 %v2640
      %v2858 = vunpack.c.l.b16 %v2650
      %v2859 = vunpack.c.l.b16 %v2664
      %v2860 = vunpack.c.l.b16 %v2674
      %v2861 = vunpack.c.l.b16 %v2688
      %v2862 = vunpack.c.l.b16 %v2698
      %v2863 = vunpack.c.l.b16 %v2712
      %v2864 = vunpack.c.l.b16 %v2722
      %v2865 = vunpack.c.l.b16 %v2736
      %v2866 = vunpack.c.l.b16 %v2746
      %v2867 = vunpack.c.l.b16 %v2760
      %v2868 = vunpack.c.l.b16 %v2770
      %v2869 = vunpack.c.l.b16 %v2784
      %v2870 = vunpack.c.l.b16 %v2794
      %v2871 = vunpack.c.l.b16 %v2808
      %v2872 = vunpack.c.l.b16 %v2818
      %v2873 = vunpack.c.l.b16 %v2832
      %v2874 = vunpack.c.l.b16 %v2842
      %v2875 = vpack.c.b16 %v2844, %v2843
      %v2876 = vpack.c.b16 %v2846, %v2845
      %v2877 = vpack.c.b16 %v2848, %v2847
      %v2878 = vpack.c.b16 %v2850, %v2849
      %v2879 = vpack.c.b16 %v2852, %v2851
      %v2880 = vpack.c.b16 %v2854, %v2853
      %v2881 = vpack.c.b16 %v2856, %v2855
      %v2882 = vpack.c.b16 %v2858, %v2857
      %v2883 = vpack.c.b16 %v2860, %v2859
      %v2884 = vpack.c.b16 %v2862, %v2861
      %v2885 = vpack.c.b16 %v2864, %v2863
      %v2886 = vpack.c.b16 %v2866, %v2865
      %v2887 = vpack.c.b16 %v2868, %v2867
      %v2888 = vpack.c.b16 %v2870, %v2869
      %v2889 = vpack.c.b16 %v2872, %v2871
      %v2890 = vpack.c.b16 %v2874, %v2873
      %2891 = vrot.lane.b32.xlu0 %v2875, 28
      %v2892 = vpop.permute.xlu0 %2891
      %2893 = vrot.lane.b32.xlu0 %v2876, 28
      %v2894 = vpop.permute.xlu0 %2893
      %2895 = vrot.lane.b32.xlu0 %v2877, 28
      %v2896 = vpop.permute.xlu0 %2895
      %2897 = vrot.lane.b32.xlu0 %v2878, 28
      %v2898 = vpop.permute.xlu0 %2897
      %2899 = vrot.lane.b32.xlu0 %v2879, 28
      %v2900 = vpop.permute.xlu0 %2899
      %2901 = vrot.lane.b32.xlu0 %v2880, 28
      %v2902 = vpop.permute.xlu0 %2901
      %2903 = vrot.lane.b32.xlu0 %v2881, 28
      %v2904 = vpop.permute.xlu0 %2903
      %2905 = vrot.lane.b32.xlu0 %v2882, 28
      %v2906 = vpop.permute.xlu0 %2905
      %2907 = vrot.lane.b32.xlu0 %v2883, 28
      %v2908 = vpop.permute.xlu0 %2907
      %2909 = vrot.lane.b32.xlu0 %v2884, 28
      %v2910 = vpop.permute.xlu0 %2909
      %2911 = vrot.lane.b32.xlu0 %v2885, 28
      %v2912 = vpop.permute.xlu0 %2911
      %2913 = vrot.lane.b32.xlu0 %v2886, 28
      %v2914 = vpop.permute.xlu0 %2913
      %2915 = vrot.lane.b32.xlu0 %v2887, 28
      %v2916 = vpop.permute.xlu0 %2915
      %2917 = vrot.lane.b32.xlu0 %v2888, 28
      %v2918 = vpop.permute.xlu0 %2917
      %2919 = vrot.lane.b32.xlu0 %v2889, 28
      %v2920 = vpop.permute.xlu0 %2919
      %2921 = vrot.lane.b32.xlu0 %v2890, 28
      %v2922 = vpop.permute.xlu0 %2921
      %vm2939 = vcmask 261344
      %2940 = vst.msk [vmem:[#allocation2] sm:$0xff] %vm2939, %v2892
      %2941 = vst.msk [vmem:[#allocation2 + $0x8] sm:$0xff] %vm2939, %v2894
      %2942 = vst.msk [vmem:[#allocation2 + $0x10] sm:$0xff] %vm2939, %v2896
      %2943 = vst.msk [vmem:[#allocation2 + $0x18] sm:$0xff] %vm2939, %v2898
      %2944 = vst.msk [vmem:[#allocation2 + $0x20] sm:$0xff] %vm2939, %v2900
      %2945 = vst.msk [vmem:[#allocation2 + $0x28] sm:$0xff] %vm2939, %v2902
      %2946 = vst.msk [vmem:[#allocation2 + $0x30] sm:$0xff] %vm2939, %v2904
      %2947 = vst.msk [vmem:[#allocation2 + $0x38] sm:$0xff] %vm2939, %v2906
      %2948 = vst.msk [vmem:[#allocation2 + $0x40] sm:$0xff] %vm2939, %v2908
      %2949 = vst.msk [vmem:[#allocation2 + $0x48] sm:$0xff] %vm2939, %v2910
      %2950 = vst.msk [vmem:[#allocation2 + $0x50] sm:$0xff] %vm2939, %v2912
      %2951 = vst.msk [vmem:[#allocation2 + $0x58] sm:$0xff] %vm2939, %v2914
      %2952 = vst.msk [vmem:[#allocation2 + $0x60] sm:$0xff] %vm2939, %v2916
      %2953 = vst.msk [vmem:[#allocation2 + $0x68] sm:$0xff] %vm2939, %v2918
      %2954 = vst.msk [vmem:[#allocation2 + $0x70] sm:$0xff] %vm2939, %v2920
      %2955 = vst.msk [vmem:[#allocation2 + $0x78] sm:$0xff] %vm2939, %v2922
      %v2956 = vld [vmem:[%s2233] sm:$0xe]
      %v2957 = vld [vmem:[%s2233 + $0x4] sm:$0xf]
      %v2958 = vld [vmem:[%s2233 + $0x8] sm:$0x1]
      %v2959 = vld [vmem:[%s2233 + $0xc] sm:$0xe]
      %v2960 = vld [vmem:[%s2233 + $0x10] sm:$0xf]
      %v2961 = vld [vmem:[%s2233 + $0x14] sm:$0x1]
      %v2962 = vld [vmem:[%s2233 + $0x18] sm:$0xe]
      %v2963 = vld [vmem:[%s2233 + $0x1c] sm:$0xf]
      %v2964 = vld [vmem:[%s2233 + $0x20] sm:$0x1]
      %v2965 = vld [vmem:[%s2233 + $0x24] sm:$0xe]
      %v2966 = vld [vmem:[%s2233 + $0x28] sm:$0xf]
      %v2967 = vld [vmem:[%s2233 + $0x2c] sm:$0x1]
      %v2968 = vld [vmem:[%s2233 + $0x30] sm:$0xe]
      %v2969 = vld [vmem:[%s2233 + $0x34] sm:$0xf]
      %v2970 = vld [vmem:[%s2233 + $0x38] sm:$0x1]
      %v2971 = vld [vmem:[%s2233 + $0x3c] sm:$0xe]
      %v2972 = vld [vmem:[%s2233 + $0x40] sm:$0xf]
      %v2973 = vld [vmem:[%s2233 + $0x44] sm:$0x1]
      %v2974 = vld [vmem:[%s2233 + $0x48] sm:$0xe]
      %v2975 = vld [vmem:[%s2233 + $0x4c] sm:$0xf]
      %v2976 = vld [vmem:[%s2233 + $0x50] sm:$0x1]
      %v2977 = vld [vmem:[%s2233 + $0x54] sm:$0xe]
      %v2978 = vld [vmem:[%s2233 + $0x58] sm:$0xf]
      %v2979 = vld [vmem:[%s2233 + $0x5c] sm:$0x1]
      %v2980 = vld [vmem:[%s2233 + $0x60] sm:$0xe]
      %v2981 = vld [vmem:[%s2233 + $0x64] sm:$0xf]
      %v2982 = vld [vmem:[%s2233 + $0x68] sm:$0x1]
      %v2983 = vld [vmem:[%s2233 + $0x6c] sm:$0xe]
      %v2984 = vld [vmem:[%s2233 + $0x70] sm:$0xf]
      %v2985 = vld [vmem:[%s2233 + $0x74] sm:$0x1]
      %v2986 = vld [vmem:[%s2233 + $0x78] sm:$0xe]
      %v2987 = vld [vmem:[%s2233 + $0x7c] sm:$0xf]
      %v2988 = vld [vmem:[%s2233 + $0x80] sm:$0x1]
      %v2989 = vld [vmem:[%s2233 + $0x84] sm:$0xe]
      %v2990 = vld [vmem:[%s2233 + $0x88] sm:$0xf]
      %v2991 = vld [vmem:[%s2233 + $0x8c] sm:$0x1]
      %v2992 = vld [vmem:[%s2233 + $0x90] sm:$0xe]
      %v2993 = vld [vmem:[%s2233 + $0x94] sm:$0xf]
      %v2994 = vld [vmem:[%s2233 + $0x98] sm:$0x1]
      %v2995 = vld [vmem:[%s2233 + $0x9c] sm:$0xe]
      %v2996 = vld [vmem:[%s2233 + $0xa0] sm:$0xf]
      %v2997 = vld [vmem:[%s2233 + $0xa4] sm:$0x1]
      %v2998 = vld [vmem:[%s2233 + $0xa8] sm:$0xe]
      %v2999 = vld [vmem:[%s2233 + $0xac] sm:$0xf]
      %v3000 = vld [vmem:[%s2233 + $0xb0] sm:$0x1]
      %v3001 = vld [vmem:[%s2233 + $0xb4] sm:$0xe]
      %v3002 = vld [vmem:[%s2233 + $0xb8] sm:$0xf]
      %v3003 = vld [vmem:[%s2233 + $0xbc] sm:$0x1]
      %v3052 = vrot.slane %v2956, 5
      %v3053 = vrot.slane %v3052, 4
      %v3054 = vrot.slane %v2957, 5
      %v3055 = vsel %vm963, %v3053, %v3054
      %v3056 = vrot.slane %v3054, 4
      %v3057 = vrot.slane %v2958, 5
      %v3058 = vsel %vm963, %v3056, %v3057
      %v3059 = vrot.slane %v2959, 5
      %v3060 = vrot.slane %v3059, 4
      %v3061 = vrot.slane %v2960, 5
      %v3062 = vsel %vm963, %v3060, %v3061
      %v3063 = vrot.slane %v3061, 4
      %v3064 = vrot.slane %v2961, 5
      %v3065 = vsel %vm963, %v3063, %v3064
      %v3066 = vrot.slane %v2962, 5
      %v3067 = vrot.slane %v3066, 4
      %v3068 = vrot.slane %v2963, 5
      %v3069 = vsel %vm963, %v3067, %v3068
      %v3070 = vrot.slane %v3068, 4
      %v3071 = vrot.slane %v2964, 5
      %v3072 = vsel %vm963, %v3070, %v3071
      %v3073 = vrot.slane %v2965, 5
      %v3074 = vrot.slane %v3073, 4
      %v3075 = vrot.slane %v2966, 5
      %v3076 = vsel %vm963, %v3074, %v3075
      %v3077 = vrot.slane %v3075, 4
      %v3078 = vrot.slane %v2967, 5
      %v3079 = vsel %vm963, %v3077, %v3078
      %v3080 = vrot.slane %v2968, 5
      %v3081 = vrot.slane %v3080, 4
      %v3082 = vrot.slane %v2969, 5
      %v3083 = vsel %vm963, %v3081, %v3082
      %v3084 = vrot.slane %v3082, 4
      %v3085 = vrot.slane %v2970, 5
      %v3086 = vsel %vm963, %v3084, %v3085
      %v3087 = vrot.slane %v2971, 5
      %v3088 = vrot.slane %v3087, 4
      %v3089 = vrot.slane %v2972, 5
      %v3090 = vsel %vm963, %v3088, %v3089
      %v3091 = vrot.slane %v3089, 4
      %v3092 = vrot.slane %v2973, 5
      %v3093 = vsel %vm963, %v3091, %v3092
      %v3094 = vrot.slane %v2974, 5
      %v3095 = vrot.slane %v3094, 4
      %v3096 = vrot.slane %v2975, 5
      %v3097 = vsel %vm963, %v3095, %v3096
      %v3098 = vrot.slane %v3096, 4
      %v3099 = vrot.slane %v2976, 5
      %v3100 = vsel %vm963, %v3098, %v3099
      %v3101 = vrot.slane %v2977, 5
      %v3102 = vrot.slane %v3101, 4
      %v3103 = vrot.slane %v2978, 5
      %v3104 = vsel %vm963, %v3102, %v3103
      %v3105 = vrot.slane %v3103, 4
      %v3106 = vrot.slane %v2979, 5
      %v3107 = vsel %vm963, %v3105, %v3106
      %v3108 = vrot.slane %v2980, 5
      %v3109 = vrot.slane %v3108, 4
      %v3110 = vrot.slane %v2981, 5
      %v3111 = vsel %vm963, %v3109, %v3110
      %v3112 = vrot.slane %v3110, 4
      %v3113 = vrot.slane %v2982, 5
      %v3114 = vsel %vm963, %v3112, %v3113
      %v3115 = vrot.slane %v2983, 5
      %v3116 = vrot.slane %v3115, 4
      %v3117 = vrot.slane %v2984, 5
      %v3118 = vsel %vm963, %v3116, %v3117
      %v3119 = vrot.slane %v3117, 4
      %v3120 = vrot.slane %v2985, 5
      %v3121 = vsel %vm963, %v3119, %v3120
      %v3122 = vrot.slane %v2986, 5
      %v3123 = vrot.slane %v3122, 4
      %v3124 = vrot.slane %v2987, 5
      %v3125 = vsel %vm963, %v3123, %v3124
      %v3126 = vrot.slane %v3124, 4
      %v3127 = vrot.slane %v2988, 5
      %v3128 = vsel %vm963, %v3126, %v3127
      %v3129 = vrot.slane %v2989, 5
      %v3130 = vrot.slane %v3129, 4
      %v3131 = vrot.slane %v2990, 5
      %v3132 = vsel %vm963, %v3130, %v3131
      %v3133 = vrot.slane %v3131, 4
      %v3134 = vrot.slane %v2991, 5
      %v3135 = vsel %vm963, %v3133, %v3134
      %v3136 = vrot.slane %v2992, 5
      %v3137 = vrot.slane %v3136, 4
      %v3138 = vrot.slane %v2993, 5
      %v3139 = vsel %vm963, %v3137, %v3138
      %v3140 = vrot.slane %v3138, 4
      %v3141 = vrot.slane %v2994, 5
      %v3142 = vsel %vm963, %v3140, %v3141
      %v3143 = vrot.slane %v2995, 5
      %v3144 = vrot.slane %v3143, 4
      %v3145 = vrot.slane %v2996, 5
      %v3146 = vsel %vm963, %v3144, %v3145
      %v3147 = vrot.slane %v3145, 4
      %v3148 = vrot.slane %v2997, 5
      %v3149 = vsel %vm963, %v3147, %v3148
      %v3150 = vrot.slane %v2998, 5
      %v3151 = vrot.slane %v3150, 4
      %v3152 = vrot.slane %v2999, 5
      %v3153 = vsel %vm963, %v3151, %v3152
      %v3154 = vrot.slane %v3152, 4
      %v3155 = vrot.slane %v3000, 5
      %v3156 = vsel %vm963, %v3154, %v3155
      %v3157 = vrot.slane %v3001, 5
      %v3158 = vrot.slane %v3157, 4
      %v3159 = vrot.slane %v3002, 5
      %v3160 = vsel %vm963, %v3158, %v3159
      %v3161 = vrot.slane %v3159, 4
      %v3162 = vrot.slane %v3003, 5
      %v3163 = vsel %vm963, %v3161, %v3162
      %v3164 = vunpack.c.l.b16 %v3055
      %v3165 = vunpack.c.l.b16 %v3058
      %v3166 = vunpack.c.l.b16 %v3062
      %v3167 = vunpack.c.l.b16 %v3065
      %v3168 = vunpack.c.l.b16 %v3069
      %v3169 = vunpack.c.l.b16 %v3072
      %v3170 = vunpack.c.l.b16 %v3076
      %v3171 = vunpack.c.l.b16 %v3079
      %v3172 = vunpack.c.l.b16 %v3083
      %v3173 = vunpack.c.l.b16 %v3086
      %v3174 = vunpack.c.l.b16 %v3090
      %v3175 = vunpack.c.l.b16 %v3093
      %v3176 = vunpack.c.l.b16 %v3097
      %v3177 = vunpack.c.l.b16 %v3100
      %v3178 = vunpack.c.l.b16 %v3104
      %v3179 = vunpack.c.l.b16 %v3107
      %v3180 = vunpack.c.l.b16 %v3111
      %v3181 = vunpack.c.l.b16 %v3114
      %v3182 = vunpack.c.l.b16 %v3118
      %v3183 = vunpack.c.l.b16 %v3121
      %v3184 = vunpack.c.l.b16 %v3125
      %v3185 = vunpack.c.l.b16 %v3128
      %v3186 = vunpack.c.l.b16 %v3132
      %v3187 = vunpack.c.l.b16 %v3135
      %v3188 = vunpack.c.l.b16 %v3139
      %v3189 = vunpack.c.l.b16 %v3142
      %v3190 = vunpack.c.l.b16 %v3146
      %v3191 = vunpack.c.l.b16 %v3149
      %v3192 = vunpack.c.l.b16 %v3153
      %v3193 = vunpack.c.l.b16 %v3156
      %v3194 = vunpack.c.l.b16 %v3160
      %v3195 = vunpack.c.l.b16 %v3163
      %v3196 = vpack.c.b16 %v3165, %v3164
      %v3197 = vpack.c.b16 %v3167, %v3166
      %v3198 = vpack.c.b16 %v3169, %v3168
      %v3199 = vpack.c.b16 %v3171, %v3170
      %v3200 = vpack.c.b16 %v3173, %v3172
      %v3201 = vpack.c.b16 %v3175, %v3174
      %v3202 = vpack.c.b16 %v3177, %v3176
      %v3203 = vpack.c.b16 %v3179, %v3178
      %v3204 = vpack.c.b16 %v3181, %v3180
      %v3205 = vpack.c.b16 %v3183, %v3182
      %v3206 = vpack.c.b16 %v3185, %v3184
      %v3207 = vpack.c.b16 %v3187, %v3186
      %v3208 = vpack.c.b16 %v3189, %v3188
      %v3209 = vpack.c.b16 %v3191, %v3190
      %v3210 = vpack.c.b16 %v3193, %v3192
      %v3211 = vpack.c.b16 %v3195, %v3194
      %3212 = vrot.lane.b32.xlu0 %v3196, 32
      %v3213 = vpop.permute.xlu0 %3212
      %3214 = vrot.lane.b32.xlu0 %v3197, 32
      %v3215 = vpop.permute.xlu0 %3214
      %3216 = vrot.lane.b32.xlu0 %v3198, 32
      %v3217 = vpop.permute.xlu0 %3216
      %3218 = vrot.lane.b32.xlu0 %v3199, 32
      %v3219 = vpop.permute.xlu0 %3218
      %3220 = vrot.lane.b32.xlu0 %v3200, 32
      %v3221 = vpop.permute.xlu0 %3220
      %3222 = vrot.lane.b32.xlu0 %v3201, 32
      %v3223 = vpop.permute.xlu0 %3222
      %3224 = vrot.lane.b32.xlu0 %v3202, 32
      %v3225 = vpop.permute.xlu0 %3224
      %3226 = vrot.lane.b32.xlu0 %v3203, 32
      %v3227 = vpop.permute.xlu0 %3226
      %3228 = vrot.lane.b32.xlu0 %v3204, 32
      %v3229 = vpop.permute.xlu0 %3228
      %3230 = vrot.lane.b32.xlu0 %v3205, 32
      %v3231 = vpop.permute.xlu0 %3230
      %3232 = vrot.lane.b32.xlu0 %v3206, 32
      %v3233 = vpop.permute.xlu0 %3232
      %3234 = vrot.lane.b32.xlu0 %v3207, 32
      %v3235 = vpop.permute.xlu0 %3234
      %3236 = vrot.lane.b32.xlu0 %v3208, 32
      %v3237 = vpop.permute.xlu0 %3236
      %3238 = vrot.lane.b32.xlu0 %v3209, 32
      %v3239 = vpop.permute.xlu0 %3238
      %3240 = vrot.lane.b32.xlu0 %v3210, 32
      %v3241 = vpop.permute.xlu0 %3240
      %3242 = vrot.lane.b32.xlu0 %v3211, 32
      %v3243 = vpop.permute.xlu0 %3242
      %vm3260 = vcmask 294144
      %3261 = vst.msk [vmem:[#allocation2] sm:$0xff] %vm3260, %v3213
      %3262 = vst.msk [vmem:[#allocation2 + $0x8] sm:$0xff] %vm3260, %v3215
      %3263 = vst.msk [vmem:[#allocation2 + $0x10] sm:$0xff] %vm3260, %v3217
      %3264 = vst.msk [vmem:[#allocation2 + $0x18] sm:$0xff] %vm3260, %v3219
      %3265 = vst.msk [vmem:[#allocation2 + $0x20] sm:$0xff] %vm3260, %v3221
      %3266 = vst.msk [vmem:[#allocation2 + $0x28] sm:$0xff] %vm3260, %v3223
      %3267 = vst.msk [vmem:[#allocation2 + $0x30] sm:$0xff] %vm3260, %v3225
      %3268 = vst.msk [vmem:[#allocation2 + $0x38] sm:$0xff] %vm3260, %v3227
      %3269 = vst.msk [vmem:[#allocation2 + $0x40] sm:$0xff] %vm3260, %v3229
      %3270 = vst.msk [vmem:[#allocation2 + $0x48] sm:$0xff] %vm3260, %v3231
      %3271 = vst.msk [vmem:[#allocation2 + $0x50] sm:$0xff] %vm3260, %v3233
      %3272 = vst.msk [vmem:[#allocation2 + $0x58] sm:$0xff] %vm3260, %v3235
      %3273 = vst.msk [vmem:[#allocation2 + $0x60] sm:$0xff] %vm3260, %v3237
      %3274 = vst.msk [vmem:[#allocation2 + $0x68] sm:$0xff] %vm3260, %v3239
      %3275 = vst.msk [vmem:[#allocation2 + $0x70] sm:$0xff] %vm3260, %v3241
      %3276 = vst.msk [vmem:[#allocation2 + $0x78] sm:$0xff] %vm3260, %v3243
      %v3277 = vld [vmem:[#allocation2] sm:$0xff]
      %v3278 = vld [vmem:[#allocation2 + $0x8] sm:$0xff]
      %v3279 = vld [vmem:[#allocation2 + $0x10] sm:$0xff]
      %v3280 = vld [vmem:[#allocation2 + $0x18] sm:$0xff]
      %v3281 = vld [vmem:[#allocation2 + $0x20] sm:$0xff]
      %v3282 = vld [vmem:[#allocation2 + $0x28] sm:$0xff]
      %v3283 = vld [vmem:[#allocation2 + $0x30] sm:$0xff]
      %v3284 = vld [vmem:[#allocation2 + $0x38] sm:$0xff]
      %v3285 = vld [vmem:[#allocation2 + $0x40] sm:$0xff]
      %v3286 = vld [vmem:[#allocation2 + $0x48] sm:$0xff]
      %v3287 = vld [vmem:[#allocation2 + $0x50] sm:$0xff]
      %v3288 = vld [vmem:[#allocation2 + $0x58] sm:$0xff]
      %v3289 = vld [vmem:[#allocation2 + $0x60] sm:$0xff]
      %v3290 = vld [vmem:[#allocation2 + $0x68] sm:$0xff]
      %v3291 = vld [vmem:[#allocation2 + $0x70] sm:$0xff]
      %v3292 = vld [vmem:[#allocation2 + $0x78] sm:$0xff]
      %v3293 = vld [vmem:[%s1] sm:$0xf]
      %v3294 = vld [vmem:[%s1 + $0x4] sm:$0xf]
      %v3295 = vld [vmem:[%s1 + $0x8] sm:$0xf]
      %v3296 = vld [vmem:[%s1 + $0xc] sm:$0xf]
      %v3297 = vld [vmem:[%s1 + $0x10] sm:$0x3]
      %v3298 = vld [vmem:[%s2] sm:$0x1]
      %v3300 = vlaneseq
      %v3301 = vshrl.u32 %v3300, 7
      %v3302 = vsub.s32 0, %v3301
      %v3303 = vrot.slane %v3298, %v3302
      %v3310 = vunpack.c.l.b16 %v3293
      %v3311 = vunpack.c.l.b16 %v3294
      %v3312 = vunpack.c.l.b16 %v3295
      %v3313 = vunpack.c.l.b16 %v3296
      %v3314 = vunpack.c.l.b16 %v3297
      %v3315 = vpack.c.b16 %v3311, %v3310
      %v3316 = vpack.c.b16 %v3313, %v3312
      %v3317 = vpack.c.b16 %v3314, %v3314
      %vm3320 = vcmask 293888
      %v3322 = vsel %vm3320, %v3277, 0
      %v3325 = vsel %vm3320, %v3278, 0
      %v3328 = vsel %vm3320, %v3279, 0
      %v3331 = vsel %vm3320, %v3280, 0
      %v3334 = vsel %vm3320, %v3281, 0
      %v3337 = vsel %vm3320, %v3282, 0
      %v3340 = vsel %vm3320, %v3283, 0
      %v3343 = vsel %vm3320, %v3284, 0
      %v3346 = vsel %vm3320, %v3285, 0
      %v3349 = vsel %vm3320, %v3286, 0
      %v3352 = vsel %vm3320, %v3287, 0
      %v3355 = vsel %vm3320, %v3288, 0
      %v3358 = vsel %vm3320, %v3289, 0
      %v3361 = vsel %vm3320, %v3290, 0
      %v3364 = vsel %vm3320, %v3291, 0
      %v3367 = vsel %vm3320, %v3292, 0
      %vm3369 = vcmask 1041408
      %v3371 = vsel %vm3369, %v3317, 0
      %3373 = vmatprep.subr.bf16.mxu0 0
      %3374 = vmatpush1.bf16.msra.mxu0 %v3315
      %3375 = vmatprep.subr.bf16.mxu0 0
      %3376 = vmatpush1.bf16.msra.mxu0 %v3316
      %3377 = vmatprep.subr.bf16.mxu0 0
      %3378 = vmatpush1.bf16.msra.mxu0 %v3371
      %3379 = vmatprep.subr.bf16.mxu0 0
      %3380 = vmatpush1.bf16.msra.mxu0 0
      %3381 = vmatprep.subr.bf16.mxu0 0
      %3382 = vmatpush1.bf16.msra.mxu0 0
      %3383 = vmatprep.subr.bf16.mxu0 0
      %3384 = vmatpush1.bf16.msra.mxu0 0
      %3385 = vmatprep.subr.bf16.mxu0 0
      %3386 = vmatpush1.bf16.msra.mxu0 0
      %3387 = vmatprep.subr.bf16.mxu0 0
      %3388 = vmatpush1.bf16.msra.mxu0 0
      %3389 = vmatprep.subr.bf16.mxu0 0
      %3390 = vmatpush1.bf16.msra.mxu0 0
      %3391 = vmatprep.subr.bf16.mxu0 0
      %3392 = vmatpush1.bf16.msra.mxu0 0
      %3393 = vmatprep.subr.bf16.mxu0 0
      %3394 = vmatpush1.bf16.msra.mxu0 0
      %3395 = vmatprep.subr.bf16.mxu0 0
      %3396 = vmatpush1.bf16.msra.mxu0 0
      %3397 = vmatprep.subr.bf16.mxu0 0
      %3398 = vmatpush1.bf16.msra.mxu0 0
      %3399 = vmatprep.subr.bf16.mxu0 0
      %3400 = vmatpush1.bf16.msra.mxu0 0
      %3401 = vmatprep.subr.bf16.mxu0 0
      %3402 = vmatpush1.bf16.msra.mxu0 0
      %3403 = vmatprep.subr.bf16.mxu0 0
      %3404 = vmatpush1.bf16.msra.mxu0 0
      %3405 = vmatprep.mubr.bf16.mxu0 0
      %3406 = vmatmul.mubr.bf16.gmra.mrb[0].mxu0 %v3322
      %v3407 = vpop.f32.mrb[0].mxu0
      %v3408 = vadd.f32 %v3303, %v3407
      %v3409 = vpop.f32.mrb[0].mxu0
      %v3410 = vpop.f32.mrb[0].mxu0
      %v3411 = vadd.f32 %v3303, %v3410
      %v3412 = vpop.f32.mrb[0].mxu0
      %3413 = vmatprep.mubr.bf16.mxu0 0
      %3414 = vmatmul.mubr.bf16.gmra.mrb[0].mxu0 %v3325
      %v3415 = vpop.f32.mrb[0].mxu0
      %v3416 = vadd.f32 %v3303, %v3415
      %v3417 = vpop.f32.mrb[0].mxu0
      %v3418 = vpop.f32.mrb[0].mxu0
      %v3419 = vadd.f32 %v3303, %v3418
      %v3420 = vpop.f32.mrb[0].mxu0
      %3421 = vmatprep.mubr.bf16.mxu0 0
      %3422 = vmatmul.mubr.bf16.gmra.mrb[0].mxu0 %v3328
      %v3423 = vpop.f32.mrb[0].mxu0
      %v3424 = vadd.f32 %v3303, %v3423
      %v3425 = vpop.f32.mrb[0].mxu0
      %v3426 = vpop.f32.mrb[0].mxu0
      %v3427 = vadd.f32 %v3303, %v3426
      %v3428 = vpop.f32.mrb[0].mxu0
      %3429 = vmatprep.mubr.bf16.mxu0 0
      %3430 = vmatmul.mubr.bf16.gmra.mrb[0].mxu0 %v3331
      %v3431 = vpop.f32.mrb[0].mxu0
      %v3432 = vadd.f32 %v3303, %v3431
      %v3433 = vpop.f32.mrb[0].mxu0
      %v3434 = vpop.f32.mrb[0].mxu0
      %v3435 = vadd.f32 %v3303, %v3434
      %v3436 = vpop.f32.mrb[0].mxu0
      %3437 = vmatprep.mubr.bf16.mxu0 0
      %3438 = vmatmul.mubr.bf16.gmra.mrb[0].mxu0 %v3334
      %v3439 = vpop.f32.mrb[0].mxu0
      %v3440 = vadd.f32 %v3303, %v3439
      %v3441 = vpop.f32.mrb[0].mxu0
      %v3442 = vpop.f32.mrb[0].mxu0
      %v3443 = vadd.f32 %v3303, %v3442
      %v3444 = vpop.f32.mrb[0].mxu0
      %3445 = vmatprep.mubr.bf16.mxu0 0
      %3446 = vmatmul.mubr.bf16.gmra.mrb[0].mxu0 %v3337
      %v3447 = vpop.f32.mrb[0].mxu0
      %v3448 = vadd.f32 %v3303, %v3447
      %v3449 = vpop.f32.mrb[0].mxu0
      %v3450 = vpop.f32.mrb[0].mxu0
      %v3451 = vadd.f32 %v3303, %v3450
      %v3452 = vpop.f32.mrb[0].mxu0
      %3453 = vmatprep.mubr.bf16.mxu0 0
      %3454 = vmatmul.mubr.bf16.gmra.mrb[0].mxu0 %v3340
      %v3455 = vpop.f32.mrb[0].mxu0
      %v3456 = vadd.f32 %v3303, %v3455
      %v3457 = vpop.f32.mrb[0].mxu0
      %v3458 = vpop.f32.mrb[0].mxu0
      %v3459 = vadd.f32 %v3303, %v3458
      %v3460 = vpop.f32.mrb[0].mxu0
      %3461 = vmatprep.mubr.bf16.mxu0 0
      %3462 = vmatmul.mubr.bf16.gmra.mrb[0].mxu0 %v3343
      %v3463 = vpop.f32.mrb[0].mxu0
      %v3464 = vadd.f32 %v3303, %v3463
      %v3465 = vpop.f32.mrb[0].mxu0
      %v3466 = vpop.f32.mrb[0].mxu0
      %v3467 = vadd.f32 %v3303, %v3466
      %v3468 = vpop.f32.mrb[0].mxu0
      %3469 = vmatprep.mubr.bf16.mxu0 0
      %3470 = vmatmul.mubr.bf16.gmra.mrb[0].mxu0 %v3346
      %v3471 = vpop.f32.mrb[0].mxu0
      %v3472 = vadd.f32 %v3303, %v3471
      %v3473 = vpop.f32.mrb[0].mxu0
      %v3474 = vpop.f32.mrb[0].mxu0
      %v3475 = vadd.f32 %v3303, %v3474
      %v3476 = vpop.f32.mrb[0].mxu0
      %3477 = vmatprep.mubr.bf16.mxu0 0
      %3478 = vmatmul.mubr.bf16.gmra.mrb[0].mxu0 %v3349
      %v3479 = vpop.f32.mrb[0].mxu0
      %v3480 = vadd.f32 %v3303, %v3479
      %v3481 = vpop.f32.mrb[0].mxu0
      %v3482 = vpop.f32.mrb[0].mxu0
      %v3483 = vadd.f32 %v3303, %v3482
      %v3484 = vpop.f32.mrb[0].mxu0
      %3485 = vmatprep.mubr.bf16.mxu0 0
      %3486 = vmatmul.mubr.bf16.gmra.mrb[0].mxu0 %v3352
      %v3487 = vpop.f32.mrb[0].mxu0
      %v3488 = vadd.f32 %v3303, %v3487
      %v3489 = vpop.f32.mrb[0].mxu0
      %v3490 = vpop.f32.mrb[0].mxu0
      %v3491 = vadd.f32 %v3303, %v3490
      %v3492 = vpop.f32.mrb[0].mxu0
      %3493 = vmatprep.mubr.bf16.mxu0 0
      %3494 = vmatmul.mubr.bf16.gmra.mrb[0].mxu0 %v3355
      %v3495 = vpop.f32.mrb[0].mxu0
      %v3496 = vadd.f32 %v3303, %v3495
      %v3497 = vpop.f32.mrb[0].mxu0
      %v3498 = vpop.f32.mrb[0].mxu0
      %v3499 = vadd.f32 %v3303, %v3498
      %v3500 = vpop.f32.mrb[0].mxu0
      %3501 = vmatprep.mubr.bf16.mxu0 0
      %3502 = vmatmul.mubr.bf16.gmra.mrb[0].mxu0 %v3358
      %v3503 = vpop.f32.mrb[0].mxu0
      %v3504 = vadd.f32 %v3303, %v3503
      %v3505 = vpop.f32.mrb[0].mxu0
      %v3506 = vpop.f32.mrb[0].mxu0
      %v3507 = vadd.f32 %v3303, %v3506
      %v3508 = vpop.f32.mrb[0].mxu0
      %3509 = vmatprep.mubr.bf16.mxu0 0
      %3510 = vmatmul.mubr.bf16.gmra.mrb[0].mxu0 %v3361
      %v3511 = vpop.f32.mrb[0].mxu0
      %v3512 = vadd.f32 %v3303, %v3511
      %v3513 = vpop.f32.mrb[0].mxu0
      %v3514 = vpop.f32.mrb[0].mxu0
      %v3515 = vadd.f32 %v3303, %v3514
      %v3516 = vpop.f32.mrb[0].mxu0
      %3517 = vmatprep.mubr.bf16.mxu0 0
      %3518 = vmatmul.mubr.bf16.gmra.mrb[0].mxu0 %v3364
      %v3519 = vpop.f32.mrb[0].mxu0
      %v3520 = vadd.f32 %v3303, %v3519
      %v3521 = vpop.f32.mrb[0].mxu0
      %v3522 = vpop.f32.mrb[0].mxu0
      %v3523 = vadd.f32 %v3303, %v3522
      %v3524 = vpop.f32.mrb[0].mxu0
      %3525 = vmatprep.mubr.bf16.mxu0 0
      %3526 = vmatmul.mubr.bf16.gmra.mrb[0].mxu0 %v3367
      %v3527 = vpop.f32.mrb[0].mxu0
      %v3528 = vadd.f32 %v3303, %v3527
      %v3529 = vpop.f32.mrb[0].mxu0
      %v3530 = vpop.f32.mrb[0].mxu0
      %v3531 = vadd.f32 %v3303, %v3530
      %v3532 = vpop.f32.mrb[0].mxu0
      %3533 = vdwg.mxu0
      %v3534 = vmax.f32 %v3408, 0.0
      %v3535 = vmax.f32 %v3411, 0.0
      %v3536 = vmax.f32 %v3416, 0.0
      %v3537 = vmax.f32 %v3419, 0.0
      %v3538 = vmax.f32 %v3424, 0.0
      %v3539 = vmax.f32 %v3427, 0.0
      %v3540 = vmax.f32 %v3432, 0.0
      %v3541 = vmax.f32 %v3435, 0.0
      %v3542 = vmax.f32 %v3440, 0.0
      %v3543 = vmax.f32 %v3443, 0.0
      %v3544 = vmax.f32 %v3448, 0.0
      %v3545 = vmax.f32 %v3451, 0.0
      %v3546 = vmax.f32 %v3456, 0.0
      %v3547 = vmax.f32 %v3459, 0.0
      %v3548 = vmax.f32 %v3464, 0.0
      %v3549 = vmax.f32 %v3467, 0.0
      %v3550 = vmax.f32 %v3472, 0.0
      %v3551 = vmax.f32 %v3475, 0.0
      %v3552 = vmax.f32 %v3480, 0.0
      %v3553 = vmax.f32 %v3483, 0.0
      %v3554 = vmax.f32 %v3488, 0.0
      %v3555 = vmax.f32 %v3491, 0.0
      %v3556 = vmax.f32 %v3496, 0.0
      %v3557 = vmax.f32 %v3499, 0.0
      %v3558 = vmax.f32 %v3504, 0.0
      %v3559 = vmax.f32 %v3507, 0.0
      %v3560 = vmax.f32 %v3512, 0.0
      %v3561 = vmax.f32 %v3515, 0.0
      %v3562 = vmax.f32 %v3520, 0.0
      %v3563 = vmax.f32 %v3523, 0.0
      %v3564 = vmax.f32 %v3528, 0.0
      %v3565 = vmax.f32 %v3531, 0.0
      %v3566 = vmax.f32 %v3534, %v3536
      %v3567 = vmax.f32 %v3535, %v3537
      %v3568 = vmax.f32 %v3538, %v3540
      %v3569 = vmax.f32 %v3539, %v3541
      %v3570 = vmax.f32 %v3542, %v3544
      %v3571 = vmax.f32 %v3543, %v3545
      %v3572 = vmax.f32 %v3546, %v3548
      %v3573 = vmax.f32 %v3547, %v3549
      %v3574 = vmax.f32 %v3550, %v3552
      %v3575 = vmax.f32 %v3551, %v3553
      %v3576 = vmax.f32 %v3554, %v3556
      %v3577 = vmax.f32 %v3555, %v3557
      %v3578 = vmax.f32 %v3558, %v3560
      %v3579 = vmax.f32 %v3559, %v3561
      %v3580 = vmax.f32 %v3562, %v3564
      %v3581 = vmax.f32 %v3563, %v3565
      %v3598 = vcombine.high %v3566, %v3566
      %v3600 = vunpack.c.l.s4 1983009808
      %v3601 = vunpack.c.0.s8 %v3600
      %v3602 = vlaneseq
      %v3603 = vshrl.u32 %v3602, 7
      %v3604 = vsub.s32 %v3601, %v3603
      %v3605 = vrot.slane %v3566, %v3604
      %v3607 = vunpack.c.l.s4 1983009808
      %v3608 = vunpack.c.0.s8 %v3607
      %v3609 = vlaneseq
      %v3610 = vshrl.u32 %v3609, 7
      %v3611 = vsub.s32 %v3608, %v3610
      %v3612 = vrot.slane %v3598, %v3611
      %v3613 = vcombine.high %v3605, %v3605
      %v3614 = vcombine.high %v3612, %v3612
      %v3615 = vcombine.high %v3567, %v3567
      %v3617 = vunpack.c.l.s4 1983009808
      %v3618 = vunpack.c.0.s8 %v3617
      %v3619 = vlaneseq
      %v3620 = vshrl.u32 %v3619, 7
      %v3621 = vsub.s32 %v3618, %v3620
      %v3622 = vrot.slane %v3567, %v3621
      %v3624 = vunpack.c.l.s4 1983009808
      %v3625 = vunpack.c.0.s8 %v3624
      %v3626 = vlaneseq
      %v3627 = vshrl.u32 %v3626, 7
      %v3628 = vsub.s32 %v3625, %v3627
      %v3629 = vrot.slane %v3615, %v3628
      %v3630 = vcombine.high %v3622, %v3622
      %v3631 = vcombine.high %v3629, %v3629
      %v3632 = vcombine.high %v3568, %v3568
      %v3634 = vunpack.c.l.s4 1983009808
      %v3635 = vunpack.c.0.s8 %v3634
      %v3636 = vlaneseq
      %v3637 = vshrl.u32 %v3636, 7
      %v3638 = vsub.s32 %v3635, %v3637
      %v3639 = vrot.slane %v3568, %v3638
      %v3641 = vunpack.c.l.s4 1983009808
      %v3642 = vunpack.c.0.s8 %v3641
      %v3643 = vlaneseq
      %v3644 = vshrl.u32 %v3643, 7
      %v3645 = vsub.s32 %v3642, %v3644
      %v3646 = vrot.slane %v3632, %v3645
      %v3647 = vcombine.high %v3639, %v3639
      %v3648 = vcombine.high %v3646, %v3646
      %v3649 = vcombine.high %v3569, %v3569
      %v3651 = vunpack.c.l.s4 1983009808
      %v3652 = vunpack.c.0.s8 %v3651
      %v3653 = vlaneseq
      %v3654 = vshrl.u32 %v3653, 7
      %v3655 = vsub.s32 %v3652, %v3654
      %v3656 = vrot.slane %v3569, %v3655
      %v3658 = vunpack.c.l.s4 1983009808
      %v3659 = vunpack.c.0.s8 %v3658
      %v3660 = vlaneseq
      %v3661 = vshrl.u32 %v3660, 7
      %v3662 = vsub.s32 %v3659, %v3661
      %v3663 = vrot.slane %v3649, %v3662
      %v3664 = vcombine.high %v3656, %v3656
      %v3665 = vcombine.high %v3663, %v3663
      %v3666 = vcombine.high %v3570, %v3570
      %v3668 = vunpack.c.l.s4 1983009808
      %v3669 = vunpack.c.0.s8 %v3668
      %v3670 = vlaneseq
      %v3671 = vshrl.u32 %v3670, 7
      %v3672 = vsub.s32 %v3669, %v3671
      %v3673 = vrot.slane %v3570, %v3672
      %v3675 = vunpack.c.l.s4 1983009808
      %v3676 = vunpack.c.0.s8 %v3675
      %v3677 = vlaneseq
      %v3678 = vshrl.u32 %v3677, 7
      %v3679 = vsub.s32 %v3676, %v3678
      %v3680 = vrot.slane %v3666, %v3679
      %v3681 = vcombine.high %v3673, %v3673
      %v3682 = vcombine.high %v3680, %v3680
      %v3683 = vcombine.high %v3571, %v3571
      %v3685 = vunpack.c.l.s4 1983009808
      %v3686 = vunpack.c.0.s8 %v3685
      %v3687 = vlaneseq
      %v3688 = vshrl.u32 %v3687, 7
      %v3689 = vsub.s32 %v3686, %v3688
      %v3690 = vrot.slane %v3571, %v3689
      %v3692 = vunpack.c.l.s4 1983009808
      %v3693 = vunpack.c.0.s8 %v3692
      %v3694 = vlaneseq
      %v3695 = vshrl.u32 %v3694, 7
      %v3696 = vsub.s32 %v3693, %v3695
      %v3697 = vrot.slane %v3683, %v3696
      %v3698 = vcombine.high %v3690, %v3690
      %v3699 = vcombine.high %v3697, %v3697
      %v3700 = vcombine.high %v3572, %v3572
      %v3702 = vunpack.c.l.s4 1983009808
      %v3703 = vunpack.c.0.s8 %v3702
      %v3704 = vlaneseq
      %v3705 = vshrl.u32 %v3704, 7
      %v3706 = vsub.s32 %v3703, %v3705
      %v3707 = vrot.slane %v3572, %v3706
      %v3709 = vunpack.c.l.s4 1983009808
      %v3710 = vunpack.c.0.s8 %v3709
      %v3711 = vlaneseq
      %v3712 = vshrl.u32 %v3711, 7
      %v3713 = vsub.s32 %v3710, %v3712
      %v3714 = vrot.slane %v3700, %v3713
      %v3715 = vcombine.high %v3707, %v3707
      %v3716 = vcombine.high %v3714, %v3714
      %v3717 = vcombine.high %v3573, %v3573
      %v3719 = vunpack.c.l.s4 1983009808
      %v3720 = vunpack.c.0.s8 %v3719
      %v3721 = vlaneseq
      %v3722 = vshrl.u32 %v3721, 7
      %v3723 = vsub.s32 %v3720, %v3722
      %v3724 = vrot.slane %v3573, %v3723
      %v3726 = vunpack.c.l.s4 1983009808
      %v3727 = vunpack.c.0.s8 %v3726
      %v3728 = vlaneseq
      %v3729 = vshrl.u32 %v3728, 7
      %v3730 = vsub.s32 %v3727, %v3729
      %v3731 = vrot.slane %v3717, %v3730
      %v3732 = vcombine.high %v3724, %v3724
      %v3733 = vcombine.high %v3731, %v3731
      %v3734 = vcombine.high %v3574, %v3574
      %v3736 = vunpack.c.l.s4 1983009808
      %v3737 = vunpack.c.0.s8 %v3736
      %v3738 = vlaneseq
      %v3739 = vshrl.u32 %v3738, 7
      %v3740 = vsub.s32 %v3737, %v3739
      %v3741 = vrot.slane %v3574, %v3740
      %v3743 = vunpack.c.l.s4 1983009808
      %v3744 = vunpack.c.0.s8 %v3743
      %v3745 = vlaneseq
      %v3746 = vshrl.u32 %v3745, 7
      %v3747 = vsub.s32 %v3744, %v3746
      %v3748 = vrot.slane %v3734, %v3747
      %v3749 = vcombine.high %v3741, %v3741
      %v3750 = vcombine.high %v3748, %v3748
      %v3751 = vcombine.high %v3575, %v3575
      %v3753 = vunpack.c.l.s4 1983009808
      %v3754 = vunpack.c.0.s8 %v3753
      %v3755 = vlaneseq
      %v3756 = vshrl.u32 %v3755, 7
      %v3757 = vsub.s32 %v3754, %v3756
      %v3758 = vrot.slane %v3575, %v3757
      %v3760 = vunpack.c.l.s4 1983009808
      %v3761 = vunpack.c.0.s8 %v3760
      %v3762 = vlaneseq
      %v3763 = vshrl.u32 %v3762, 7
      %v3764 = vsub.s32 %v3761, %v3763
      %v3765 = vrot.slane %v3751, %v3764
      %v3766 = vcombine.high %v3758, %v3758
      %v3767 = vcombine.high %v3765, %v3765
      %v3768 = vcombine.high %v3576, %v3576
      %v3770 = vunpack.c.l.s4 1983009808
      %v3771 = vunpack.c.0.s8 %v3770
      %v3772 = vlaneseq
      %v3773 = vshrl.u32 %v3772, 7
      %v3774 = vsub.s32 %v3771, %v3773
      %v3775 = vrot.slane %v3576, %v3774
      %v3777 = vunpack.c.l.s4 1983009808
      %v3778 = vunpack.c.0.s8 %v3777
      %v3779 = vlaneseq
      %v3780 = vshrl.u32 %v3779, 7
      %v3781 = vsub.s32 %v3778, %v3780
      %v3782 = vrot.slane %v3768, %v3781
      %v3783 = vcombine.high %v3775, %v3775
      %v3784 = vcombine.high %v3782, %v3782
      %v3785 = vcombine.high %v3577, %v3577
      %v3787 = vunpack.c.l.s4 1983009808
      %v3788 = vunpack.c.0.s8 %v3787
      %v3789 = vlaneseq
      %v3790 = vshrl.u32 %v3789, 7
      %v3791 = vsub.s32 %v3788, %v3790
      %v3792 = vrot.slane %v3577, %v3791
      %v3794 = vunpack.c.l.s4 1983009808
      %v3795 = vunpack.c.0.s8 %v3794
      %v3796 = vlaneseq
      %v3797 = vshrl.u32 %v3796, 7
      %v3798 = vsub.s32 %v3795, %v3797
      %v3799 = vrot.slane %v3785, %v3798
      %v3800 = vcombine.high %v3792, %v3792
      %v3801 = vcombine.high %v3799, %v3799
      %v3802 = vcombine.high %v3578, %v3578
      %v3804 = vunpack.c.l.s4 1983009808
      %v3805 = vunpack.c.0.s8 %v3804
      %v3806 = vlaneseq
      %v3807 = vshrl.u32 %v3806, 7
      %v3808 = vsub.s32 %v3805, %v3807
      %v3809 = vrot.slane %v3578, %v3808
      %v3811 = vunpack.c.l.s4 1983009808
      %v3812 = vunpack.c.0.s8 %v3811
      %v3813 = vlaneseq
      %v3814 = vshrl.u32 %v3813, 7
      %v3815 = vsub.s32 %v3812, %v3814
      %v3816 = vrot.slane %v3802, %v3815
      %v3817 = vcombine.high %v3809, %v3809
      %v3818 = vcombine.high %v3816, %v3816
      %v3819 = vcombine.high %v3579, %v3579
      %v3821 = vunpack.c.l.s4 1983009808
      %v3822 = vunpack.c.0.s8 %v3821
      %v3823 = vlaneseq
      %v3824 = vshrl.u32 %v3823, 7
      %v3825 = vsub.s32 %v3822, %v3824
      %v3826 = vrot.slane %v3579, %v3825
      %v3828 = vunpack.c.l.s4 1983009808
      %v3829 = vunpack.c.0.s8 %v3828
      %v3830 = vlaneseq
      %v3831 = vshrl.u32 %v3830, 7
      %v3832 = vsub.s32 %v3829, %v3831
      %v3833 = vrot.slane %v3819, %v3832
      %v3834 = vcombine.high %v3826, %v3826
      %v3835 = vcombine.high %v3833, %v3833
      %v3836 = vcombine.high %v3580, %v3580
      %v3838 = vunpack.c.l.s4 1983009808
      %v3839 = vunpack.c.0.s8 %v3838
      %v3840 = vlaneseq
      %v3841 = vshrl.u32 %v3840, 7
      %v3842 = vsub.s32 %v3839, %v3841
      %v3843 = vrot.slane %v3580, %v3842
      %v3845 = vunpack.c.l.s4 1983009808
      %v3846 = vunpack.c.0.s8 %v3845
      %v3847 = vlaneseq
      %v3848 = vshrl.u32 %v3847, 7
      %v3849 = vsub.s32 %v3846, %v3848
      %v3850 = vrot.slane %v3836, %v3849
      %v3851 = vcombine.high %v3843, %v3843
      %v3852 = vcombine.high %v3850, %v3850
      %v3853 = vcombine.high %v3581, %v3581
      %v3855 = vunpack.c.l.s4 1983009808
      %v3856 = vunpack.c.0.s8 %v3855
      %v3857 = vlaneseq
      %v3858 = vshrl.u32 %v3857, 7
      %v3859 = vsub.s32 %v3856, %v3858
      %v3860 = vrot.slane %v3581, %v3859
      %v3862 = vunpack.c.l.s4 1983009808
      %v3863 = vunpack.c.0.s8 %v3862
      %v3864 = vlaneseq
      %v3865 = vshrl.u32 %v3864, 7
      %v3866 = vsub.s32 %v3863, %v3865
      %v3867 = vrot.slane %v3853, %v3866
      %v3868 = vcombine.high %v3860, %v3860
      %v3869 = vcombine.high %v3867, %v3867
      %v3934 = vrot.slane %v3605, 7
      %v3935 = vrot.slane %v3934, 2
      %v3936 = vrot.slane %v3613, 7
      %v3937 = vrot.slane %v3936, 2
      %v3938 = vrot.slane %v3612, 7
      %v3939 = vrot.slane %v3938, 2
      %v3940 = vrot.slane %v3614, 7
      %v3941 = vrot.slane %v3940, 2
      %v3942 = vrot.slane %v3622, 7
      %v3943 = vrot.slane %v3942, 2
      %v3944 = vrot.slane %v3630, 7
      %v3945 = vrot.slane %v3944, 2
      %v3946 = vrot.slane %v3629, 7
      %v3947 = vrot.slane %v3946, 2
      %v3948 = vrot.slane %v3631, 7
      %v3949 = vrot.slane %v3948, 2
      %v3950 = vrot.slane %v3639, 7
      %v3951 = vrot.slane %v3950, 2
      %v3952 = vrot.slane %v3647, 7
      %v3953 = vrot.slane %v3952, 2
      %v3954 = vrot.slane %v3646, 7
      %v3955 = vrot.slane %v3954, 2
      %v3956 = vrot.slane %v3648, 7
      %v3957 = vrot.slane %v3956, 2
      %v3958 = vrot.slane %v3656, 7
      %v3959 = vrot.slane %v3958, 2
      %v3960 = vrot.slane %v3664, 7
      %v3961 = vrot.slane %v3960, 2
      %v3962 = vrot.slane %v3663, 7
      %v3963 = vrot.slane %v3962, 2
      %v3964 = vrot.slane %v3665, 7
      %v3965 = vrot.slane %v3964, 2
      %v3966 = vrot.slane %v3673, 7
      %v3967 = vrot.slane %v3966, 2
      %v3968 = vrot.slane %v3681, 7
      %v3969 = vrot.slane %v3968, 2
      %v3970 = vrot.slane %v3680, 7
      %v3971 = vrot.slane %v3970, 2
      %v3972 = vrot.slane %v3682, 7
      %v3973 = vrot.slane %v3972, 2
      %v3974 = vrot.slane %v3690, 7
      %v3975 = vrot.slane %v3974, 2
      %v3976 = vrot.slane %v3698, 7
      %v3977 = vrot.slane %v3976, 2
      %v3978 = vrot.slane %v3697, 7
      %v3979 = vrot.slane %v3978, 2
      %v3980 = vrot.slane %v3699, 7
      %v3981 = vrot.slane %v3980, 2
      %v3982 = vrot.slane %v3707, 7
      %v3983 = vrot.slane %v3982, 2
      %v3984 = vrot.slane %v3715, 7
      %v3985 = vrot.slane %v3984, 2
      %v3986 = vrot.slane %v3714, 7
      %v3987 = vrot.slane %v3986, 2
      %v3988 = vrot.slane %v3716, 7
      %v3989 = vrot.slane %v3988, 2
      %v3990 = vrot.slane %v3724, 7
      %v3991 = vrot.slane %v3990, 2
      %v3992 = vrot.slane %v3732, 7
      %v3993 = vrot.slane %v3992, 2
      %v3994 = vrot.slane %v3731, 7
      %v3995 = vrot.slane %v3994, 2
      %v3996 = vrot.slane %v3733, 7
      %v3997 = vrot.slane %v3996, 2
      %v3998 = vrot.slane %v3741, 7
      %v3999 = vrot.slane %v3998, 2
      %v4000 = vrot.slane %v3749, 7
      %v4001 = vrot.slane %v4000, 2
      %v4002 = vrot.slane %v3748, 7
      %v4003 = vrot.slane %v4002, 2
      %v4004 = vrot.slane %v3750, 7
      %v4005 = vrot.slane %v4004, 2
      %v4006 = vrot.slane %v3758, 7
      %v4007 = vrot.slane %v4006, 2
      %v4008 = vrot.slane %v3766, 7
      %v4009 = vrot.slane %v4008, 2
      %v4010 = vrot.slane %v3765, 7
      %v4011 = vrot.slane %v4010, 2
      %v4012 = vrot.slane %v3767, 7
      %v4013 = vrot.slane %v4012, 2
      %v4014 = vrot.slane %v3775, 7
      %v4015 = vrot.slane %v4014, 2
      %v4016 = vrot.slane %v3783, 7
      %v4017 = vrot.slane %v4016, 2
      %v4018 = vrot.slane %v3782, 7
      %v4019 = vrot.slane %v4018, 2
      %v4020 = vrot.slane %v3784, 7
      %v4021 = vrot.slane %v4020, 2
      %v4022 = vrot.slane %v3792, 7
      %v4023 = vrot.slane %v4022, 2
      %v4024 = vrot.slane %v3800, 7
      %v4025 = vrot.slane %v4024, 2
      %v4026 = vrot.slane %v3799, 7
      %v4027 = vrot.slane %v4026, 2
      %v4028 = vrot.slane %v3801, 7
      %v4029 = vrot.slane %v4028, 2
      %v4030 = vrot.slane %v3809, 7
      %v4031 = vrot.slane %v4030, 2
      %v4032 = vrot.slane %v3817, 7
      %v4033 = vrot.slane %v4032, 2
      %v4034 = vrot.slane %v3816, 7
      %v4035 = vrot.slane %v4034, 2
      %v4036 = vrot.slane %v3818, 7
      %v4037 = vrot.slane %v4036, 2
      %v4038 = vrot.slane %v3826, 7
      %v4039 = vrot.slane %v4038, 2
      %v4040 = vrot.slane %v3834, 7
      %v4041 = vrot.slane %v4040, 2
      %v4042 = vrot.slane %v3833, 7
      %v4043 = vrot.slane %v4042, 2
      %v4044 = vrot.slane %v3835, 7
      %v4045 = vrot.slane %v4044, 2
      %v4046 = vrot.slane %v3843, 7
      %v4047 = vrot.slane %v4046, 2
      %v4048 = vrot.slane %v3851, 7
      %v4049 = vrot.slane %v4048, 2
      %v4050 = vrot.slane %v3850, 7
      %v4051 = vrot.slane %v4050, 2
      %v4052 = vrot.slane %v3852, 7
      %v4053 = vrot.slane %v4052, 2
      %v4054 = vrot.slane %v3860, 7
      %v4055 = vrot.slane %v4054, 2
      %v4056 = vrot.slane %v3868, 7
      %v4057 = vrot.slane %v4056, 2
      %v4058 = vrot.slane %v3867, 7
      %v4059 = vrot.slane %v4058, 2
      %v4060 = vrot.slane %v3869, 7
      %v4061 = vrot.slane %v4060, 2
      %v4126 = vmax.f32 %v3605, %v3935
      %v4127 = vmax.f32 %v3613, %v3937
      %v4128 = vmax.f32 %v3612, %v3939
      %v4129 = vmax.f32 %v3614, %v3941
      %v4130 = vmax.f32 %v3622, %v3943
      %v4131 = vmax.f32 %v3630, %v3945
      %v4132 = vmax.f32 %v3629, %v3947
      %v4133 = vmax.f32 %v3631, %v3949
      %v4134 = vmax.f32 %v3639, %v3951
      %v4135 = vmax.f32 %v3647, %v3953
      %v4136 = vmax.f32 %v3646, %v3955
      %v4137 = vmax.f32 %v3648, %v3957
      %v4138 = vmax.f32 %v3656, %v3959
      %v4139 = vmax.f32 %v3664, %v3961
      %v4140 = vmax.f32 %v3663, %v3963
      %v4141 = vmax.f32 %v3665, %v3965
      %v4142 = vmax.f32 %v3673, %v3967
      %v4143 = vmax.f32 %v3681, %v3969
      %v4144 = vmax.f32 %v3680, %v3971
      %v4145 = vmax.f32 %v3682, %v3973
      %v4146 = vmax.f32 %v3690, %v3975
      %v4147 = vmax.f32 %v3698, %v3977
      %v4148 = vmax.f32 %v3697, %v3979
      %v4149 = vmax.f32 %v3699, %v3981
      %v4150 = vmax.f32 %v3707, %v3983
      %v4151 = vmax.f32 %v3715, %v3985
      %v4152 = vmax.f32 %v3714, %v3987
      %v4153 = vmax.f32 %v3716, %v3989
      %v4154 = vmax.f32 %v3724, %v3991
      %v4155 = vmax.f32 %v3732, %v3993
      %v4156 = vmax.f32 %v3731, %v3995
      %v4157 = vmax.f32 %v3733, %v3997
      %v4158 = vmax.f32 %v3741, %v3999
      %v4159 = vmax.f32 %v3749, %v4001
      %v4160 = vmax.f32 %v3748, %v4003
      %v4161 = vmax.f32 %v3750, %v4005
      %v4162 = vmax.f32 %v3758, %v4007
      %v4163 = vmax.f32 %v3766, %v4009
      %v4164 = vmax.f32 %v3765, %v4011
      %v4165 = vmax.f32 %v3767, %v4013
      %v4166 = vmax.f32 %v3775, %v4015
      %v4167 = vmax.f32 %v3783, %v4017
      %v4168 = vmax.f32 %v3782, %v4019
      %v4169 = vmax.f32 %v3784, %v4021
      %v4170 = vmax.f32 %v3792, %v4023
      %v4171 = vmax.f32 %v3800, %v4025
      %v4172 = vmax.f32 %v3799, %v4027
      %v4173 = vmax.f32 %v3801, %v4029
      %v4174 = vmax.f32 %v3809, %v4031
      %v4175 = vmax.f32 %v3817, %v4033
      %v4176 = vmax.f32 %v3816, %v4035
      %v4177 = vmax.f32 %v3818, %v4037
      %v4178 = vmax.f32 %v3826, %v4039
      %v4179 = vmax.f32 %v3834, %v4041
      %v4180 = vmax.f32 %v3833, %v4043
      %v4181 = vmax.f32 %v3835, %v4045
      %v4182 = vmax.f32 %v3843, %v4047
      %v4183 = vmax.f32 %v3851, %v4049
      %v4184 = vmax.f32 %v3850, %v4051
      %v4185 = vmax.f32 %v3852, %v4053
      %v4186 = vmax.f32 %v3860, %v4055
      %v4187 = vmax.f32 %v3868, %v4057
      %v4188 = vmax.f32 %v3867, %v4059
      %v4189 = vmax.f32 %v3869, %v4061
      %v4254 = vlaneseq
      %v4255 = vshrl.u32 %v4254, 7
      %v4256 = vsub.s32 0, %v4255
      %v4257 = vrot.slane %v4126, %v4256
      %v4258 = vlaneseq
      %v4259 = vshrl.u32 %v4258, 7
      %v4260 = vsub.s32 0, %v4259
      %v4261 = vrot.slane %v4127, %v4260
      %v4262 = vlaneseq
      %v4263 = vshrl.u32 %v4262, 7
      %v4264 = vsub.s32 0, %v4263
      %v4265 = vrot.slane %v4128, %v4264
      %v4266 = vlaneseq
      %v4267 = vshrl.u32 %v4266, 7
      %v4268 = vsub.s32 0, %v4267
      %v4269 = vrot.slane %v4129, %v4268
      %v4270 = vlaneseq
      %v4271 = vshrl.u32 %v4270, 7
      %v4272 = vsub.s32 0, %v4271
      %v4273 = vrot.slane %v4130, %v4272
      %v4274 = vlaneseq
      %v4275 = vshrl.u32 %v4274, 7
      %v4276 = vsub.s32 0, %v4275
      %v4277 = vrot.slane %v4131, %v4276
      %v4278 = vlaneseq
      %v4279 = vshrl.u32 %v4278, 7
      %v4280 = vsub.s32 0, %v4279
      %v4281 = vrot.slane %v4132, %v4280
      %v4282 = vlaneseq
      %v4283 = vshrl.u32 %v4282, 7
      %v4284 = vsub.s32 0, %v4283
      %v4285 = vrot.slane %v4133, %v4284
      %v4286 = vlaneseq
      %v4287 = vshrl.u32 %v4286, 7
      %v4288 = vsub.s32 0, %v4287
      %v4289 = vrot.slane %v4134, %v4288
      %v4290 = vlaneseq
      %v4291 = vshrl.u32 %v4290, 7
      %v4292 = vsub.s32 0, %v4291
      %v4293 = vrot.slane %v4135, %v4292
      %v4294 = vlaneseq
      %v4295 = vshrl.u32 %v4294, 7
      %v4296 = vsub.s32 0, %v4295
      %v4297 = vrot.slane %v4136, %v4296
      %v4298 = vlaneseq
      %v4299 = vshrl.u32 %v4298, 7
      %v4300 = vsub.s32 0, %v4299
      %v4301 = vrot.slane %v4137, %v4300
      %v4302 = vlaneseq
      %v4303 = vshrl.u32 %v4302, 7
      %v4304 = vsub.s32 0, %v4303
      %v4305 = vrot.slane %v4138, %v4304
      %v4306 = vlaneseq
      %v4307 = vshrl.u32 %v4306, 7
      %v4308 = vsub.s32 0, %v4307
      %v4309 = vrot.slane %v4139, %v4308
      %v4310 = vlaneseq
      %v4311 = vshrl.u32 %v4310, 7
      %v4312 = vsub.s32 0, %v4311
      %v4313 = vrot.slane %v4140, %v4312
      %v4314 = vlaneseq
      %v4315 = vshrl.u32 %v4314, 7
      %v4316 = vsub.s32 0, %v4315
      %v4317 = vrot.slane %v4141, %v4316
      %v4318 = vlaneseq
      %v4319 = vshrl.u32 %v4318, 7
      %v4320 = vsub.s32 0, %v4319
      %v4321 = vrot.slane %v4142, %v4320
      %v4322 = vlaneseq
      %v4323 = vshrl.u32 %v4322, 7
      %v4324 = vsub.s32 0, %v4323
      %v4325 = vrot.slane %v4143, %v4324
      %v4326 = vlaneseq
      %v4327 = vshrl.u32 %v4326, 7
      %v4328 = vsub.s32 0, %v4327
      %v4329 = vrot.slane %v4144, %v4328
      %v4330 = vlaneseq
      %v4331 = vshrl.u32 %v4330, 7
      %v4332 = vsub.s32 0, %v4331
      %v4333 = vrot.slane %v4145, %v4332
      %v4334 = vlaneseq
      %v4335 = vshrl.u32 %v4334, 7
      %v4336 = vsub.s32 0, %v4335
      %v4337 = vrot.slane %v4146, %v4336
      %v4338 = vlaneseq
      %v4339 = vshrl.u32 %v4338, 7
      %v4340 = vsub.s32 0, %v4339
      %v4341 = vrot.slane %v4147, %v4340
      %v4342 = vlaneseq
      %v4343 = vshrl.u32 %v4342, 7
      %v4344 = vsub.s32 0, %v4343
      %v4345 = vrot.slane %v4148, %v4344
      %v4346 = vlaneseq
      %v4347 = vshrl.u32 %v4346, 7
      %v4348 = vsub.s32 0, %v4347
      %v4349 = vrot.slane %v4149, %v4348
      %v4350 = vlaneseq
      %v4351 = vshrl.u32 %v4350, 7
      %v4352 = vsub.s32 0, %v4351
      %v4353 = vrot.slane %v4150, %v4352
      %v4354 = vlaneseq
      %v4355 = vshrl.u32 %v4354, 7
      %v4356 = vsub.s32 0, %v4355
      %v4357 = vrot.slane %v4151, %v4356
      %v4358 = vlaneseq
      %v4359 = vshrl.u32 %v4358, 7
      %v4360 = vsub.s32 0, %v4359
      %v4361 = vrot.slane %v4152, %v4360
      %v4362 = vlaneseq
      %v4363 = vshrl.u32 %v4362, 7
      %v4364 = vsub.s32 0, %v4363
      %v4365 = vrot.slane %v4153, %v4364
      %v4366 = vlaneseq
      %v4367 = vshrl.u32 %v4366, 7
      %v4368 = vsub.s32 0, %v4367
      %v4369 = vrot.slane %v4154, %v4368
      %v4370 = vlaneseq
      %v4371 = vshrl.u32 %v4370, 7
      %v4372 = vsub.s32 0, %v4371
      %v4373 = vrot.slane %v4155, %v4372
      %v4374 = vlaneseq
      %v4375 = vshrl.u32 %v4374, 7
      %v4376 = vsub.s32 0, %v4375
      %v4377 = vrot.slane %v4156, %v4376
      %v4378 = vlaneseq
      %v4379 = vshrl.u32 %v4378, 7
      %v4380 = vsub.s32 0, %v4379
      %v4381 = vrot.slane %v4157, %v4380
      %v4382 = vlaneseq
      %v4383 = vshrl.u32 %v4382, 7
      %v4384 = vsub.s32 0, %v4383
      %v4385 = vrot.slane %v4158, %v4384
      %v4386 = vlaneseq
      %v4387 = vshrl.u32 %v4386, 7
      %v4388 = vsub.s32 0, %v4387
      %v4389 = vrot.slane %v4159, %v4388
      %v4390 = vlaneseq
      %v4391 = vshrl.u32 %v4390, 7
      %v4392 = vsub.s32 0, %v4391
      %v4393 = vrot.slane %v4160, %v4392
      %v4394 = vlaneseq
      %v4395 = vshrl.u32 %v4394, 7
      %v4396 = vsub.s32 0, %v4395
      %v4397 = vrot.slane %v4161, %v4396
      %v4398 = vlaneseq
      %v4399 = vshrl.u32 %v4398, 7
      %v4400 = vsub.s32 0, %v4399
      %v4401 = vrot.slane %v4162, %v4400
      %v4402 = vlaneseq
      %v4403 = vshrl.u32 %v4402, 7
      %v4404 = vsub.s32 0, %v4403
      %v4405 = vrot.slane %v4163, %v4404
      %v4406 = vlaneseq
      %v4407 = vshrl.u32 %v4406, 7
      %v4408 = vsub.s32 0, %v4407
      %v4409 = vrot.slane %v4164, %v4408
      %v4410 = vlaneseq
      %v4411 = vshrl.u32 %v4410, 7
      %v4412 = vsub.s32 0, %v4411
      %v4413 = vrot.slane %v4165, %v4412
      %v4414 = vlaneseq
      %v4415 = vshrl.u32 %v4414, 7
      %v4416 = vsub.s32 0, %v4415
      %v4417 = vrot.slane %v4166, %v4416
      %v4418 = vlaneseq
      %v4419 = vshrl.u32 %v4418, 7
      %v4420 = vsub.s32 0, %v4419
      %v4421 = vrot.slane %v4167, %v4420
      %v4422 = vlaneseq
      %v4423 = vshrl.u32 %v4422, 7
      %v4424 = vsub.s32 0, %v4423
      %v4425 = vrot.slane %v4168, %v4424
      %v4426 = vlaneseq
      %v4427 = vshrl.u32 %v4426, 7
      %v4428 = vsub.s32 0, %v4427
      %v4429 = vrot.slane %v4169, %v4428
      %v4430 = vlaneseq
      %v4431 = vshrl.u32 %v4430, 7
      %v4432 = vsub.s32 0, %v4431
      %v4433 = vrot.slane %v4170, %v4432
      %v4434 = vlaneseq
      %v4435 = vshrl.u32 %v4434, 7
      %v4436 = vsub.s32 0, %v4435
      %v4437 = vrot.slane %v4171, %v4436
      %v4438 = vlaneseq
      %v4439 = vshrl.u32 %v4438, 7
      %v4440 = vsub.s32 0, %v4439
      %v4441 = vrot.slane %v4172, %v4440
      %v4442 = vlaneseq
      %v4443 = vshrl.u32 %v4442, 7
      %v4444 = vsub.s32 0, %v4443
      %v4445 = vrot.slane %v4173, %v4444
      %v4446 = vlaneseq
      %v4447 = vshrl.u32 %v4446, 7
      %v4448 = vsub.s32 0, %v4447
      %v4449 = vrot.slane %v4174, %v4448
      %v4450 = vlaneseq
      %v4451 = vshrl.u32 %v4450, 7
      %v4452 = vsub.s32 0, %v4451
      %v4453 = vrot.slane %v4175, %v4452
      %v4454 = vlaneseq
      %v4455 = vshrl.u32 %v4454, 7
      %v4456 = vsub.s32 0, %v4455
      %v4457 = vrot.slane %v4176, %v4456
      %v4458 = vlaneseq
      %v4459 = vshrl.u32 %v4458, 7
      %v4460 = vsub.s32 0, %v4459
      %v4461 = vrot.slane %v4177, %v4460
      %v4462 = vlaneseq
      %v4463 = vshrl.u32 %v4462, 7
      %v4464 = vsub.s32 0, %v4463
      %v4465 = vrot.slane %v4178, %v4464
      %v4466 = vlaneseq
      %v4467 = vshrl.u32 %v4466, 7
      %v4468 = vsub.s32 0, %v4467
      %v4469 = vrot.slane %v4179, %v4468
      %v4470 = vlaneseq
      %v4471 = vshrl.u32 %v4470, 7
      %v4472 = vsub.s32 0, %v4471
      %v4473 = vrot.slane %v4180, %v4472
      %v4474 = vlaneseq
      %v4475 = vshrl.u32 %v4474, 7
      %v4476 = vsub.s32 0, %v4475
      %v4477 = vrot.slane %v4181, %v4476
      %v4478 = vlaneseq
      %v4479 = vshrl.u32 %v4478, 7
      %v4480 = vsub.s32 0, %v4479
      %v4481 = vrot.slane %v4182, %v4480
      %v4482 = vlaneseq
      %v4483 = vshrl.u32 %v4482, 7
      %v4484 = vsub.s32 0, %v4483
      %v4485 = vrot.slane %v4183, %v4484
      %v4486 = vlaneseq
      %v4487 = vshrl.u32 %v4486, 7
      %v4488 = vsub.s32 0, %v4487
      %v4489 = vrot.slane %v4184, %v4488
      %v4490 = vlaneseq
      %v4491 = vshrl.u32 %v4490, 7
      %v4492 = vsub.s32 0, %v4491
      %v4493 = vrot.slane %v4185, %v4492
      %v4494 = vlaneseq
      %v4495 = vshrl.u32 %v4494, 7
      %v4496 = vsub.s32 0, %v4495
      %v4497 = vrot.slane %v4186, %v4496
      %v4498 = vlaneseq
      %v4499 = vshrl.u32 %v4498, 7
      %v4500 = vsub.s32 0, %v4499
      %v4501 = vrot.slane %v4187, %v4500
      %v4502 = vlaneseq
      %v4503 = vshrl.u32 %v4502, 7
      %v4504 = vsub.s32 0, %v4503
      %v4505 = vrot.slane %v4188, %v4504
      %v4506 = vlaneseq
      %v4507 = vshrl.u32 %v4506, 7
      %v4508 = vsub.s32 0, %v4507
      %v4509 = vrot.slane %v4189, %v4508
      %vm4510 = vcmask 1041409
      %v4511 = vsel %vm4510, %v4261, %v4257
      %vm4512 = vcmask 1042434
      %v4513 = vsel %vm4512, %v4265, %v4511
      %vm4514 = vcmask 1043459
      %v4515 = vsel %vm4514, %v4269, %v4513
      %vm4516 = vcmask 1044484
      %v4517 = vsel %vm4516, %v4273, %v4515
      %vm4518 = vcmask 1045509
      %v4519 = vsel %vm4518, %v4277, %v4517
      %vm4520 = vcmask 1046534
      %v4521 = vsel %vm4520, %v4281, %v4519
      %vm4522 = vcmask 1047559
      %v4523 = vsel %vm4522, %v4285, %v4521
      %v4524 = vsel %vm4510, %v4293, %v4289
      %v4525 = vsel %vm4512, %v4297, %v4524
      %v4526 = vsel %vm4514, %v4301, %v4525
      %v4527 = vsel %vm4516, %v4305, %v4526
      %v4528 = vsel %vm4518, %v4309, %v4527
      %v4529 = vsel %vm4520, %v4313, %v4528
      %v4530 = vsel %vm4522, %v4317, %v4529
      %v4531 = vsel %vm4510, %v4325, %v4321
      %v4532 = vsel %vm4512, %v4329, %v4531
      %v4533 = vsel %vm4514, %v4333, %v4532
      %v4534 = vsel %vm4516, %v4337, %v4533
      %v4535 = vsel %vm4518, %v4341, %v4534
      %v4536 = vsel %vm4520, %v4345, %v4535
      %v4537 = vsel %vm4522, %v4349, %v4536
      %v4538 = vsel %vm4510, %v4357, %v4353
      %v4539 = vsel %vm4512, %v4361, %v4538
      %v4540 = vsel %vm4514, %v4365, %v4539
      %v4541 = vsel %vm4516, %v4369, %v4540
      %v4542 = vsel %vm4518, %v4373, %v4541
      %v4543 = vsel %vm4520, %v4377, %v4542
      %v4544 = vsel %vm4522, %v4381, %v4543
      %v4545 = vsel %vm4510, %v4389, %v4385
      %v4546 = vsel %vm4512, %v4393, %v4545
      %v4547 = vsel %vm4514, %v4397, %v4546
      %v4548 = vsel %vm4516, %v4401, %v4547
      %v4549 = vsel %vm4518, %v4405, %v4548
      %v4550 = vsel %vm4520, %v4409, %v4549
      %v4551 = vsel %vm4522, %v4413, %v4550
      %v4552 = vsel %vm4510, %v4421, %v4417
      %v4553 = vsel %vm4512, %v4425, %v4552
      %v4554 = vsel %vm4514, %v4429, %v4553
      %v4555 = vsel %vm4516, %v4433, %v4554
      %v4556 = vsel %vm4518, %v4437, %v4555
      %v4557 = vsel %vm4520, %v4441, %v4556
      %v4558 = vsel %vm4522, %v4445, %v4557
      %v4559 = vsel %vm4510, %v4453, %v4449
      %v4560 = vsel %vm4512, %v4457, %v4559
      %v4561 = vsel %vm4514, %v4461, %v4560
      %v4562 = vsel %vm4516, %v4465, %v4561
      %v4563 = vsel %vm4518, %v4469, %v4562
      %v4564 = vsel %vm4520, %v4473, %v4563
      %v4565 = vsel %vm4522, %v4477, %v4564
      %v4566 = vsel %vm4510, %v4485, %v4481
      %v4567 = vsel %vm4512, %v4489, %v4566
      %v4568 = vsel %vm4514, %v4493, %v4567
      %v4569 = vsel %vm4516, %v4497, %v4568
      %v4570 = vsel %vm4518, %v4501, %v4569
      %v4571 = vsel %vm4520, %v4505, %v4570
      %v4572 = vsel %vm4522, %v4509, %v4571
      %vm4581 = vcmask 64512
      %4582 = vst.msk [vmem:[%s170] sm:$0xff] %vm4581, %v4523
      %4583 = vst.msk [vmem:[%s170 + $0x8] sm:$0xff] %vm4581, %v4530
      %4584 = vst.msk [vmem:[%s170 + $0x10] sm:$0xff] %vm4581, %v4537
      %4585 = vst.msk [vmem:[%s170 + $0x18] sm:$0xff] %vm4581, %v4544
      %4586 = vst.msk [vmem:[%s170 + $0x20] sm:$0xff] %vm4581, %v4551
      %4587 = vst.msk [vmem:[%s170 + $0x28] sm:$0xff] %vm4581, %v4558
      %4588 = vst.msk [vmem:[%s170 + $0x30] sm:$0xff] %vm4581, %v4565
      %4589 = vst.msk [vmem:[%s170 + $0x38] sm:$0xff] %vm4581, %v4572
      %p4590 = scmp.lt.s32.totalorder %s14, 1
      %s4591 = scalar_select %p4590, %s14, 1
      %s4592 = smul.addr %s4591, 8
      %s4593 = smul.addr %s4592, 8
      %s4594 = scalar_lea.vmem %s3, %s4593
      // Predicated region
      $region33: #{conv_block_pallas.1} parent=31 // pred_check
        %p4595 = pneg %p100
      $region34: #{conv_block_pallas.1} parent=31 // pred_check_branch
        %4597 = sbr.rel (%p4595) target = $region36
      $region35: #{conv_block_pallas.1} parent=31 // pred_region
        _
      $region36: #{conv_block_pallas.1} parent=31 // pred_fallthru
        _
    $region32: #{conv_block_pallas.1} parent=5 // pred_fallthru
      _
    %p4598 = scmp.le.s32.totalorder 2, %s9
    // Predicated region
    $region37: #{conv_block_pallas.1} parent=5 // pred_check
      %p4599 = pneg %p4598
    $region38: #{conv_block_pallas.1} parent=5 // pred_check_branch
      %4601 = sbr.rel (%p4599) target = $region40
    $region39: #{conv_block_pallas.1} parent=5 // pred_region
      %s4602 = ssub.s32 %s9, 2
      // Predicated region
      $region41: #{conv_block_pallas.1} parent=39 // pred_check
        %p4603 = pneg %p106
      $region42: #{conv_block_pallas.1} parent=39 // pred_check_branch
        %4605 = sbr.rel (%p4603) target = $region44
      $region43: #{conv_block_pallas.1} parent=39 // pred_region
        %p4606 = scmp.lt.s32.totalorder %s15, 1
        %s4607 = scalar_select %p4606, %s15, 1
        %s4608 = smul.addr %s4607, 8
        %s4609 = smul.addr %s4608, 8
        %s4610 = scalar_lea.vmem %s3, %s4609
      $region44: #{conv_block_pallas.1} parent=39 // pred_fallthru
        _
    $region40: #{conv_block_pallas.1} parent=5 // pred_fallthru
      _
  $region6: #{conv_block_pallas.1} parent=0 // loop_footer
    %s13 = sadd.s32 1, %s9
  $region7: #{conv_block_pallas.1} parent=0 // loop_footer_branch
    %8 = sbr.rel target = $region3
  $region8: #{conv_block_pallas.1} parent=0 // loop_exit
    _

</llo_original>
